<compile_context>
chip_gen: v5e
topology: v5e:2x2
jax: 0.10.0
libtpu: 0.0.40
codegen_flags: <defaults>
</compile_context>

<pallas_src>
import jax
import jax.numpy as jnp
from jax import lax
from jax.experimental import pallas as pl
from jax.experimental.pallas import tpu as pltpu


def lstm_kernel(x_ref, tfidf_ref, wx_ref, wh_ref, b_ref, wo_ref, bo_ref,
                out_ref, pre_ref):
    seq_len = x_ref.shape[0]            # static
    four_h, H = wh_ref.shape            # (4H, H)
    bb = out_ref.shape[1]               # batch block (lanes)

    wx = wx_ref[...]                    # (4H, D)  bf16
    wh = wh_ref[...]                    # (4H, H)  bf16
    # Hoist the bias lane-broadcast out of the loop (no CSE of broadcasts).
    bias = jnp.broadcast_to(b_ref[...], (four_h, bb))       # (4H, Bb) f32

    # --- Hoisted input projection: all SEQ steps, off the serial chain ---
    # pre[t] = W_ih @ (x_t * tfidf_t) + b, written to VMEM scratch so the
    # fully unrolled recurrence does not keep 8x(4H,Bb) slabs live in vregs.
    for t in range(seq_len):
        xt = (x_ref[t] * tfidf_ref[t]).astype(jnp.bfloat16)  # (D, Bb)
        pre_ref[t] = jnp.dot(wx, xt,
                             preferred_element_type=jnp.float32) + bias

    h = jnp.zeros((H, bb), jnp.float32)
    c = jnp.zeros((H, bb), jnp.float32)

    # --- Fully unrolled recurrence (SEQ small & static) ---
    for t in range(seq_len):
        if t == 0:
            gates = pre_ref[0]          # h == 0: skip the h @ W_hh matmul
        else:
            gates = pre_ref[t] + jnp.dot(wh, h.astype(jnp.bfloat16),
                                         preferred_element_type=jnp.float32)
        # Gate bands (host-permuted): rows [0:3H] = i|f|o (sigmoid),
        # rows [3H:4H] = g (tanh). All slices are vreg-granular.
        sig = jax.nn.sigmoid(gates[0:3 * H, :])
        i = sig[0:H, :]
        f = sig[H:2 * H, :]
        o = sig[2 * H:3 * H, :]
        g = jnp.tanh(gates[3 * H:4 * H, :])
        c = f * c + i * g
        h = o * jnp.tanh(c)

    # --- Epilogue: out = sigmoid(Linear(relu(h_last))) ---
    relu_h = jnp.maximum(h, 0.0)                            # (H, Bb)
    # Output projection as VPU multiply + sublane reduce; lane-dense result.
    logit = (jnp.sum(relu_h * wo_ref[...], axis=0, keepdims=True)
             + bo_ref[0])                                   # (1, Bb)
    out_ref[...] = jax.nn.sigmoid(logit)


def lstm_tfidf_forward(x, tfidf, w_ih, w_hh, b_ih, b_hh, w_out, b_out, *,
                       batch_block=128):
    """x: (SEQ, B, D), tfidf: (SEQ, B, 1), PyTorch-layout LSTM/Linear params.

    Returns (B, 1) sigmoid scores, one per document.
    """
    seq_len, batch, d = x.shape
    four_h = w_ih.shape[0]
    H = four_h // 4

    # --- Host-side prep (layout plumbing only) ---
    # Gate-band reorder i|f|g|o -> i|f|o|g so one sigmoid covers a 3H band.
    perm = jnp.concatenate([jnp.arange(0, 2 * H),
                            jnp.arange(3 * H, 4 * H),
                            jnp.arange(2 * H, 3 * H)])
    wx = w_ih[perm].astype(jnp.bfloat16)                    # (4H, D)
    wh = w_hh[perm].astype(jnp.bfloat16)                    # (4H, H)
    b = (b_ih + b_hh)[perm][:, None].astype(jnp.float32)    # (4H, 1)
    wo = w_out.T.astype(jnp.float32)                        # (H, 1)
    bo = b_out.reshape((1,)).astype(jnp.float32)            # (1,) -> SMEM

    # Pad batch to a multiple of batch_block (padded docs are sliced off).
    pad = (-batch) % batch_block
    if pad:
        x = jnp.pad(x, ((0, 0), (0, pad), (0, 0)))
        tfidf = jnp.pad(tfidf, ((0, 0), (0, pad), (0, 0)))
    bpad = batch + pad

    # Batch-on-lanes layout for the kernel.
    x_t = jnp.transpose(x, (0, 2, 1))                       # (SEQ, D, Bp)
    tf_t = jnp.transpose(tfidf, (0, 2, 1))                  # (SEQ, 1, Bp)

    grid = (bpad // batch_block,)

    out = pl.pallas_call(
        lstm_kernel,
        out_shape=jax.ShapeDtypeStruct((1, bpad), jnp.float32),
        grid=grid,
        in_specs=[
            pl.BlockSpec((seq_len, d, batch_block), lambda bq: (0, 0, bq)),
            pl.BlockSpec((seq_len, 1, batch_block), lambda bq: (0, 0, bq)),
            pl.BlockSpec((four_h, d), lambda bq: (0, 0)),
            pl.BlockSpec((four_h, H), lambda bq: (0, 0)),
            pl.BlockSpec((four_h, 1), lambda bq: (0, 0)),
            pl.BlockSpec((H, 1), lambda bq: (0, 0)),
            pl.BlockSpec(memory_space=pltpu.MemorySpace.SMEM),   # (1,) bias
        ],
        out_specs=pl.BlockSpec((1, batch_block), lambda bq: (0, bq)),
        scratch_shapes=[
            pltpu.VMEM((seq_len, four_h, batch_block), jnp.float32),
        ],
        compiler_params=pltpu.CompilerParams(
            dimension_semantics=("parallel",)),   # shard batch over TCs (v7x)
    )(x_t, tf_t, wx, wh, b, wo, bo)

    return out[:, :batch].T                                  # (B, 1)


def reference_forward(x, tfidf, w_ih, w_hh, b_ih, b_hh, w_out, b_out):
    """Pure-JAX f32 reference reproducing torch.nn.LSTM + Linear + Sigmoid."""
    H = w_hh.shape[1]
    B = x.shape[1]
    xt_all = x * tfidf                                       # (S, B, D)
    b = b_ih + b_hh

    def step(carry, xt):
        h, c = carry
        gates = xt @ w_ih.T + h @ w_hh.T + b                 # (B, 4H) i|f|g|o
        i = jax.nn.sigmoid(gates[:, 0:H])
        f = jax.nn.sigmoid(gates[:, H:2 * H])
        g = jnp.tanh(gates[:, 2 * H:3 * H])
        o = jax.nn.sigmoid(gates[:, 3 * H:4 * H])
        c = f * c + i * g
        h = o * jnp.tanh(c)
        return (h, c), None

    (h, _), _ = lax.scan(step,
                         (jnp.zeros((B, H), jnp.float32),
                          jnp.zeros((B, H), jnp.float32)),
                         xt_all)
    out = jnp.maximum(h, 0.0) @ w_out.T + b_out
    return jax.nn.sigmoid(out)


if __name__ == "__main__":
    SEQ = 8          # len(stems)
    D = 128          # config['w2v_size'] (forward hardcodes 128-wide vectors)
    H = 32           # config['hidden']
    B = 200          # independent documents (non-multiple of 128: tests tail)

    key = jax.random.PRNGKey(0)
    keys = jax.random.split(key, 8)

    # "stems / w2v / tfidf" replaced by deterministic synthetic tensors.
    x = jax.random.normal(keys[0], (SEQ, B, D), dtype=jnp.float32)     # w2v.wv[stem]
    tfidf = jax.random.uniform(keys[1], (SEQ, B, 1), dtype=jnp.float32)  # tfidf[stem]

    # nn.LSTM(D, H) / nn.Linear(H, 1) reset_parameters(): U(-1/sqrt(H), 1/sqrt(H))
    k = 1.0 / jnp.sqrt(jnp.float32(H))
    w_ih = jax.random.uniform(keys[2], (4 * H, D), minval=-k, maxval=k, dtype=jnp.float32)
    w_hh = jax.random.uniform(keys[3], (4 * H, H), minval=-k, maxval=k, dtype=jnp.float32)
    b_ih = jax.random.uniform(keys[4], (4 * H,), minval=-k, maxval=k, dtype=jnp.float32)
    b_hh = jax.random.uniform(keys[5], (4 * H,), minval=-k, maxval=k, dtype=jnp.float32)
    w_out = jax.random.uniform(keys[6], (1, H), minval=-k, maxval=k, dtype=jnp.float32)
    b_out = jax.random.uniform(keys[7], (1,), minval=-k, maxval=k, dtype=jnp.float32)

    out = lstm_tfidf_forward(x, tfidf, w_ih, w_hh, b_ih, b_hh, w_out, b_out,
                             batch_block=128)
    out = jax.block_until_ready(out)

    ref = reference_forward(x, tfidf, w_ih, w_hh, b_ih, b_hh, w_out, b_out)
    assert out.shape == (B, 1), out.shape
    max_err = float(jnp.max(jnp.abs(out - ref)))
    # bf16 MXU inputs (f32 accumulation / f32 state) -> loosened tolerance.
    assert max_err < 2e-2, f"max abs err {max_err}"

    print("KERNEL_OK")
</pallas_src>

<mosaic_0001>
module attributes {stable_mosaic.version = 11 : i64} {
  func.func @lstm_kernel(%arg0: i32, %arg1: memref<8x128x128xf32, #tpu.memory_space<vmem>>, %arg2: memref<8x1x128xf32, #tpu.memory_space<vmem>>, %arg3: memref<128x128xbf16, #tpu.memory_space<vmem>>, %arg4: memref<128x32xbf16, #tpu.memory_space<vmem>>, %arg5: memref<128x1xf32, #tpu.memory_space<vmem>>, %arg6: memref<32x1xf32, #tpu.memory_space<vmem>>, %arg7: memref<1xf32, #tpu.memory_space<smem>>, %arg8: memref<1x128xf32, #tpu.memory_space<vmem>>, %arg9: memref<8x128x128xf32, #tpu.memory_space<vmem>>) attributes {dimension_semantics = [#tpu.dimension_semantics<parallel>], iteration_bounds = array<i64: 2>, scalar_prefetch = 0 : i64, scratch_operands = 1 : i64, tpu.core_type = #tpu.core_type<tc>, window_params = [{transform_indices = @transform_0, window_bounds = array<i64: 8, 128, 128>}, {transform_indices = @transform_1, window_bounds = array<i64: 8, 1, 128>}, {pipeline_mode = #tpu.pipeline_mode<synchronous>, transform_indices = @transform_2, window_bounds = array<i64: 128, 128>}, {pipeline_mode = #tpu.pipeline_mode<synchronous>, transform_indices = @transform_3, window_bounds = array<i64: 128, 32>}, {pipeline_mode = #tpu.pipeline_mode<synchronous>, transform_indices = @transform_4, window_bounds = array<i64: 128, 1>}, {pipeline_mode = #tpu.pipeline_mode<synchronous>, transform_indices = @transform_5, window_bounds = array<i64: 32, 1>}, {transform_indices = @transform_6, window_bounds = array<i64: 1>}, {transform_indices = @transform_7, window_bounds = array<i64: 1, 128>}]} {
    %c0 = arith.constant 0 : index
    %c0_0 = arith.constant 0 : index
    %0 = vector.load %arg3[%c0, %c0_0] : memref<128x128xbf16, #tpu.memory_space<vmem>>, vector<128x128xbf16>
    %c0_1 = arith.constant 0 : index
    %c0_2 = arith.constant 0 : index
    %1 = vector.load %arg4[%c0_1, %c0_2] : memref<128x32xbf16, #tpu.memory_space<vmem>>, vector<128x32xbf16>
    %c0_3 = arith.constant 0 : index
    %c0_4 = arith.constant 0 : index
    %2 = vector.load %arg5[%c0_3, %c0_4] : memref<128x1xf32, #tpu.memory_space<vmem>>, vector<128x1xf32>
    %3 = vector.shape_cast %2 : vector<128x1xf32> to vector<128x1xf32>
    %4 = vector.broadcast %3 : vector<128x1xf32> to vector<128x128xf32>
    %c0_5 = arith.constant 0 : index
    %c0_6 = arith.constant 0 : index
    %c0_7 = arith.constant 0 : index
    %5 = vector.load %arg1[%c0_5, %c0_6, %c0_7] : memref<8x128x128xf32, #tpu.memory_space<vmem>>, vector<1x128x128xf32>
    %6 = vector.shape_cast %5 : vector<1x128x128xf32> to vector<128x128xf32>
    %c0_8 = arith.constant 0 : index
    %c0_9 = arith.constant 0 : index
    %c0_10 = arith.constant 0 : index
    %7 = vector.load %arg2[%c0_8, %c0_9, %c0_10] : memref<8x1x128xf32, #tpu.memory_space<vmem>>, vector<1x1x128xf32>
    %8 = vector.shape_cast %7 : vector<1x1x128xf32> to vector<1x128xf32>
    %9 = vector.broadcast %8 : vector<1x128xf32> to vector<128x128xf32>
    %10 = arith.mulf %6, %9 : vector<128x128xf32>
    %11 = arith.truncf %10 : vector<128x128xf32> to vector<128x128xbf16>
    %cst = arith.constant dense<0.000000e+00> : vector<128x128xf32>
    %12 = tpu.matmul %0, %11, %cst {dimension_numbers = #tpu.dot_dimension_numbers<[1], [0], [0], [1], [0, 0, 1, 1], [], []>} : vector<128x128xbf16>, vector<128x128xbf16>, vector<128x128xf32> -> vector<128x128xf32>
    %13 = arith.addf %12, %4 : vector<128x128xf32>
    %c0_11 = arith.constant 0 : index
    %c0_12 = arith.constant 0 : index
    %c0_13 = arith.constant 0 : index
    %14 = vector.load %arg9[%c0_11, %c0_12, %c0_13] : memref<8x128x128xf32, #tpu.memory_space<vmem>>, vector<1x128x128xf32>
    %15 = vector.shape_cast %14 : vector<1x128x128xf32> to vector<128x128xf32>
    %16 = vector.shape_cast %13 : vector<128x128xf32> to vector<1x128x128xf32>
    tpu.vector_store %arg9[%c0_11, %c0_12, %c0_13], %16 {strides = array<i32>} : memref<8x128x128xf32, #tpu.memory_space<vmem>>, vector<1x128x128xf32>,
    %c1 = arith.constant 1 : index
    %c0_14 = arith.constant 0 : index
    %c0_15 = arith.constant 0 : index
    %17 = vector.load %arg1[%c1, %c0_14, %c0_15] : memref<8x128x128xf32, #tpu.memory_space<vmem>>, vector<1x128x128xf32>
    %18 = vector.shape_cast %17 : vector<1x128x128xf32> to vector<128x128xf32>
    %c1_16 = arith.constant 1 : index
    %c0_17 = arith.constant 0 : index
    %c0_18 = arith.constant 0 : index
    %19 = vector.load %arg2[%c1_16, %c0_17, %c0_18] : memref<8x1x128xf32, #tpu.memory_space<vmem>>, vector<1x1x128xf32>
    %20 = vector.shape_cast %19 : vector<1x1x128xf32> to vector<1x128xf32>
    %21 = vector.broadcast %20 : vector<1x128xf32> to vector<128x128xf32>
    %22 = arith.mulf %18, %21 : vector<128x128xf32>
    %23 = arith.truncf %22 : vector<128x128xf32> to vector<128x128xbf16>
    %cst_19 = arith.constant dense<0.000000e+00> : vector<128x128xf32>
    %24 = tpu.matmul %0, %23, %cst_19 {dimension_numbers = #tpu.dot_dimension_numbers<[1], [0], [0], [1], [0, 0, 1, 1], [], []>} : vector<128x128xbf16>, vector<128x128xbf16>, vector<128x128xf32> -> vector<128x128xf32>
    %25 = arith.addf %24, %4 : vector<128x128xf32>
    %c1_20 = arith.constant 1 : index
    %c0_21 = arith.constant 0 : index
    %c0_22 = arith.constant 0 : index
    %26 = vector.load %arg9[%c1_20, %c0_21, %c0_22] : memref<8x128x128xf32, #tpu.memory_space<vmem>>, vector<1x128x128xf32>
    %27 = vector.shape_cast %26 : vector<1x128x128xf32> to vector<128x128xf32>
    %28 = vector.shape_cast %25 : vector<128x128xf32> to vector<1x128x128xf32>
    tpu.vector_store %arg9[%c1_20, %c0_21, %c0_22], %28 {strides = array<i32>} : memref<8x128x128xf32, #tpu.memory_space<vmem>>, vector<1x128x128xf32>,
    %c2 = arith.constant 2 : index
    %c0_23 = arith.constant 0 : index
    %c0_24 = arith.constant 0 : index
    %29 = vector.load %arg1[%c2, %c0_23, %c0_24] : memref<8x128x128xf32, #tpu.memory_space<vmem>>, vector<1x128x128xf32>
    %30 = vector.shape_cast %29 : vector<1x128x128xf32> to vector<128x128xf32>
    %c2_25 = arith.constant 2 : index
    %c0_26 = arith.constant 0 : index
    %c0_27 = arith.constant 0 : index
    %31 = vector.load %arg2[%c2_25, %c0_26, %c0_27] : memref<8x1x128xf32, #tpu.memory_space<vmem>>, vector<1x1x128xf32>
    %32 = vector.shape_cast %31 : vector<1x1x128xf32> to vector<1x128xf32>
    %33 = vector.broadcast %32 : vector<1x128xf32> to vector<128x128xf32>
    %34 = arith.mulf %30, %33 : vector<128x128xf32>
    %35 = arith.truncf %34 : vector<128x128xf32> to vector<128x128xbf16>
    %cst_28 = arith.constant dense<0.000000e+00> : vector<128x128xf32>
    %36 = tpu.matmul %0, %35, %cst_28 {dimension_numbers = #tpu.dot_dimension_numbers<[1], [0], [0], [1], [0, 0, 1, 1], [], []>} : vector<128x128xbf16>, vector<128x128xbf16>, vector<128x128xf32> -> vector<128x128xf32>
    %37 = arith.addf %36, %4 : vector<128x128xf32>
    %c2_29 = arith.constant 2 : index
    %c0_30 = arith.constant 0 : index
    %c0_31 = arith.constant 0 : index
    %38 = vector.load %arg9[%c2_29, %c0_30, %c0_31] : memref<8x128x128xf32, #tpu.memory_space<vmem>>, vector<1x128x128xf32>
    %39 = vector.shape_cast %38 : vector<1x128x128xf32> to vector<128x128xf32>
    %40 = vector.shape_cast %37 : vector<128x128xf32> to vector<1x128x128xf32>
    tpu.vector_store %arg9[%c2_29, %c0_30, %c0_31], %40 {strides = array<i32>} : memref<8x128x128xf32, #tpu.memory_space<vmem>>, vector<1x128x128xf32>,
    %c3 = arith.constant 3 : index
    %c0_32 = arith.constant 0 : index
    %c0_33 = arith.constant 0 : index
    %41 = vector.load %arg1[%c3, %c0_32, %c0_33] : memref<8x128x128xf32, #tpu.memory_space<vmem>>, vector<1x128x128xf32>
    %42 = vector.shape_cast %41 : vector<1x128x128xf32> to vector<128x128xf32>
    %c3_34 = arith.constant 3 : index
    %c0_35 = arith.constant 0 : index
    %c0_36 = arith.constant 0 : index
    %43 = vector.load %arg2[%c3_34, %c0_35, %c0_36] : memref<8x1x128xf32, #tpu.memory_space<vmem>>, vector<1x1x128xf32>
    %44 = vector.shape_cast %43 : vector<1x1x128xf32> to vector<1x128xf32>
    %45 = vector.broadcast %44 : vector<1x128xf32> to vector<128x128xf32>
    %46 = arith.mulf %42, %45 : vector<128x128xf32>
    %47 = arith.truncf %46 : vector<128x128xf32> to vector<128x128xbf16>
    %cst_37 = arith.constant dense<0.000000e+00> : vector<128x128xf32>
    %48 = tpu.matmul %0, %47, %cst_37 {dimension_numbers = #tpu.dot_dimension_numbers<[1], [0], [0], [1], [0, 0, 1, 1], [], []>} : vector<128x128xbf16>, vector<128x128xbf16>, vector<128x128xf32> -> vector<128x128xf32>
    %49 = arith.addf %48, %4 : vector<128x128xf32>
    %c3_38 = arith.constant 3 : index
    %c0_39 = arith.constant 0 : index
    %c0_40 = arith.constant 0 : index
    %50 = vector.load %arg9[%c3_38, %c0_39, %c0_40] : memref<8x128x128xf32, #tpu.memory_space<vmem>>, vector<1x128x128xf32>
    %51 = vector.shape_cast %50 : vector<1x128x128xf32> to vector<128x128xf32>
    %52 = vector.shape_cast %49 : vector<128x128xf32> to vector<1x128x128xf32>
    tpu.vector_store %arg9[%c3_38, %c0_39, %c0_40], %52 {strides = array<i32>} : memref<8x128x128xf32, #tpu.memory_space<vmem>>, vector<1x128x128xf32>,
    %c4 = arith.constant 4 : index
    %c0_41 = arith.constant 0 : index
    %c0_42 = arith.constant 0 : index
    %53 = vector.load %arg1[%c4, %c0_41, %c0_42] : memref<8x128x128xf32, #tpu.memory_space<vmem>>, vector<1x128x128xf32>
    %54 = vector.shape_cast %53 : vector<1x128x128xf32> to vector<128x128xf32>
    %c4_43 = arith.constant 4 : index
    %c0_44 = arith.constant 0 : index
    %c0_45 = arith.constant 0 : index
    %55 = vector.load %arg2[%c4_43, %c0_44, %c0_45] : memref<8x1x128xf32, #tpu.memory_space<vmem>>, vector<1x1x128xf32>
    %56 = vector.shape_cast %55 : vector<1x1x128xf32> to vector<1x128xf32>
    %57 = vector.broadcast %56 : vector<1x128xf32> to vector<128x128xf32>
    %58 = arith.mulf %54, %57 : vector<128x128xf32>
    %59 = arith.truncf %58 : vector<128x128xf32> to vector<128x128xbf16>
    %cst_46 = arith.constant dense<0.000000e+00> : vector<128x128xf32>
    %60 = tpu.matmul %0, %59, %cst_46 {dimension_numbers = #tpu.dot_dimension_numbers<[1], [0], [0], [1], [0, 0, 1, 1], [], []>} : vector<128x128xbf16>, vector<128x128xbf16>, vector<128x128xf32> -> vector<128x128xf32>
    %61 = arith.addf %60, %4 : vector<128x128xf32>
    %c4_47 = arith.constant 4 : index
    %c0_48 = arith.constant 0 : index
    %c0_49 = arith.constant 0 : index
    %62 = vector.load %arg9[%c4_47, %c0_48, %c0_49] : memref<8x128x128xf32, #tpu.memory_space<vmem>>, vector<1x128x128xf32>
    %63 = vector.shape_cast %62 : vector<1x128x128xf32> to vector<128x128xf32>
    %64 = vector.shape_cast %61 : vector<128x128xf32> to vector<1x128x128xf32>
    tpu.vector_store %arg9[%c4_47, %c0_48, %c0_49], %64 {strides = array<i32>} : memref<8x128x128xf32, #tpu.memory_space<vmem>>, vector<1x128x128xf32>,
    %c5 = arith.constant 5 : index
    %c0_50 = arith.constant 0 : index
    %c0_51 = arith.constant 0 : index
    %65 = vector.load %arg1[%c5, %c0_50, %c0_51] : memref<8x128x128xf32, #tpu.memory_space<vmem>>, vector<1x128x128xf32>
    %66 = vector.shape_cast %65 : vector<1x128x128xf32> to vector<128x128xf32>
    %c5_52 = arith.constant 5 : index
    %c0_53 = arith.constant 0 : index
    %c0_54 = arith.constant 0 : index
    %67 = vector.load %arg2[%c5_52, %c0_53, %c0_54] : memref<8x1x128xf32, #tpu.memory_space<vmem>>, vector<1x1x128xf32>
    %68 = vector.shape_cast %67 : vector<1x1x128xf32> to vector<1x128xf32>
    %69 = vector.broadcast %68 : vector<1x128xf32> to vector<128x128xf32>
    %70 = arith.mulf %66, %69 : vector<128x128xf32>
    %71 = arith.truncf %70 : vector<128x128xf32> to vector<128x128xbf16>
    %cst_55 = arith.constant dense<0.000000e+00> : vector<128x128xf32>
    %72 = tpu.matmul %0, %71, %cst_55 {dimension_numbers = #tpu.dot_dimension_numbers<[1], [0], [0], [1], [0, 0, 1, 1], [], []>} : vector<128x128xbf16>, vector<128x128xbf16>, vector<128x128xf32> -> vector<128x128xf32>
    %73 = arith.addf %72, %4 : vector<128x128xf32>
    %c5_56 = arith.constant 5 : index
    %c0_57 = arith.constant 0 : index
    %c0_58 = arith.constant 0 : index
    %74 = vector.load %arg9[%c5_56, %c0_57, %c0_58] : memref<8x128x128xf32, #tpu.memory_space<vmem>>, vector<1x128x128xf32>
    %75 = vector.shape_cast %74 : vector<1x128x128xf32> to vector<128x128xf32>
    %76 = vector.shape_cast %73 : vector<128x128xf32> to vector<1x128x128xf32>
    tpu.vector_store %arg9[%c5_56, %c0_57, %c0_58], %76 {strides = array<i32>} : memref<8x128x128xf32, #tpu.memory_space<vmem>>, vector<1x128x128xf32>,
    %c6 = arith.constant 6 : index
    %c0_59 = arith.constant 0 : index
    %c0_60 = arith.constant 0 : index
    %77 = vector.load %arg1[%c6, %c0_59, %c0_60] : memref<8x128x128xf32, #tpu.memory_space<vmem>>, vector<1x128x128xf32>
    %78 = vector.shape_cast %77 : vector<1x128x128xf32> to vector<128x128xf32>
    %c6_61 = arith.constant 6 : index
    %c0_62 = arith.constant 0 : index
    %c0_63 = arith.constant 0 : index
    %79 = vector.load %arg2[%c6_61, %c0_62, %c0_63] : memref<8x1x128xf32, #tpu.memory_space<vmem>>, vector<1x1x128xf32>
    %80 = vector.shape_cast %79 : vector<1x1x128xf32> to vector<1x128xf32>
    %81 = vector.broadcast %80 : vector<1x128xf32> to vector<128x128xf32>
    %82 = arith.mulf %78, %81 : vector<128x128xf32>
    %83 = arith.truncf %82 : vector<128x128xf32> to vector<128x128xbf16>
    %cst_64 = arith.constant dense<0.000000e+00> : vector<128x128xf32>
    %84 = tpu.matmul %0, %83, %cst_64 {dimension_numbers = #tpu.dot_dimension_numbers<[1], [0], [0], [1], [0, 0, 1, 1], [], []>} : vector<128x128xbf16>, vector<128x128xbf16>, vector<128x128xf32> -> vector<128x128xf32>
    %85 = arith.addf %84, %4 : vector<128x128xf32>
    %c6_65 = arith.constant 6 : index
    %c0_66 = arith.constant 0 : index
    %c0_67 = arith.constant 0 : index
    %86 = vector.load %arg9[%c6_65, %c0_66, %c0_67] : memref<8x128x128xf32, #tpu.memory_space<vmem>>, vector<1x128x128xf32>
    %87 = vector.shape_cast %86 : vector<1x128x128xf32> to vector<128x128xf32>
    %88 = vector.shape_cast %85 : vector<128x128xf32> to vector<1x128x128xf32>
    tpu.vector_store %arg9[%c6_65, %c0_66, %c0_67], %88 {strides = array<i32>} : memref<8x128x128xf32, #tpu.memory_space<vmem>>, vector<1x128x128xf32>,
    %c7 = arith.constant 7 : index
    %c0_68 = arith.constant 0 : index
    %c0_69 = arith.constant 0 : index
    %89 = vector.load %arg1[%c7, %c0_68, %c0_69] : memref<8x128x128xf32, #tpu.memory_space<vmem>>, vector<1x128x128xf32>
    %90 = vector.shape_cast %89 : vector<1x128x128xf32> to vector<128x128xf32>
    %c7_70 = arith.constant 7 : index
    %c0_71 = arith.constant 0 : index
    %c0_72 = arith.constant 0 : index
    %91 = vector.load %arg2[%c7_70, %c0_71, %c0_72] : memref<8x1x128xf32, #tpu.memory_space<vmem>>, vector<1x1x128xf32>
    %92 = vector.shape_cast %91 : vector<1x1x128xf32> to vector<1x128xf32>
    %93 = vector.broadcast %92 : vector<1x128xf32> to vector<128x128xf32>
    %94 = arith.mulf %90, %93 : vector<128x128xf32>
    %95 = arith.truncf %94 : vector<128x128xf32> to vector<128x128xbf16>
    %cst_73 = arith.constant dense<0.000000e+00> : vector<128x128xf32>
    %96 = tpu.matmul %0, %95, %cst_73 {dimension_numbers = #tpu.dot_dimension_numbers<[1], [0], [0], [1], [0, 0, 1, 1], [], []>} : vector<128x128xbf16>, vector<128x128xbf16>, vector<128x128xf32> -> vector<128x128xf32>
    %97 = arith.addf %96, %4 : vector<128x128xf32>
    %c7_74 = arith.constant 7 : index
    %c0_75 = arith.constant 0 : index
    %c0_76 = arith.constant 0 : index
    %98 = vector.load %arg9[%c7_74, %c0_75, %c0_76] : memref<8x128x128xf32, #tpu.memory_space<vmem>>, vector<1x128x128xf32>
    %99 = vector.shape_cast %98 : vector<1x128x128xf32> to vector<128x128xf32>
    %100 = vector.shape_cast %97 : vector<128x128xf32> to vector<1x128x128xf32>
    tpu.vector_store %arg9[%c7_74, %c0_75, %c0_76], %100 {strides = array<i32>} : memref<8x128x128xf32, #tpu.memory_space<vmem>>, vector<1x128x128xf32>,
    %cst_77 = arith.constant 0.000000e+00 : f32
    %101 = vector.broadcast %cst_77 : f32 to vector<32x128xf32>
    %c0_78 = arith.constant 0 : index
    %c0_79 = arith.constant 0 : index
    %c0_80 = arith.constant 0 : index
    %102 = vector.load %arg9[%c0_78, %c0_79, %c0_80] : memref<8x128x128xf32, #tpu.memory_space<vmem>>, vector<1x128x128xf32>
    %103 = vector.shape_cast %102 : vector<1x128x128xf32> to vector<128x128xf32>
    %104 = vector.extract_strided_slice %103 {offsets = [0, 0], sizes = [96, 128], strides = [1, 1]} : vector<128x128xf32> to vector<96x128xf32>
    %105 = arith.negf %104 : vector<96x128xf32>
    %106 = math.exp %105 : vector<96x128xf32>
    %cst_81 = arith.constant 1.000000e+00 : f32
    %107 = vector.broadcast %cst_81 : f32 to vector<96x128xf32>
    %108 = arith.addf %107, %106 : vector<96x128xf32>
    %109 = arith.divf %107, %108 : vector<96x128xf32>
    %110 = vector.extract_strided_slice %109 {offsets = [0, 0], sizes = [32, 128], strides = [1, 1]} : vector<96x128xf32> to vector<32x128xf32>
    %111 = vector.extract_strided_slice %109 {offsets = [32, 0], sizes = [32, 128], strides = [1, 1]} : vector<96x128xf32> to vector<32x128xf32>
    %112 = vector.extract_strided_slice %109 {offsets = [64, 0], sizes = [32, 128], strides = [1, 1]} : vector<96x128xf32> to vector<32x128xf32>
    %113 = vector.extract_strided_slice %103 {offsets = [96, 0], sizes = [32, 128], strides = [1, 1]} : vector<128x128xf32> to vector<32x128xf32>
    %114 = math.tanh %113 : vector<32x128xf32>
    %115 = arith.mulf %111, %101 : vector<32x128xf32>
    %116 = arith.mulf %110, %114 : vector<32x128xf32>
    %117 = arith.addf %115, %116 : vector<32x128xf32>
    %118 = math.tanh %117 : vector<32x128xf32>
    %119 = arith.mulf %112, %118 : vector<32x128xf32>
    %c1_82 = arith.constant 1 : index
    %c0_83 = arith.constant 0 : index
    %c0_84 = arith.constant 0 : index
    %120 = vector.load %arg9[%c1_82, %c0_83, %c0_84] : memref<8x128x128xf32, #tpu.memory_space<vmem>>, vector<1x128x128xf32>
    %121 = vector.shape_cast %120 : vector<1x128x128xf32> to vector<128x128xf32>
    %122 = arith.truncf %119 : vector<32x128xf32> to vector<32x128xbf16>
    %cst_85 = arith.constant dense<0.000000e+00> : vector<128x128xf32>
    %123 = tpu.matmul %1, %122, %cst_85 {dimension_numbers = #tpu.dot_dimension_numbers<[1], [0], [0], [1], [0, 0, 1, 1], [], []>} : vector<128x32xbf16>, vector<32x128xbf16>, vector<128x128xf32> -> vector<128x128xf32>
    %124 = arith.addf %121, %123 : vector<128x128xf32>
    %125 = vector.extract_strided_slice %124 {offsets = [0, 0], sizes = [96, 128], strides = [1, 1]} : vector<128x128xf32> to vector<96x128xf32>
    %126 = arith.negf %125 : vector<96x128xf32>
    %127 = math.exp %126 : vector<96x128xf32>
    %cst_86 = arith.constant 1.000000e+00 : f32
    %128 = vector.broadcast %cst_86 : f32 to vector<96x128xf32>
    %129 = arith.addf %128, %127 : vector<96x128xf32>
    %130 = arith.divf %128, %129 : vector<96x128xf32>
    %131 = vector.extract_strided_slice %130 {offsets = [0, 0], sizes = [32, 128], strides = [1, 1]} : vector<96x128xf32> to vector<32x128xf32>
    %132 = vector.extract_strided_slice %130 {offsets = [32, 0], sizes = [32, 128], strides = [1, 1]} : vector<96x128xf32> to vector<32x128xf32>
    %133 = vector.extract_strided_slice %130 {offsets = [64, 0], sizes = [32, 128], strides = [1, 1]} : vector<96x128xf32> to vector<32x128xf32>
    %134 = vector.extract_strided_slice %124 {offsets = [96, 0], sizes = [32, 128], strides = [1, 1]} : vector<128x128xf32> to vector<32x128xf32>
    %135 = math.tanh %134 : vector<32x128xf32>
    %136 = arith.mulf %132, %117 : vector<32x128xf32>
    %137 = arith.mulf %131, %135 : vector<32x128xf32>
    %138 = arith.addf %136, %137 : vector<32x128xf32>
    %139 = math.tanh %138 : vector<32x128xf32>
    %140 = arith.mulf %133, %139 : vector<32x128xf32>
    %c2_87 = arith.constant 2 : index
    %c0_88 = arith.constant 0 : index
    %c0_89 = arith.constant 0 : index
    %141 = vector.load %arg9[%c2_87, %c0_88, %c0_89] : memref<8x128x128xf32, #tpu.memory_space<vmem>>, vector<1x128x128xf32>
    %142 = vector.shape_cast %141 : vector<1x128x128xf32> to vector<128x128xf32>
    %143 = arith.truncf %140 : vector<32x128xf32> to vector<32x128xbf16>
    %cst_90 = arith.constant dense<0.000000e+00> : vector<128x128xf32>
    %144 = tpu.matmul %1, %143, %cst_90 {dimension_numbers = #tpu.dot_dimension_numbers<[1], [0], [0], [1], [0, 0, 1, 1], [], []>} : vector<128x32xbf16>, vector<32x128xbf16>, vector<128x128xf32> -> vector<128x128xf32>
    %145 = arith.addf %142, %144 : vector<128x128xf32>
    %146 = vector.extract_strided_slice %145 {offsets = [0, 0], sizes = [96, 128], strides = [1, 1]} : vector<128x128xf32> to vector<96x128xf32>
    %147 = arith.negf %146 : vector<96x128xf32>
    %148 = math.exp %147 : vector<96x128xf32>
    %cst_91 = arith.constant 1.000000e+00 : f32
    %149 = vector.broadcast %cst_91 : f32 to vector<96x128xf32>
    %150 = arith.addf %149, %148 : vector<96x128xf32>
    %151 = arith.divf %149, %150 : vector<96x128xf32>
    %152 = vector.extract_strided_slice %151 {offsets = [0, 0], sizes = [32, 128], strides = [1, 1]} : vector<96x128xf32> to vector<32x128xf32>
    %153 = vector.extract_strided_slice %151 {offsets = [32, 0], sizes = [32, 128], strides = [1, 1]} : vector<96x128xf32> to vector<32x128xf32>
    %154 = vector.extract_strided_slice %151 {offsets = [64, 0], sizes = [32, 128], strides = [1, 1]} : vector<96x128xf32> to vector<32x128xf32>
    %155 = vector.extract_strided_slice %145 {offsets = [96, 0], sizes = [32, 128], strides = [1, 1]} : vector<128x128xf32> to vector<32x128xf32>
    %156 = math.tanh %155 : vector<32x128xf32>
    %157 = arith.mulf %153, %138 : vector<32x128xf32>
    %158 = arith.mulf %152, %156 : vector<32x128xf32>
    %159 = arith.addf %157, %158 : vector<32x128xf32>
    %160 = math.tanh %159 : vector<32x128xf32>
    %161 = arith.mulf %154, %160 : vector<32x128xf32>
    %c3_92 = arith.constant 3 : index
    %c0_93 = arith.constant 0 : index
    %c0_94 = arith.constant 0 : index
    %162 = vector.load %arg9[%c3_92, %c0_93, %c0_94] : memref<8x128x128xf32, #tpu.memory_space<vmem>>, vector<1x128x128xf32>
    %163 = vector.shape_cast %162 : vector<1x128x128xf32> to vector<128x128xf32>
    %164 = arith.truncf %161 : vector<32x128xf32> to vector<32x128xbf16>
    %cst_95 = arith.constant dense<0.000000e+00> : vector<128x128xf32>
    %165 = tpu.matmul %1, %164, %cst_95 {dimension_numbers = #tpu.dot_dimension_numbers<[1], [0], [0], [1], [0, 0, 1, 1], [], []>} : vector<128x32xbf16>, vector<32x128xbf16>, vector<128x128xf32> -> vector<128x128xf32>
    %166 = arith.addf %163, %165 : vector<128x128xf32>
    %167 = vector.extract_strided_slice %166 {offsets = [0, 0], sizes = [96, 128], strides = [1, 1]} : vector<128x128xf32> to vector<96x128xf32>
    %168 = arith.negf %167 : vector<96x128xf32>
    %169 = math.exp %168 : vector<96x128xf32>
    %cst_96 = arith.constant 1.000000e+00 : f32
    %170 = vector.broadcast %cst_96 : f32 to vector<96x128xf32>
    %171 = arith.addf %170, %169 : vector<96x128xf32>
    %172 = arith.divf %170, %171 : vector<96x128xf32>
    %173 = vector.extract_strided_slice %172 {offsets = [0, 0], sizes = [32, 128], strides = [1, 1]} : vector<96x128xf32> to vector<32x128xf32>
    %174 = vector.extract_strided_slice %172 {offsets = [32, 0], sizes = [32, 128], strides = [1, 1]} : vector<96x128xf32> to vector<32x128xf32>
    %175 = vector.extract_strided_slice %172 {offsets = [64, 0], sizes = [32, 128], strides = [1, 1]} : vector<96x128xf32> to vector<32x128xf32>
    %176 = vector.extract_strided_slice %166 {offsets = [96, 0], sizes = [32, 128], strides = [1, 1]} : vector<128x128xf32> to vector<32x128xf32>
    %177 = math.tanh %176 : vector<32x128xf32>
    %178 = arith.mulf %174, %159 : vector<32x128xf32>
    %179 = arith.mulf %173, %177 : vector<32x128xf32>
    %180 = arith.addf %178, %179 : vector<32x128xf32>
    %181 = math.tanh %180 : vector<32x128xf32>
    %182 = arith.mulf %175, %181 : vector<32x128xf32>
    %c4_97 = arith.constant 4 : index
    %c0_98 = arith.constant 0 : index
    %c0_99 = arith.constant 0 : index
    %183 = vector.load %arg9[%c4_97, %c0_98, %c0_99] : memref<8x128x128xf32, #tpu.memory_space<vmem>>, vector<1x128x128xf32>
    %184 = vector.shape_cast %183 : vector<1x128x128xf32> to vector<128x128xf32>
    %185 = arith.truncf %182 : vector<32x128xf32> to vector<32x128xbf16>
    %cst_100 = arith.constant dense<0.000000e+00> : vector<128x128xf32>
    %186 = tpu.matmul %1, %185, %cst_100 {dimension_numbers = #tpu.dot_dimension_numbers<[1], [0], [0], [1], [0, 0, 1, 1], [], []>} : vector<128x32xbf16>, vector<32x128xbf16>, vector<128x128xf32> -> vector<128x128xf32>
    %187 = arith.addf %184, %186 : vector<128x128xf32>
    %188 = vector.extract_strided_slice %187 {offsets = [0, 0], sizes = [96, 128], strides = [1, 1]} : vector<128x128xf32> to vector<96x128xf32>
    %189 = arith.negf %188 : vector<96x128xf32>
    %190 = math.exp %189 : vector<96x128xf32>
    %cst_101 = arith.constant 1.000000e+00 : f32
    %191 = vector.broadcast %cst_101 : f32 to vector<96x128xf32>
    %192 = arith.addf %191, %190 : vector<96x128xf32>
    %193 = arith.divf %191, %192 : vector<96x128xf32>
    %194 = vector.extract_strided_slice %193 {offsets = [0, 0], sizes = [32, 128], strides = [1, 1]} : vector<96x128xf32> to vector<32x128xf32>
    %195 = vector.extract_strided_slice %193 {offsets = [32, 0], sizes = [32, 128], strides = [1, 1]} : vector<96x128xf32> to vector<32x128xf32>
    %196 = vector.extract_strided_slice %193 {offsets = [64, 0], sizes = [32, 128], strides = [1, 1]} : vector<96x128xf32> to vector<32x128xf32>
    %197 = vector.extract_strided_slice %187 {offsets = [96, 0], sizes = [32, 128], strides = [1, 1]} : vector<128x128xf32> to vector<32x128xf32>
    %198 = math.tanh %197 : vector<32x128xf32>
    %199 = arith.mulf %195, %180 : vector<32x128xf32>
    %200 = arith.mulf %194, %198 : vector<32x128xf32>
    %201 = arith.addf %199, %200 : vector<32x128xf32>
    %202 = math.tanh %201 : vector<32x128xf32>
    %203 = arith.mulf %196, %202 : vector<32x128xf32>
    %c5_102 = arith.constant 5 : index
    %c0_103 = arith.constant 0 : index
    %c0_104 = arith.constant 0 : index
    %204 = vector.load %arg9[%c5_102, %c0_103, %c0_104] : memref<8x128x128xf32, #tpu.memory_space<vmem>>, vector<1x128x128xf32>
    %205 = vector.shape_cast %204 : vector<1x128x128xf32> to vector<128x128xf32>
    %206 = arith.truncf %203 : vector<32x128xf32> to vector<32x128xbf16>
    %cst_105 = arith.constant dense<0.000000e+00> : vector<128x128xf32>
    %207 = tpu.matmul %1, %206, %cst_105 {dimension_numbers = #tpu.dot_dimension_numbers<[1], [0], [0], [1], [0, 0, 1, 1], [], []>} : vector<128x32xbf16>, vector<32x128xbf16>, vector<128x128xf32> -> vector<128x128xf32>
    %208 = arith.addf %205, %207 : vector<128x128xf32>
    %209 = vector.extract_strided_slice %208 {offsets = [0, 0], sizes = [96, 128], strides = [1, 1]} : vector<128x128xf32> to vector<96x128xf32>
    %210 = arith.negf %209 : vector<96x128xf32>
    %211 = math.exp %210 : vector<96x128xf32>
    %cst_106 = arith.constant 1.000000e+00 : f32
    %212 = vector.broadcast %cst_106 : f32 to vector<96x128xf32>
    %213 = arith.addf %212, %211 : vector<96x128xf32>
    %214 = arith.divf %212, %213 : vector<96x128xf32>
    %215 = vector.extract_strided_slice %214 {offsets = [0, 0], sizes = [32, 128], strides = [1, 1]} : vector<96x128xf32> to vector<32x128xf32>
    %216 = vector.extract_strided_slice %214 {offsets = [32, 0], sizes = [32, 128], strides = [1, 1]} : vector<96x128xf32> to vector<32x128xf32>
    %217 = vector.extract_strided_slice %214 {offsets = [64, 0], sizes = [32, 128], strides = [1, 1]} : vector<96x128xf32> to vector<32x128xf32>
    %218 = vector.extract_strided_slice %208 {offsets = [96, 0], sizes = [32, 128], strides = [1, 1]} : vector<128x128xf32> to vector<32x128xf32>
    %219 = math.tanh %218 : vector<32x128xf32>
    %220 = arith.mulf %216, %201 : vector<32x128xf32>
    %221 = arith.mulf %215, %219 : vector<32x128xf32>
    %222 = arith.addf %220, %221 : vector<32x128xf32>
    %223 = math.tanh %222 : vector<32x128xf32>
    %224 = arith.mulf %217, %223 : vector<32x128xf32>
    %c6_107 = arith.constant 6 : index
    %c0_108 = arith.constant 0 : index
    %c0_109 = arith.constant 0 : index
    %225 = vector.load %arg9[%c6_107, %c0_108, %c0_109] : memref<8x128x128xf32, #tpu.memory_space<vmem>>, vector<1x128x128xf32>
    %226 = vector.shape_cast %225 : vector<1x128x128xf32> to vector<128x128xf32>
    %227 = arith.truncf %224 : vector<32x128xf32> to vector<32x128xbf16>
    %cst_110 = arith.constant dense<0.000000e+00> : vector<128x128xf32>
    %228 = tpu.matmul %1, %227, %cst_110 {dimension_numbers = #tpu.dot_dimension_numbers<[1], [0], [0], [1], [0, 0, 1, 1], [], []>} : vector<128x32xbf16>, vector<32x128xbf16>, vector<128x128xf32> -> vector<128x128xf32>
    %229 = arith.addf %226, %228 : vector<128x128xf32>
    %230 = vector.extract_strided_slice %229 {offsets = [0, 0], sizes = [96, 128], strides = [1, 1]} : vector<128x128xf32> to vector<96x128xf32>
    %231 = arith.negf %230 : vector<96x128xf32>
    %232 = math.exp %231 : vector<96x128xf32>
    %cst_111 = arith.constant 1.000000e+00 : f32
    %233 = vector.broadcast %cst_111 : f32 to vector<96x128xf32>
    %234 = arith.addf %233, %232 : vector<96x128xf32>
    %235 = arith.divf %233, %234 : vector<96x128xf32>
    %236 = vector.extract_strided_slice %235 {offsets = [0, 0], sizes = [32, 128], strides = [1, 1]} : vector<96x128xf32> to vector<32x128xf32>
    %237 = vector.extract_strided_slice %235 {offsets = [32, 0], sizes = [32, 128], strides = [1, 1]} : vector<96x128xf32> to vector<32x128xf32>
    %238 = vector.extract_strided_slice %235 {offsets = [64, 0], sizes = [32, 128], strides = [1, 1]} : vector<96x128xf32> to vector<32x128xf32>
    %239 = vector.extract_strided_slice %229 {offsets = [96, 0], sizes = [32, 128], strides = [1, 1]} : vector<128x128xf32> to vector<32x128xf32>
    %240 = math.tanh %239 : vector<32x128xf32>
    %241 = arith.mulf %237, %222 : vector<32x128xf32>
    %242 = arith.mulf %236, %240 : vector<32x128xf32>
    %243 = arith.addf %241, %242 : vector<32x128xf32>
    %244 = math.tanh %243 : vector<32x128xf32>
    %245 = arith.mulf %238, %244 : vector<32x128xf32>
    %c7_112 = arith.constant 7 : index
    %c0_113 = arith.constant 0 : index
    %c0_114 = arith.constant 0 : index
    %246 = vector.load %arg9[%c7_112, %c0_113, %c0_114] : memref<8x128x128xf32, #tpu.memory_space<vmem>>, vector<1x128x128xf32>
    %247 = vector.shape_cast %246 : vector<1x128x128xf32> to vector<128x128xf32>
    %248 = arith.truncf %245 : vector<32x128xf32> to vector<32x128xbf16>
    %cst_115 = arith.constant dense<0.000000e+00> : vector<128x128xf32>
    %249 = tpu.matmul %1, %248, %cst_115 {dimension_numbers = #tpu.dot_dimension_numbers<[1], [0], [0], [1], [0, 0, 1, 1], [], []>} : vector<128x32xbf16>, vector<32x128xbf16>, vector<128x128xf32> -> vector<128x128xf32>
    %250 = arith.addf %247, %249 : vector<128x128xf32>
    %251 = vector.extract_strided_slice %250 {offsets = [0, 0], sizes = [96, 128], strides = [1, 1]} : vector<128x128xf32> to vector<96x128xf32>
    %252 = arith.negf %251 : vector<96x128xf32>
    %253 = math.exp %252 : vector<96x128xf32>
    %cst_116 = arith.constant 1.000000e+00 : f32
    %254 = vector.broadcast %cst_116 : f32 to vector<96x128xf32>
    %255 = arith.addf %254, %253 : vector<96x128xf32>
    %256 = arith.divf %254, %255 : vector<96x128xf32>
    %257 = vector.extract_strided_slice %256 {offsets = [0, 0], sizes = [32, 128], strides = [1, 1]} : vector<96x128xf32> to vector<32x128xf32>
    %258 = vector.extract_strided_slice %256 {offsets = [32, 0], sizes = [32, 128], strides = [1, 1]} : vector<96x128xf32> to vector<32x128xf32>
    %259 = vector.extract_strided_slice %256 {offsets = [64, 0], sizes = [32, 128], strides = [1, 1]} : vector<96x128xf32> to vector<32x128xf32>
    %260 = vector.extract_strided_slice %250 {offsets = [96, 0], sizes = [32, 128], strides = [1, 1]} : vector<128x128xf32> to vector<32x128xf32>
    %261 = math.tanh %260 : vector<32x128xf32>
    %262 = arith.mulf %258, %243 : vector<32x128xf32>
    %263 = arith.mulf %257, %261 : vector<32x128xf32>
    %264 = arith.addf %262, %263 : vector<32x128xf32>
    %265 = math.tanh %264 : vector<32x128xf32>
    %266 = arith.mulf %259, %265 : vector<32x128xf32>
    %cst_117 = arith.constant 0.000000e+00 : f32
    %267 = vector.broadcast %cst_117 : f32 to vector<32x128xf32>
    %268 = arith.maximumf %266, %267 : vector<32x128xf32>
    %c0_118 = arith.constant 0 : index
    %c0_119 = arith.constant 0 : index
    %269 = vector.load %arg6[%c0_118, %c0_119] : memref<32x1xf32, #tpu.memory_space<vmem>>, vector<32x1xf32>
    %270 = vector.broadcast %269 : vector<32x1xf32> to vector<32x128xf32>
    %271 = arith.mulf %268, %270 : vector<32x128xf32>
    %cst_120 = arith.constant dense<0.000000e+00> : vector<128xf32>
    %272 = vector.multi_reduction <add>, %271, %cst_120 [0] : vector<32x128xf32> to vector<128xf32>
    %273 = vector.shape_cast %272 : vector<128xf32> to vector<1x128xf32>
    %c0_121 = arith.constant 0 : index
    %274 = memref.load %arg7[%c0_121] : memref<1xf32, #tpu.memory_space<smem>>
    %275 = vector.broadcast %274 : f32 to vector<1x128xf32>
    %276 = arith.addf %273, %275 : vector<1x128xf32>
    %277 = arith.negf %276 : vector<1x128xf32>
    %278 = math.exp %277 : vector<1x128xf32>
    %cst_122 = arith.constant 1.000000e+00 : f32
    %279 = vector.broadcast %cst_122 : f32 to vector<1x128xf32>
    %280 = arith.addf %279, %278 : vector<1x128xf32>
    %281 = arith.divf %279, %280 : vector<1x128xf32>
    %c0_123 = arith.constant 0 : index
    %c0_124 = arith.constant 0 : index
    %282 = vector.load %arg8[%c0_123, %c0_124] : memref<1x128xf32, #tpu.memory_space<vmem>>, vector<1x128xf32>
    tpu.vector_store %arg8[%c0_123, %c0_124], %281 {strides = array<i32>} : memref<1x128xf32, #tpu.memory_space<vmem>>, vector<1x128xf32>,
    return
  }
  func.func @transform_0(%arg0: i32) -> (i32, i32, i32) {
    %c0_i32 = arith.constant 0 : i32
    %c0_i32_0 = arith.constant 0 : i32
    %c0_i32_1 = arith.constant 0 : i32
    return %c0_i32, %c0_i32_0, %arg0 : i32, i32, i32
  }
  func.func @transform_1(%arg0: i32) -> (i32, i32, i32) {
    %c0_i32 = arith.constant 0 : i32
    %c0_i32_0 = arith.constant 0 : i32
    %c0_i32_1 = arith.constant 0 : i32
    return %c0_i32, %c0_i32_0, %arg0 : i32, i32, i32
  }
  func.func @transform_2(%arg0: i32) -> (i32, i32) {
    %c0_i32 = arith.constant 0 : i32
    %c0_i32_0 = arith.constant 0 : i32
    %c0_i32_1 = arith.constant 0 : i32
    return %c0_i32, %c0_i32_0 : i32, i32
  }
  func.func @transform_3(%arg0: i32) -> (i32, i32) {
    %c0_i32 = arith.constant 0 : i32
    %c0_i32_0 = arith.constant 0 : i32
    %c0_i32_1 = arith.constant 0 : i32
    return %c0_i32, %c0_i32_0 : i32, i32
  }
  func.func @transform_4(%arg0: i32) -> (i32, i32) {
    %c0_i32 = arith.constant 0 : i32
    %c0_i32_0 = arith.constant 0 : i32
    %c0_i32_1 = arith.constant 0 : i32
    return %c0_i32, %c0_i32_0 : i32, i32
  }
  func.func @transform_5(%arg0: i32) -> (i32, i32) {
    %c0_i32 = arith.constant 0 : i32
    %c0_i32_0 = arith.constant 0 : i32
    %c0_i32_1 = arith.constant 0 : i32
    return %c0_i32, %c0_i32_0 : i32, i32
  }
  func.func @transform_6(%arg0: i32) -> i32 {
    %c0_i32 = arith.constant 0 : i32
    %c0_i32_0 = arith.constant 0 : i32
    return %c0_i32 : i32
  }
  func.func @transform_7(%arg0: i32) -> (i32, i32) {
    %c0_i32 = arith.constant 0 : i32
    %c0_i32_0 = arith.constant 0 : i32
    return %c0_i32, %arg0 : i32, i32
  }
}

</mosaic_0001>

<llo_original>
// kernel: tpu_custom_call.1
$region0: #{tpu_custom_call.1}
  #allocation0 [shape = 'u32[]', space=smem, size = 0x4, offset = 0x4, fixed_abs, tag = 'smem constant byte address 0x4 - core index']
  #allocation1 [shape = 'u32[72,128]{1,0:T(1,128)}', space=vmem, size = 0x9000, scoped, tag = 'internal scratch']
  #allocation2 [shape = 'f32[8,128,128]{2,1,0:T(8,128)}', space=vmem, size = 0x80000, scoped, tag = 'scratch operand']
  #allocation3 [shape = 'f32[1]{0:T(128)S(6)}', space=smem, size = 0x200, scoped, tag = 'scoped memory for tpu_custom_call.1']
  %s0 = inlined_call_operand.hbm [shape: f32[8,128,256], index: 0, kind: input, shape index: {}]
  %s1 = inlined_call_operand.vmem [shape: f32[8,1,256], index: 1, kind: input, shape index: {}]
  %s2 = inlined_call_operand.vmem [shape: bf16[128,128], index: 2, kind: input, shape index: {}]
  %s3 = inlined_call_operand.vmem [shape: bf16[128,32], index: 3, kind: input, shape index: {}]
  %s4 = inlined_call_operand.vmem [shape: f32[128,1], index: 4, kind: input, shape index: {}]
  %s5 = inlined_call_operand.vmem [shape: f32[32,1], index: 5, kind: input, shape index: {}]
  %s6 = inlined_call_operand.<no memory space> [shape: f32[1], index: 6, kind: input, shape index: {}]
  %s7 = inlined_call_operand.hbm [shape: f32[1,256], index: 7, kind: output, shape index: {}]
  %s8 = sld [smem:[#allocation0]]
  $region106: #{tpu_custom_call.1} parent=0
    _
  %s10 = ssub.s32 1, %s8
  %s11 = scalar_select 0, %s10, %s8
  %12 = sst [smem:[#allocation3]] %s6
  $region1: #{tpu_custom_call.1} parent=0
    #allocation4 [shape = 'u8[1048576]{0}', space=vmem, size = 0x100000, scoped, tag = 'input window, operand 0']
    #allocation5 [shape = 's32[2]{0}', space=sflag, size = 0x8, scoped, tag = 'scoped memory for tpu_custom_call.1']
    #allocation6 [shape = 's32[2]{0}', space=sflag, size = 0x8, scoped, tag = 'scoped memory for tpu_custom_call.1']
    #allocation7 [shape = 'u8[8192]{0}', space=vmem, size = 0x2000, scoped, tag = 'input window, operand 1']
    #allocation8 [shape = 'u8[1024]{0}', space=vmem, size = 0x400, scoped, tag = 'output window, operand 0']
    %13 = vsyncpa [#allocation5], 0
    %s14 = scalar_lea.sflag [#allocation5], 1
    %15 = vsyncpa %s14, 0
    %16 = vsyncpa [#allocation6], 0
    %s17 = scalar_lea.sflag [#allocation6], 1
    %18 = vsyncpa %s17, 0
    loop: start=0, step=1, limit=4
    $region2: #{tpu_custom_call.1} parent=1 // loop_pre_header
      _
    $region3: #{tpu_custom_call.1} parent=1 // loop_header
      %s20 = sphi 0, %s24
      %p21 = scmp.ge.s32.totalorder %s20, 4
      %s30 = sphi 0, %s32
      %s33 = sphi 0, %s30
      %s34 = sphi 0, %s33
      %s50 = sphi 0, %s34
      %s56 = sphi 0, %s58
      %s59 = sphi 0, %s56
      %s60 = sphi 0, %s59
      %s76 = sphi 0, %s60
      %s80 = sphi 0, %s80
      %s82 = sphi 0, %s80
      %s83 = sphi 0, %s82
      %s97 = sphi 0, %s83
      %s101 = sphi 0, %s101
      %s103 = sphi 0, %s101
      %s104 = sphi 0, %s103
      %s118 = sphi 0, %s104
      %s122 = sphi 0, %s122
      %s124 = sphi 0, %s122
      %s125 = sphi 0, %s124
      %s139 = sphi 0, %s125
      %s143 = sphi 0, %s143
      %s145 = sphi 0, %s143
      %s146 = sphi 0, %s145
      %s160 = sphi 0, %s146
      %s164 = sphi 0, %s164
      %s166 = sphi 0, %s164
      %s167 = sphi 0, %s166
      %s181 = sphi 0, %s167
      %s187 = sphi 0, %s189
      %s190 = sphi 0, %s187
      %s191 = sphi 0, %s190
      %s207 = sphi 0, %s191
    $region4: #{tpu_custom_call.1} parent=1 // loop_header_branch
      %23 = sbr.rel (%p21) target = $region8
    $region5: #{tpu_custom_call.1} parent=1 // loop_body
      %s25 = ssub.s32 %s20, 1
      %s26 = ssub.s32 %s20, 2
      %s27 = sadd.s32 %s20, 1
      %s28 = ssub.s32 %s20, %s27
      %p29 = scmp.eq.s32.totalorder %s28, 0
      %s31 = sadd.s32 %s30, 1
      %s32 = scalar_select %p29, %s30, %s31
      %p35 = pneg %p29
      %p36 = scmp.eq.s32.totalorder %s20, 1
      %p37 = por %p35, %p36
      %p38 = scmp.ne.s32.totalorder %s30, %s33
      %p39 = scmp.eq.s32.totalorder %s20, 0
      %p40 = por %p38, %p39
      %p41 = scmp.ne.s32.totalorder %s30, %s33
      %p42 = scmp.eq.s32.totalorder %s25, 1
      %p43 = por %p41, %p42
      %p44 = scmp.ne.s32.totalorder %s33, %s34
      %p45 = scmp.eq.s32.totalorder %s25, 0
      %p46 = por %p44, %p45
      %p47 = scmp.ne.s32.totalorder %s33, %s34
      %p48 = scmp.eq.s32.totalorder %s26, 1
      %p49 = por %p47, %p48
      %p51 = scmp.ne.s32.totalorder %s34, %s50
      %p52 = scmp.eq.s32.totalorder %s26, 0
      %p53 = por %p51, %p52
      %s54 = ssub.s32 %s20, %s27
      %p55 = scmp.eq.s32.totalorder %s54, 0
      %s57 = sadd.s32 %s56, 1
      %s58 = scalar_select %p55, %s56, %s57
      %p61 = pneg %p55
      %p62 = scmp.eq.s32.totalorder %s20, 1
      %p63 = por %p61, %p62
      %p64 = scmp.ne.s32.totalorder %s56, %s59
      %p65 = scmp.eq.s32.totalorder %s20, 0
      %p66 = por %p64, %p65
      %p67 = scmp.ne.s32.totalorder %s56, %s59
      %p68 = scmp.eq.s32.totalorder %s25, 1
      %p69 = por %p67, %p68
      %p70 = scmp.ne.s32.totalorder %s59, %s60
      %p71 = scmp.eq.s32.totalorder %s25, 0
      %p72 = por %p70, %p71
      %p73 = scmp.ne.s32.totalorder %s59, %s60
      %p74 = scmp.eq.s32.totalorder %s26, 1
      %p75 = por %p73, %p74
      %p77 = scmp.ne.s32.totalorder %s60, %s76
      %p78 = scmp.eq.s32.totalorder %s26, 0
      %p79 = por %p77, %p78
      %s81 = sadd.s32 %s80, 1
      %p84 = scmp.eq.s32.totalorder %s20, 1
      %p85 = scmp.ne.s32.totalorder %s80, %s82
      %p86 = scmp.eq.s32.totalorder %s20, 0
      %p87 = por %p85, %p86
      %p88 = scmp.ne.s32.totalorder %s80, %s82
      %p89 = scmp.eq.s32.totalorder %s25, 1
      %p90 = por %p88, %p89
      %p91 = scmp.ne.s32.totalorder %s82, %s83
      %p92 = scmp.eq.s32.totalorder %s25, 0
      %p93 = por %p91, %p92
      %p94 = scmp.ne.s32.totalorder %s82, %s83
      %p95 = scmp.eq.s32.totalorder %s26, 1
      %p96 = por %p94, %p95
      %p98 = scmp.ne.s32.totalorder %s83, %s97
      %p99 = scmp.eq.s32.totalorder %s26, 0
      %p100 = por %p98, %p99
      %s102 = sadd.s32 %s101, 1
      %p105 = scmp.eq.s32.totalorder %s20, 1
      %p106 = scmp.ne.s32.totalorder %s101, %s103
      %p107 = scmp.eq.s32.totalorder %s20, 0
      %p108 = por %p106, %p107
      %p109 = scmp.ne.s32.totalorder %s101, %s103
      %p110 = scmp.eq.s32.totalorder %s25, 1
      %p111 = por %p109, %p110
      %p112 = scmp.ne.s32.totalorder %s103, %s104
      %p113 = scmp.eq.s32.totalorder %s25, 0
      %p114 = por %p112, %p113
      %p115 = scmp.ne.s32.totalorder %s103, %s104
      %p116 = scmp.eq.s32.totalorder %s26, 1
      %p117 = por %p115, %p116
      %p119 = scmp.ne.s32.totalorder %s104, %s118
      %p120 = scmp.eq.s32.totalorder %s26, 0
      %p121 = por %p119, %p120
      %s123 = sadd.s32 %s122, 1
      %p126 = scmp.eq.s32.totalorder %s20, 1
      %p127 = scmp.ne.s32.totalorder %s122, %s124
      %p128 = scmp.eq.s32.totalorder %s20, 0
      %p129 = por %p127, %p128
      %p130 = scmp.ne.s32.totalorder %s122, %s124
      %p131 = scmp.eq.s32.totalorder %s25, 1
      %p132 = por %p130, %p131
      %p133 = scmp.ne.s32.totalorder %s124, %s125
      %p134 = scmp.eq.s32.totalorder %s25, 0
      %p135 = por %p133, %p134
      %p136 = scmp.ne.s32.totalorder %s124, %s125
      %p137 = scmp.eq.s32.totalorder %s26, 1
      %p138 = por %p136, %p137
      %p140 = scmp.ne.s32.totalorder %s125, %s139
      %p141 = scmp.eq.s32.totalorder %s26, 0
      %p142 = por %p140, %p141
      %s144 = sadd.s32 %s143, 1
      %p147 = scmp.eq.s32.totalorder %s20, 1
      %p148 = scmp.ne.s32.totalorder %s143, %s145
      %p149 = scmp.eq.s32.totalorder %s20, 0
      %p150 = por %p148, %p149
      %p151 = scmp.ne.s32.totalorder %s143, %s145
      %p152 = scmp.eq.s32.totalorder %s25, 1
      %p153 = por %p151, %p152
      %p154 = scmp.ne.s32.totalorder %s145, %s146
      %p155 = scmp.eq.s32.totalorder %s25, 0
      %p156 = por %p154, %p155
      %p157 = scmp.ne.s32.totalorder %s145, %s146
      %p158 = scmp.eq.s32.totalorder %s26, 1
      %p159 = por %p157, %p158
      %p161 = scmp.ne.s32.totalorder %s146, %s160
      %p162 = scmp.eq.s32.totalorder %s26, 0
      %p163 = por %p161, %p162
      %s165 = sadd.s32 %s164, 1
      %p168 = scmp.eq.s32.totalorder %s20, 1
      %p169 = scmp.ne.s32.totalorder %s164, %s166
      %p170 = scmp.eq.s32.totalorder %s20, 0
      %p171 = por %p169, %p170
      %p172 = scmp.ne.s32.totalorder %s164, %s166
      %p173 = scmp.eq.s32.totalorder %s25, 1
      %p174 = por %p172, %p173
      %p175 = scmp.ne.s32.totalorder %s166, %s167
      %p176 = scmp.eq.s32.totalorder %s25, 0
      %p177 = por %p175, %p176
      %p178 = scmp.ne.s32.totalorder %s166, %s167
      %p179 = scmp.eq.s32.totalorder %s26, 1
      %p180 = por %p178, %p179
      %p182 = scmp.ne.s32.totalorder %s167, %s181
      %p183 = scmp.eq.s32.totalorder %s26, 0
      %p184 = por %p182, %p183
      %s185 = ssub.s32 %s20, %s27
      %p186 = scmp.eq.s32.totalorder %s185, 0
      %s188 = sadd.s32 %s187, 1
      %s189 = scalar_select %p186, %s187, %s188
      %p192 = pneg %p186
      %p193 = scmp.eq.s32.totalorder %s20, 1
      %p194 = por %p192, %p193
      %p195 = scmp.ne.s32.totalorder %s187, %s190
      %p196 = scmp.eq.s32.totalorder %s20, 0
      %p197 = por %p195, %p196
      %p198 = scmp.ne.s32.totalorder %s187, %s190
      %p199 = scmp.eq.s32.totalorder %s25, 1
      %p200 = por %p198, %p199
      %p201 = scmp.ne.s32.totalorder %s190, %s191
      %p202 = scmp.eq.s32.totalorder %s25, 0
      %p203 = por %p201, %p202
      %p204 = scmp.ne.s32.totalorder %s190, %s191
      %p205 = scmp.eq.s32.totalorder %s26, 1
      %p206 = por %p204, %p205
      %p208 = scmp.ne.s32.totalorder %s191, %s207
      %p209 = scmp.eq.s32.totalorder %s26, 0
      %p210 = por %p208, %p209
      %p211 = scmp.le.s32.totalorder 1, %s20
      %p212 = scmp.lt.s32.totalorder %s20, 3
      %p213 = pnand %p211, %p212
      %p214 = pneg %p213
      // Predicated region
      $region9: #{tpu_custom_call.1} parent=5 // pred_check
        _
      $region10: #{tpu_custom_call.1} parent=5 // pred_check_branch
        %216 = sbr.rel (%p213) target = $region12
      $region11: #{tpu_custom_call.1} parent=5 // pred_region
        %s217 = ssub.s32 %s20, 1
        // Predicated region
        $region13: #{tpu_custom_call.1} parent=11 // pred_check
          %p218 = pneg %p93
        $region14: #{tpu_custom_call.1} parent=11 // pred_check_branch
          %220 = sbr.rel (%p218) target = $region16
        $region15: #{tpu_custom_call.1} parent=11 // pred_region
          _
        $region16: #{tpu_custom_call.1} parent=11 // pred_fallthru
          _
        // Predicated region
        $region17: #{tpu_custom_call.1} parent=11 // pred_check
          %p221 = pneg %p114
        $region18: #{tpu_custom_call.1} parent=11 // pred_check_branch
          %223 = sbr.rel (%p221) target = $region20
        $region19: #{tpu_custom_call.1} parent=11 // pred_region
          _
        $region20: #{tpu_custom_call.1} parent=11 // pred_fallthru
          _
        // Predicated region
        $region21: #{tpu_custom_call.1} parent=11 // pred_check
          %p224 = pneg %p135
        $region22: #{tpu_custom_call.1} parent=11 // pred_check_branch
          %226 = sbr.rel (%p224) target = $region24
        $region23: #{tpu_custom_call.1} parent=11 // pred_region
          _
        $region24: #{tpu_custom_call.1} parent=11 // pred_fallthru
          _
        // Predicated region
        $region25: #{tpu_custom_call.1} parent=11 // pred_check
          %p227 = pneg %p156
        $region26: #{tpu_custom_call.1} parent=11 // pred_check_branch
          %229 = sbr.rel (%p227) target = $region28
        $region27: #{tpu_custom_call.1} parent=11 // pred_region
          _
        $region28: #{tpu_custom_call.1} parent=11 // pred_fallthru
          _
        // Predicated region
        $region29: #{tpu_custom_call.1} parent=11 // pred_check
          %p230 = pneg %p177
        $region30: #{tpu_custom_call.1} parent=11 // pred_check_branch
          %232 = sbr.rel (%p230) target = $region32
        $region31: #{tpu_custom_call.1} parent=11 // pred_region
          _
        $region32: #{tpu_custom_call.1} parent=11 // pred_fallthru
          _
      $region12: #{tpu_custom_call.1} parent=5 // pred_fallthru
        _
      %p233 = scmp.lt.s32.totalorder %s20, 2
      // Predicated region
      $region33: #{tpu_custom_call.1} parent=5 // pred_check
        %p234 = pneg %p233
      $region34: #{tpu_custom_call.1} parent=5 // pred_check_branch
        %236 = sbr.rel (%p234) target = $region36
      $region35: #{tpu_custom_call.1} parent=5 // pred_region
        // Predicated region
        $region37: #{tpu_custom_call.1} parent=35 // pred_check
          %p237 = pneg %p40
        $region38: #{tpu_custom_call.1} parent=35 // pred_check_branch
          %239 = sbr.rel (%p237) target = $region40
        $region39: #{tpu_custom_call.1} parent=35 // pred_region
          %s240 = sand.u32 %s30, 1
          %s241 = scalar_lea.sflag [#allocation5], %s240
          %s242 = sand.u32 %s30, 1
          %s243 = smul.addr %s242, 1024
          %s244 = scalar_lea.vmem [#allocation4], %s243
          %246 = vsyncadd %s241, 0
          %s247 = smul.addr %s20, 8
          %s248 = scalar_lea.hbm %s0, %s247
          %s249 = sshll.u32 %s248, 4
          %s250 = int_to_ptr.hbm [resolvable:$true] %s249
          %s251 = sshll.u32 %s244, 4
          %s252 = int_to_ptr.vmem [resolvable:$true] %s251
          %257 = dma.hbm_to_vmem [thread:$0]  %s250, 16384, %s252, %s241, 256, 128, 8
        $region40: #{tpu_custom_call.1} parent=35 // pred_fallthru
          _
        // Predicated region
        $region41: #{tpu_custom_call.1} parent=35 // pred_check
          %p258 = pneg %p66
        $region42: #{tpu_custom_call.1} parent=35 // pred_check_branch
          %260 = sbr.rel (%p258) target = $region44
        $region43: #{tpu_custom_call.1} parent=35 // pred_region
          %s261 = sand.u32 %s56, 1
          %s262 = sand.u32 %s56, 1
          %s263 = smul.addr %s262, 8
          %s264 = scalar_lea.vmem [#allocation7], %s263
          %s265 = scalar_lea.vmem %s1, %s20
          // Predicated region
          $region45: #{tpu_custom_call.1} parent=43 // pred_check
            _
          $region46: #{tpu_custom_call.1} parent=43 // pred_check_branch
            %267 = sbr.rel (0) target = $region48
          $region47: #{tpu_custom_call.1} parent=43 // pred_region
            // Predicated region
            $region49: #{tpu_custom_call.1} parent=47 // pred_check
              _
            $region50: #{tpu_custom_call.1} parent=47 // pred_check_branch
              %269 = sbr.rel target = $region52
            $region51: #{tpu_custom_call.1} parent=47 // pred_region
              // Predicated region
              $region64: #{tpu_custom_call.1} parent=51 // pred_check
                _
              $region65: #{tpu_custom_call.1} parent=51 // pred_check_branch
                %299 = sbr.rel (0) target = $region67
              $region66: #{tpu_custom_call.1} parent=51 // pred_region
                loop: start=0, step=1, limit=1
                $region68: #{tpu_custom_call.1} parent=66 // loop_pre_header
                  _
                $region69: #{tpu_custom_call.1} parent=66 // loop_header
                  %s301 = sphi 0, %s305
                  %p302 = scmp.ge.s32.totalorder %s301, 1
                  %s306 = sphi %s265, %s265
                  %s307 = sphi %s264, %s264
                $region70: #{tpu_custom_call.1} parent=66 // loop_header_branch
                  %304 = sbr.rel (%p302) target = $region74
                $region71: #{tpu_custom_call.1} parent=66 // loop_body
                  _
                $region72: #{tpu_custom_call.1} parent=66 // loop_footer
                  %s305 = sadd.s32 1, %s301
                $region73: #{tpu_custom_call.1} parent=66 // loop_footer_branch
                  %300 = sbr.rel target = $region69
                $region74: #{tpu_custom_call.1} parent=66 // loop_exit
                  _
                %s309 = ssub.s32 2, 1
                loop: start=0, step=1, limit=1
                $region75: #{tpu_custom_call.1} parent=66 // loop_pre_header
                  _
                $region76: #{tpu_custom_call.1} parent=66 // loop_header
                  %s311 = sphi 0, %s315
                  %p312 = scmp.ge.s32.totalorder %s311, 1
                  %s316 = sphi %s265, %s265
                  %s317 = sphi %s264, %s264
                $region77: #{tpu_custom_call.1} parent=66 // loop_header_branch
                  %314 = sbr.rel (%p312) target = $region81
                $region78: #{tpu_custom_call.1} parent=66 // loop_body
                  %v318 = vld [vmem:[%s316] sm:%s309]
                  %319 = vst [vmem:[%s317] sm:%s309] %v318
                  %v320 = vld [vmem:[%s316 + $0x2] sm:%s309]
                  %321 = vst [vmem:[%s317 + $0x1] sm:%s309] %v320
                  %v322 = vld [vmem:[%s316 + $0x4] sm:%s309]
                  %323 = vst [vmem:[%s317 + $0x2] sm:%s309] %v322
                  %v324 = vld [vmem:[%s316 + $0x6] sm:%s309]
                  %325 = vst [vmem:[%s317 + $0x3] sm:%s309] %v324
                  %v326 = vld [vmem:[%s316 + $0x8] sm:%s309]
                  %327 = vst [vmem:[%s317 + $0x4] sm:%s309] %v326
                  %v328 = vld [vmem:[%s316 + $0xa] sm:%s309]
                  %329 = vst [vmem:[%s317 + $0x5] sm:%s309] %v328
                  %v330 = vld [vmem:[%s316 + $0xc] sm:%s309]
                  %331 = vst [vmem:[%s317 + $0x6] sm:%s309] %v330
                  %v332 = vld [vmem:[%s316 + $0xe] sm:%s309]
                  %333 = vst [vmem:[%s317 + $0x7] sm:%s309] %v332
                $region79: #{tpu_custom_call.1} parent=66 // loop_footer
                  %s315 = sadd.s32 1, %s311
                $region80: #{tpu_custom_call.1} parent=66 // loop_footer_branch
                  %310 = sbr.rel target = $region76
                $region81: #{tpu_custom_call.1} parent=66 // loop_exit
                  _
              $region67: #{tpu_custom_call.1} parent=51 // pred_fallthru
                _
            $region52: #{tpu_custom_call.1} parent=47 // pred_fallthru
              _
            // Predicated region
            $region53: #{tpu_custom_call.1} parent=47 // pred_check
              _
            $region54: #{tpu_custom_call.1} parent=47 // pred_check_branch
              %271 = sbr.rel (0) target = $region56
            $region55: #{tpu_custom_call.1} parent=47 // pred_region
              %s273 = ssub.s32 2, 1
              loop: start=0, step=1, limit=1
              $region57: #{tpu_custom_call.1} parent=55 // loop_pre_header
                _
              $region58: #{tpu_custom_call.1} parent=55 // loop_header
                %s275 = sphi 0, %s279
                %p276 = scmp.ge.s32.totalorder %s275, 1
                %s280 = sphi %s265, %s265
                %s281 = sphi %s264, %s264
              $region59: #{tpu_custom_call.1} parent=55 // loop_header_branch
                %278 = sbr.rel (%p276) target = $region63
              $region60: #{tpu_custom_call.1} parent=55 // loop_body
                %v282 = vld [vmem:[%s280] sm:%s273]
                %283 = vst [vmem:[%s281] sm:%s273] %v282
                %v284 = vld [vmem:[%s280 + $0x2] sm:%s273]
                %285 = vst [vmem:[%s281 + $0x1] sm:%s273] %v284
                %v286 = vld [vmem:[%s280 + $0x4] sm:%s273]
                %287 = vst [vmem:[%s281 + $0x2] sm:%s273] %v286
                %v288 = vld [vmem:[%s280 + $0x6] sm:%s273]
                %289 = vst [vmem:[%s281 + $0x3] sm:%s273] %v288
                %v290 = vld [vmem:[%s280 + $0x8] sm:%s273]
                %291 = vst [vmem:[%s281 + $0x4] sm:%s273] %v290
                %v292 = vld [vmem:[%s280 + $0xa] sm:%s273]
                %293 = vst [vmem:[%s281 + $0x5] sm:%s273] %v292
                %v294 = vld [vmem:[%s280 + $0xc] sm:%s273]
                %295 = vst [vmem:[%s281 + $0x6] sm:%s273] %v294
                %v296 = vld [vmem:[%s280 + $0xe] sm:%s273]
                %297 = vst [vmem:[%s281 + $0x7] sm:%s273] %v296
              $region61: #{tpu_custom_call.1} parent=55 // loop_footer
                %s279 = sadd.s32 1, %s275
              $region62: #{tpu_custom_call.1} parent=55 // loop_footer_branch
                %274 = sbr.rel target = $region58
              $region63: #{tpu_custom_call.1} parent=55 // loop_exit
                _
            $region56: #{tpu_custom_call.1} parent=47 // pred_fallthru
              _
          $region48: #{tpu_custom_call.1} parent=43 // pred_fallthru
            _
          %334 = vnop
        $region44: #{tpu_custom_call.1} parent=35 // pred_fallthru
          _
      $region36: #{tpu_custom_call.1} parent=5 // pred_fallthru
        _
      %p335 = scmp.le.s32.totalorder 1, %s20
      %p336 = scmp.lt.s32.totalorder %s20, 3
      %p337 = pnand %p335, %p336
      %p338 = pneg %p337
      // Predicated region
      $region82: #{tpu_custom_call.1} parent=5 // pred_check
        _
      $region83: #{tpu_custom_call.1} parent=5 // pred_check_branch
        %340 = sbr.rel (%p337) target = $region85
      $region84: #{tpu_custom_call.1} parent=5 // pred_region
        %s341 = ssub.s32 %s20, 1
        %s342 = sand.u32 %s33, 1
        %s343 = scalar_lea.sflag [#allocation5], %s342
        %s344 = sand.u32 %s33, 1
        %s345 = smul.addr %s344, 1024
        %s346 = scalar_lea.vmem [#allocation4], %s345
        // Predicated region
        $region86: #{tpu_custom_call.1} parent=84 // pred_check
          %p347 = pneg %p46
        $region87: #{tpu_custom_call.1} parent=84 // pred_check_branch
          %349 = sbr.rel (%p347) target = $region89
        $region88: #{tpu_custom_call.1} parent=84 // pred_region
          %351 = dma.done %s343, 16384
        $region89: #{tpu_custom_call.1} parent=84 // pred_fallthru
          _
        %s352 = sand.u32 %s59, 1
        %s353 = sand.u32 %s59, 1
        %s354 = smul.addr %s353, 8
        %s355 = scalar_lea.vmem [#allocation7], %s354
        // Predicated region
        $region90: #{tpu_custom_call.1} parent=84 // pred_check
          %p356 = pneg %p72
        $region91: #{tpu_custom_call.1} parent=84 // pred_check_branch
          %358 = sbr.rel (%p356) target = $region93
        $region92: #{tpu_custom_call.1} parent=84 // pred_region
          _
        $region93: #{tpu_custom_call.1} parent=84 // pred_fallthru
          _
        %s359 = sand.u32 %s33, 1
        %s360 = scalar_lea.sflag [#allocation5], %s359
        %s361 = sand.u32 %s33, 1
        %s362 = smul.addr %s361, 1024
        %s363 = scalar_lea.vmem [#allocation4], %s362
        %p364 = pneg %p46
        %p365 = pneg %p43
        %s366 = sand.u32 %s59, 1
        %s367 = sand.u32 %s59, 1
        %s368 = smul.addr %s367, 8
        %s369 = scalar_lea.vmem [#allocation7], %s368
        %p370 = pneg %p72
        %p371 = pneg %p69
        %p372 = pneg %p93
        %p373 = pneg %p90
        %p374 = pneg %p114
        %p375 = pneg %p111
        %p376 = pneg %p135
        %p377 = pneg %p132
        %p378 = pneg %p156
        %p379 = pneg %p153
        %p380 = pneg %p177
        %p381 = pneg %p174
        %p382 = pneg %p203
        %p383 = pneg %p200
        %s384 = sand.u32 %s190, 1
        %s385 = scalar_lea.sflag [#allocation6], %s384
        %s386 = sand.u32 %s190, 1
        %s387 = scalar_lea.vmem [#allocation8], %s386
        %v389 = vld [vmem:[%s2] sm:$0xf]
        %v390 = vld [vmem:[%s2 + $0x4] sm:$0xf]
        %v391 = vld [vmem:[%s2 + $0x8] sm:$0xf]
        %v392 = vld [vmem:[%s2 + $0xc] sm:$0xf]
        %v393 = vld [vmem:[%s2 + $0x10] sm:$0xf]
        %v394 = vld [vmem:[%s2 + $0x14] sm:$0xf]
        %v395 = vld [vmem:[%s2 + $0x18] sm:$0xf]
        %v396 = vld [vmem:[%s2 + $0x1c] sm:$0xf]
        %v397 = vld [vmem:[%s2 + $0x20] sm:$0xf]
        %v398 = vld [vmem:[%s2 + $0x24] sm:$0xf]
        %v399 = vld [vmem:[%s2 + $0x28] sm:$0xf]
        %v400 = vld [vmem:[%s2 + $0x2c] sm:$0xf]
        %v401 = vld [vmem:[%s2 + $0x30] sm:$0xf]
        %v402 = vld [vmem:[%s2 + $0x34] sm:$0xf]
        %v403 = vld [vmem:[%s2 + $0x38] sm:$0xf]
        %v404 = vld [vmem:[%s2 + $0x3c] sm:$0xf]
        %v405 = vld [vmem:[%s3] sm:$0xf]
        %v406 = vld [vmem:[%s3 + $0x4] sm:$0xf]
        %v407 = vld [vmem:[%s3 + $0x8] sm:$0xf]
        %v408 = vld [vmem:[%s3 + $0xc] sm:$0xf]
        %v409 = vld [vmem:[%s3 + $0x10] sm:$0xf]
        %v410 = vld [vmem:[%s3 + $0x14] sm:$0xf]
        %v411 = vld [vmem:[%s3 + $0x18] sm:$0xf]
        %v412 = vld [vmem:[%s3 + $0x1c] sm:$0xf]
        %v413 = vld [vmem:[%s3 + $0x20] sm:$0xf]
        %v414 = vld [vmem:[%s3 + $0x24] sm:$0xf]
        %v415 = vld [vmem:[%s3 + $0x28] sm:$0xf]
        %v416 = vld [vmem:[%s3 + $0x2c] sm:$0xf]
        %v417 = vld [vmem:[%s3 + $0x30] sm:$0xf]
        %v418 = vld [vmem:[%s3 + $0x34] sm:$0xf]
        %v419 = vld [vmem:[%s3 + $0x38] sm:$0xf]
        %v420 = vld [vmem:[%s3 + $0x3c] sm:$0xf]
        %v421 = vld [vmem:[%s4] sm:$0xff]
        %v422 = vld [vmem:[%s4 + $0x8] sm:$0xff]
        %v423 = vld [vmem:[%s4 + $0x10] sm:$0xff]
        %v424 = vld [vmem:[%s4 + $0x18] sm:$0xff]
        %v425 = vld [vmem:[%s4 + $0x20] sm:$0xff]
        %v426 = vld [vmem:[%s4 + $0x28] sm:$0xff]
        %v427 = vld [vmem:[%s4 + $0x30] sm:$0xff]
        %v428 = vld [vmem:[%s4 + $0x38] sm:$0xff]
        %v429 = vld [vmem:[%s4 + $0x40] sm:$0xff]
        %v430 = vld [vmem:[%s4 + $0x48] sm:$0xff]
        %v431 = vld [vmem:[%s4 + $0x50] sm:$0xff]
        %v432 = vld [vmem:[%s4 + $0x58] sm:$0xff]
        %v433 = vld [vmem:[%s4 + $0x60] sm:$0xff]
        %v434 = vld [vmem:[%s4 + $0x68] sm:$0xff]
        %v435 = vld [vmem:[%s4 + $0x70] sm:$0xff]
        %v436 = vld [vmem:[%s4 + $0x78] sm:$0xff]
        %438 = vset.pattern.permute.xlu0 0
        %439 = vperm.xlu0 %438, %v421
        %v440 = vpop.permute.xlu0 %439
        %443 = vset.pattern.permute.xlu0 0
        %444 = vperm.xlu0 %443, %v422
        %v445 = vpop.permute.xlu0 %444
        %448 = vset.pattern.permute.xlu0 0
        %449 = vperm.xlu0 %448, %v423
        %v450 = vpop.permute.xlu0 %449
        %453 = vset.pattern.permute.xlu0 0
        %454 = vperm.xlu0 %453, %v424
        %v455 = vpop.permute.xlu0 %454
        %458 = vset.pattern.permute.xlu0 0
        %459 = vperm.xlu0 %458, %v425
        %v460 = vpop.permute.xlu0 %459
        %463 = vset.pattern.permute.xlu0 0
        %464 = vperm.xlu0 %463, %v426
        %v465 = vpop.permute.xlu0 %464
        %468 = vset.pattern.permute.xlu0 0
        %469 = vperm.xlu0 %468, %v427
        %v470 = vpop.permute.xlu0 %469
        %473 = vset.pattern.permute.xlu0 0
        %474 = vperm.xlu0 %473, %v428
        %v475 = vpop.permute.xlu0 %474
        %478 = vset.pattern.permute.xlu0 0
        %479 = vperm.xlu0 %478, %v429
        %v480 = vpop.permute.xlu0 %479
        %483 = vset.pattern.permute.xlu0 0
        %484 = vperm.xlu0 %483, %v430
        %v485 = vpop.permute.xlu0 %484
        %488 = vset.pattern.permute.xlu0 0
        %489 = vperm.xlu0 %488, %v431
        %v490 = vpop.permute.xlu0 %489
        %493 = vset.pattern.permute.xlu0 0
        %494 = vperm.xlu0 %493, %v432
        %v495 = vpop.permute.xlu0 %494
        %498 = vset.pattern.permute.xlu0 0
        %499 = vperm.xlu0 %498, %v433
        %v500 = vpop.permute.xlu0 %499
        %503 = vset.pattern.permute.xlu0 0
        %504 = vperm.xlu0 %503, %v434
        %v505 = vpop.permute.xlu0 %504
        %508 = vset.pattern.permute.xlu0 0
        %509 = vperm.xlu0 %508, %v435
        %v510 = vpop.permute.xlu0 %509
        %513 = vset.pattern.permute.xlu0 0
        %514 = vperm.xlu0 %513, %v436
        %v515 = vpop.permute.xlu0 %514
        %v517 = vld [vmem:[%s346] sm:$0xff]
        %v518 = vld [vmem:[%s346 + $0x8] sm:$0xff]
        %v519 = vld [vmem:[%s346 + $0x10] sm:$0xff]
        %v520 = vld [vmem:[%s346 + $0x18] sm:$0xff]
        %v521 = vld [vmem:[%s346 + $0x20] sm:$0xff]
        %v522 = vld [vmem:[%s346 + $0x28] sm:$0xff]
        %v523 = vld [vmem:[%s346 + $0x30] sm:$0xff]
        %v524 = vld [vmem:[%s346 + $0x38] sm:$0xff]
        %v525 = vld [vmem:[%s346 + $0x40] sm:$0xff]
        %v526 = vld [vmem:[%s346 + $0x48] sm:$0xff]
        %v527 = vld [vmem:[%s346 + $0x50] sm:$0xff]
        %v528 = vld [vmem:[%s346 + $0x58] sm:$0xff]
        %v529 = vld [vmem:[%s346 + $0x60] sm:$0xff]
        %v530 = vld [vmem:[%s346 + $0x68] sm:$0xff]
        %v531 = vld [vmem:[%s346 + $0x70] sm:$0xff]
        %v532 = vld [vmem:[%s346 + $0x78] sm:$0xff]
        %v533 = vld [vmem:[%s355] sm:$0x1]
        %v535 = vperm.slane %v533, 0
        %v537 = vmul.f32 %v517, %v535
        %v538 = vmul.f32 %v518, %v535
        %v539 = vmul.f32 %v519, %v535
        %v540 = vmul.f32 %v520, %v535
        %v541 = vmul.f32 %v521, %v535
        %v542 = vmul.f32 %v522, %v535
        %v543 = vmul.f32 %v523, %v535
        %v544 = vmul.f32 %v524, %v535
        %v545 = vmul.f32 %v525, %v535
        %v546 = vmul.f32 %v526, %v535
        %v547 = vmul.f32 %v527, %v535
        %v548 = vmul.f32 %v528, %v535
        %v549 = vmul.f32 %v529, %v535
        %v550 = vmul.f32 %v530, %v535
        %v551 = vmul.f32 %v531, %v535
        %v552 = vmul.f32 %v532, %v535
        %v553 = vpack.c.bf16 %v538, %v537
        %v554 = vpack.c.bf16 %v540, %v539
        %v555 = vpack.c.bf16 %v542, %v541
        %v556 = vpack.c.bf16 %v544, %v543
        %v557 = vpack.c.bf16 %v546, %v545
        %v558 = vpack.c.bf16 %v548, %v547
        %v559 = vpack.c.bf16 %v550, %v549
        %v560 = vpack.c.bf16 %v552, %v551
        %v577 = vunpack.c.l.b16 %v389
        %v578 = vunpack.c.l.b16 %v390
        %v579 = vunpack.c.l.b16 %v391
        %v580 = vunpack.c.l.b16 %v392
        %v581 = vunpack.c.l.b16 %v393
        %v582 = vunpack.c.l.b16 %v394
        %v583 = vunpack.c.l.b16 %v395
        %v584 = vunpack.c.l.b16 %v396
        %v585 = vunpack.c.l.b16 %v397
        %v586 = vunpack.c.l.b16 %v398
        %v587 = vunpack.c.l.b16 %v399
        %v588 = vunpack.c.l.b16 %v400
        %v589 = vunpack.c.l.b16 %v401
        %v590 = vunpack.c.l.b16 %v402
        %v591 = vunpack.c.l.b16 %v403
        %v592 = vunpack.c.l.b16 %v404
        %v593 = vpack.c.b16 %v578, %v577
        %v594 = vpack.c.b16 %v580, %v579
        %v595 = vpack.c.b16 %v582, %v581
        %v596 = vpack.c.b16 %v584, %v583
        %v597 = vpack.c.b16 %v586, %v585
        %v598 = vpack.c.b16 %v588, %v587
        %v599 = vpack.c.b16 %v590, %v589
        %v600 = vpack.c.b16 %v592, %v591
        %609 = vmatpush.bf16.msra.mxu0 %v560
        %610 = vmatpush.bf16.msra.mxu0 %v559
        %611 = vmatpush.bf16.msra.mxu0 %v558
        %612 = vmatpush.bf16.msra.mxu0 %v557
        %613 = vmatpush.bf16.msra.mxu0 %v556
        %614 = vmatpush.bf16.msra.mxu0 %v555
        %615 = vmatpush.bf16.msra.mxu0 %v554
        %616 = vmatpush.bf16.msra.mxu0 %v553
        %617 = vmatmul.bf16.gmra.mxu0 %v593
        %v618 = vpop.f32.mrf.mxu0
        %v619 = vadd.f32 %v440, %v618
        %v620 = vpop.f32.mrf.mxu0
        %v621 = vadd.f32 %v445, %v620
        %622 = vmatmul.bf16.gmra.mxu0 %v594
        %v623 = vpop.f32.mrf.mxu0
        %v624 = vadd.f32 %v450, %v623
        %v625 = vpop.f32.mrf.mxu0
        %v626 = vadd.f32 %v455, %v625
        %627 = vmatmul.bf16.gmra.mxu0 %v595
        %v628 = vpop.f32.mrf.mxu0
        %v629 = vadd.f32 %v460, %v628
        %v630 = vpop.f32.mrf.mxu0
        %v631 = vadd.f32 %v465, %v630
        %632 = vmatmul.bf16.gmra.mxu0 %v596
        %v633 = vpop.f32.mrf.mxu0
        %v634 = vadd.f32 %v470, %v633
        %v635 = vpop.f32.mrf.mxu0
        %v636 = vadd.f32 %v475, %v635
        %637 = vmatmul.bf16.gmra.mxu0 %v597
        %v638 = vpop.f32.mrf.mxu0
        %v639 = vadd.f32 %v480, %v638
        %v640 = vpop.f32.mrf.mxu0
        %v641 = vadd.f32 %v485, %v640
        %642 = vmatmul.bf16.gmra.mxu0 %v598
        %v643 = vpop.f32.mrf.mxu0
        %v644 = vadd.f32 %v490, %v643
        %v645 = vpop.f32.mrf.mxu0
        %v646 = vadd.f32 %v495, %v645
        %647 = vmatmul.bf16.gmra.mxu0 %v599
        %v648 = vpop.f32.mrf.mxu0
        %v649 = vadd.f32 %v500, %v648
        %v650 = vpop.f32.mrf.mxu0
        %v651 = vadd.f32 %v505, %v650
        %652 = vmatmul.bf16.gmra.mxu0 %v600
        %v653 = vpop.f32.mrf.mxu0
        %v654 = vadd.f32 %v510, %v653
        %v655 = vpop.f32.mrf.mxu0
        %v656 = vadd.f32 %v515, %v655
        %657 = vdwg.mxu0
        %658 = vst [vmem:[#allocation2] sm:$0xff] %v619
        %659 = vst [vmem:[#allocation2 + $0x8] sm:$0xff] %v621
        %660 = vst [vmem:[#allocation2 + $0x10] sm:$0xff] %v624
        %661 = vst [vmem:[#allocation2 + $0x18] sm:$0xff] %v626
        %662 = vst [vmem:[#allocation2 + $0x20] sm:$0xff] %v629
        %663 = vst [vmem:[#allocation2 + $0x28] sm:$0xff] %v631
        %664 = vst [vmem:[#allocation2 + $0x30] sm:$0xff] %v634
        %665 = vst [vmem:[#allocation2 + $0x38] sm:$0xff] %v636
        %666 = vst [vmem:[#allocation2 + $0x40] sm:$0xff] %v639
        %667 = vst [vmem:[#allocation2 + $0x48] sm:$0xff] %v641
        %668 = vst [vmem:[#allocation2 + $0x50] sm:$0xff] %v644
        %669 = vst [vmem:[#allocation2 + $0x58] sm:$0xff] %v646
        %670 = vst [vmem:[#allocation2 + $0x60] sm:$0xff] %v649
        %671 = vst [vmem:[#allocation2 + $0x68] sm:$0xff] %v651
        %672 = vst [vmem:[#allocation2 + $0x70] sm:$0xff] %v654
        %673 = vst [vmem:[#allocation2 + $0x78] sm:$0xff] %v656
        %s674 = scalar_lea.vmem %s346, 128 [#allocation4]
        %v675 = vld [vmem:[%s674] sm:$0xff]
        %v676 = vld [vmem:[%s674 + $0x8] sm:$0xff]
        %v677 = vld [vmem:[%s674 + $0x10] sm:$0xff]
        %v678 = vld [vmem:[%s674 + $0x18] sm:$0xff]
        %v679 = vld [vmem:[%s674 + $0x20] sm:$0xff]
        %v680 = vld [vmem:[%s674 + $0x28] sm:$0xff]
        %v681 = vld [vmem:[%s674 + $0x30] sm:$0xff]
        %v682 = vld [vmem:[%s674 + $0x38] sm:$0xff]
        %v683 = vld [vmem:[%s674 + $0x40] sm:$0xff]
        %v684 = vld [vmem:[%s674 + $0x48] sm:$0xff]
        %v685 = vld [vmem:[%s674 + $0x50] sm:$0xff]
        %v686 = vld [vmem:[%s674 + $0x58] sm:$0xff]
        %v687 = vld [vmem:[%s674 + $0x60] sm:$0xff]
        %v688 = vld [vmem:[%s674 + $0x68] sm:$0xff]
        %v689 = vld [vmem:[%s674 + $0x70] sm:$0xff]
        %v690 = vld [vmem:[%s674 + $0x78] sm:$0xff]
        %s691 = scalar_lea.vmem %s355, 1 [#allocation7]
        %v692 = vld [vmem:[%s691] sm:$0x1]
        %v694 = vperm.slane %v692, 0
        %v696 = vmul.f32 %v675, %v694
        %v697 = vmul.f32 %v676, %v694
        %v698 = vmul.f32 %v677, %v694
        %v699 = vmul.f32 %v678, %v694
        %v700 = vmul.f32 %v679, %v694
        %v701 = vmul.f32 %v680, %v694
        %v702 = vmul.f32 %v681, %v694
        %v703 = vmul.f32 %v682, %v694
        %v704 = vmul.f32 %v683, %v694
        %v705 = vmul.f32 %v684, %v694
        %v706 = vmul.f32 %v685, %v694
        %v707 = vmul.f32 %v686, %v694
        %v708 = vmul.f32 %v687, %v694
        %v709 = vmul.f32 %v688, %v694
        %v710 = vmul.f32 %v689, %v694
        %v711 = vmul.f32 %v690, %v694
        %v712 = vpack.c.bf16 %v697, %v696
        %v713 = vpack.c.bf16 %v699, %v698
        %v714 = vpack.c.bf16 %v701, %v700
        %v715 = vpack.c.bf16 %v703, %v702
        %v716 = vpack.c.bf16 %v705, %v704
        %v717 = vpack.c.bf16 %v707, %v706
        %v718 = vpack.c.bf16 %v709, %v708
        %v719 = vpack.c.bf16 %v711, %v710
        %720 = vmatpush.bf16.msra.mxu0 %v719
        %721 = vmatpush.bf16.msra.mxu0 %v718
        %722 = vmatpush.bf16.msra.mxu0 %v717
        %723 = vmatpush.bf16.msra.mxu0 %v716
        %724 = vmatpush.bf16.msra.mxu0 %v715
        %725 = vmatpush.bf16.msra.mxu0 %v714
        %726 = vmatpush.bf16.msra.mxu0 %v713
        %727 = vmatpush.bf16.msra.mxu0 %v712
        %728 = vmatmul.bf16.gmra.mxu0 %v593
        %v729 = vpop.f32.mrf.mxu0
        %v730 = vadd.f32 %v440, %v729
        %v731 = vpop.f32.mrf.mxu0
        %v732 = vadd.f32 %v445, %v731
        %733 = vmatmul.bf16.gmra.mxu0 %v594
        %v734 = vpop.f32.mrf.mxu0
        %v735 = vadd.f32 %v450, %v734
        %v736 = vpop.f32.mrf.mxu0
        %v737 = vadd.f32 %v455, %v736
        %738 = vmatmul.bf16.gmra.mxu0 %v595
        %v739 = vpop.f32.mrf.mxu0
        %v740 = vadd.f32 %v460, %v739
        %v741 = vpop.f32.mrf.mxu0
        %v742 = vadd.f32 %v465, %v741
        %743 = vmatmul.bf16.gmra.mxu0 %v596
        %v744 = vpop.f32.mrf.mxu0
        %v745 = vadd.f32 %v470, %v744
        %v746 = vpop.f32.mrf.mxu0
        %v747 = vadd.f32 %v475, %v746
        %748 = vmatmul.bf16.gmra.mxu0 %v597
        %v749 = vpop.f32.mrf.mxu0
        %v750 = vadd.f32 %v480, %v749
        %v751 = vpop.f32.mrf.mxu0
        %v752 = vadd.f32 %v485, %v751
        %753 = vmatmul.bf16.gmra.mxu0 %v598
        %v754 = vpop.f32.mrf.mxu0
        %v755 = vadd.f32 %v490, %v754
        %v756 = vpop.f32.mrf.mxu0
        %v757 = vadd.f32 %v495, %v756
        %758 = vmatmul.bf16.gmra.mxu0 %v599
        %v759 = vpop.f32.mrf.mxu0
        %v760 = vadd.f32 %v500, %v759
        %v761 = vpop.f32.mrf.mxu0
        %v762 = vadd.f32 %v505, %v761
        %763 = vmatmul.bf16.gmra.mxu0 %v600
        %v764 = vpop.f32.mrf.mxu0
        %v765 = vadd.f32 %v510, %v764
        %v766 = vpop.f32.mrf.mxu0
        %v767 = vadd.f32 %v515, %v766
        %768 = vdwg.mxu0
        %s769 = scalar_lea.vmem [#allocation2], 128
        %770 = vst [vmem:[%s769] sm:$0xff] %v730
        %771 = vst [vmem:[%s769 + $0x8] sm:$0xff] %v732
        %772 = vst [vmem:[%s769 + $0x10] sm:$0xff] %v735
        %773 = vst [vmem:[%s769 + $0x18] sm:$0xff] %v737
        %774 = vst [vmem:[%s769 + $0x20] sm:$0xff] %v740
        %775 = vst [vmem:[%s769 + $0x28] sm:$0xff] %v742
        %776 = vst [vmem:[%s769 + $0x30] sm:$0xff] %v745
        %777 = vst [vmem:[%s769 + $0x38] sm:$0xff] %v747
        %778 = vst [vmem:[%s769 + $0x40] sm:$0xff] %v750
        %779 = vst [vmem:[%s769 + $0x48] sm:$0xff] %v752
        %780 = vst [vmem:[%s769 + $0x50] sm:$0xff] %v755
        %781 = vst [vmem:[%s769 + $0x58] sm:$0xff] %v757
        %782 = vst [vmem:[%s769 + $0x60] sm:$0xff] %v760
        %783 = vst [vmem:[%s769 + $0x68] sm:$0xff] %v762
        %784 = vst [vmem:[%s769 + $0x70] sm:$0xff] %v765
        %785 = vst [vmem:[%s769 + $0x78] sm:$0xff] %v767
        %s786 = scalar_lea.vmem %s346, 256 [#allocation4]
        %v787 = vld [vmem:[%s786] sm:$0xff]
        %v788 = vld [vmem:[%s786 + $0x8] sm:$0xff]
        %v789 = vld [vmem:[%s786 + $0x10] sm:$0xff]
        %v790 = vld [vmem:[%s786 + $0x18] sm:$0xff]
        %v791 = vld [vmem:[%s786 + $0x20] sm:$0xff]
        %v792 = vld [vmem:[%s786 + $0x28] sm:$0xff]
        %v793 = vld [vmem:[%s786 + $0x30] sm:$0xff]
        %v794 = vld [vmem:[%s786 + $0x38] sm:$0xff]
        %v795 = vld [vmem:[%s786 + $0x40] sm:$0xff]
        %v796 = vld [vmem:[%s786 + $0x48] sm:$0xff]
        %v797 = vld [vmem:[%s786 + $0x50] sm:$0xff]
        %v798 = vld [vmem:[%s786 + $0x58] sm:$0xff]
        %v799 = vld [vmem:[%s786 + $0x60] sm:$0xff]
        %v800 = vld [vmem:[%s786 + $0x68] sm:$0xff]
        %v801 = vld [vmem:[%s786 + $0x70] sm:$0xff]
        %v802 = vld [vmem:[%s786 + $0x78] sm:$0xff]
        %s803 = scalar_lea.vmem %s355, 2 [#allocation7]
        %v804 = vld [vmem:[%s803] sm:$0x1]
        %v806 = vperm.slane %v804, 0
        %v808 = vmul.f32 %v787, %v806
        %v809 = vmul.f32 %v788, %v806
        %v810 = vmul.f32 %v789, %v806
        %v811 = vmul.f32 %v790, %v806
        %v812 = vmul.f32 %v791, %v806
        %v813 = vmul.f32 %v792, %v806
        %v814 = vmul.f32 %v793, %v806
        %v815 = vmul.f32 %v794, %v806
        %v816 = vmul.f32 %v795, %v806
        %v817 = vmul.f32 %v796, %v806
        %v818 = vmul.f32 %v797, %v806
        %v819 = vmul.f32 %v798, %v806
        %v820 = vmul.f32 %v799, %v806
        %v821 = vmul.f32 %v800, %v806
        %v822 = vmul.f32 %v801, %v806
        %v823 = vmul.f32 %v802, %v806
        %v824 = vpack.c.bf16 %v809, %v808
        %v825 = vpack.c.bf16 %v811, %v810
        %v826 = vpack.c.bf16 %v813, %v812
        %v827 = vpack.c.bf16 %v815, %v814
        %v828 = vpack.c.bf16 %v817, %v816
        %v829 = vpack.c.bf16 %v819, %v818
        %v830 = vpack.c.bf16 %v821, %v820
        %v831 = vpack.c.bf16 %v823, %v822
        %832 = vmatpush.bf16.msra.mxu0 %v831
        %833 = vmatpush.bf16.msra.mxu0 %v830
        %834 = vmatpush.bf16.msra.mxu0 %v829
        %835 = vmatpush.bf16.msra.mxu0 %v828
        %836 = vmatpush.bf16.msra.mxu0 %v827
        %837 = vmatpush.bf16.msra.mxu0 %v826
        %838 = vmatpush.bf16.msra.mxu0 %v825
        %839 = vmatpush.bf16.msra.mxu0 %v824
        %840 = vmatmul.bf16.gmra.mxu0 %v593
        %v841 = vpop.f32.mrf.mxu0
        %v842 = vadd.f32 %v440, %v841
        %v843 = vpop.f32.mrf.mxu0
        %v844 = vadd.f32 %v445, %v843
        %845 = vmatmul.bf16.gmra.mxu0 %v594
        %v846 = vpop.f32.mrf.mxu0
        %v847 = vadd.f32 %v450, %v846
        %v848 = vpop.f32.mrf.mxu0
        %v849 = vadd.f32 %v455, %v848
        %850 = vmatmul.bf16.gmra.mxu0 %v595
        %v851 = vpop.f32.mrf.mxu0
        %v852 = vadd.f32 %v460, %v851
        %v853 = vpop.f32.mrf.mxu0
        %v854 = vadd.f32 %v465, %v853
        %855 = vmatmul.bf16.gmra.mxu0 %v596
        %v856 = vpop.f32.mrf.mxu0
        %v857 = vadd.f32 %v470, %v856
        %v858 = vpop.f32.mrf.mxu0
        %v859 = vadd.f32 %v475, %v858
        %860 = vmatmul.bf16.gmra.mxu0 %v597
        %v861 = vpop.f32.mrf.mxu0
        %v862 = vadd.f32 %v480, %v861
        %v863 = vpop.f32.mrf.mxu0
        %v864 = vadd.f32 %v485, %v863
        %865 = vmatmul.bf16.gmra.mxu0 %v598
        %v866 = vpop.f32.mrf.mxu0
        %v867 = vadd.f32 %v490, %v866
        %v868 = vpop.f32.mrf.mxu0
        %v869 = vadd.f32 %v495, %v868
        %870 = vmatmul.bf16.gmra.mxu0 %v599
        %v871 = vpop.f32.mrf.mxu0
        %v872 = vadd.f32 %v500, %v871
        %v873 = vpop.f32.mrf.mxu0
        %v874 = vadd.f32 %v505, %v873
        %875 = vmatmul.bf16.gmra.mxu0 %v600
        %v876 = vpop.f32.mrf.mxu0
        %v877 = vadd.f32 %v510, %v876
        %v878 = vpop.f32.mrf.mxu0
        %v879 = vadd.f32 %v515, %v878
        %880 = vdwg.mxu0
        %s881 = scalar_lea.vmem [#allocation2], 256
        %882 = vst [vmem:[%s881] sm:$0xff] %v842
        %883 = vst [vmem:[%s881 + $0x8] sm:$0xff] %v844
        %884 = vst [vmem:[%s881 + $0x10] sm:$0xff] %v847
        %885 = vst [vmem:[%s881 + $0x18] sm:$0xff] %v849
        %886 = vst [vmem:[%s881 + $0x20] sm:$0xff] %v852
        %887 = vst [vmem:[%s881 + $0x28] sm:$0xff] %v854
        %888 = vst [vmem:[%s881 + $0x30] sm:$0xff] %v857
        %889 = vst [vmem:[%s881 + $0x38] sm:$0xff] %v859
        %890 = vst [vmem:[%s881 + $0x40] sm:$0xff] %v862
        %891 = vst [vmem:[%s881 + $0x48] sm:$0xff] %v864
        %892 = vst [vmem:[%s881 + $0x50] sm:$0xff] %v867
        %893 = vst [vmem:[%s881 + $0x58] sm:$0xff] %v869
        %894 = vst [vmem:[%s881 + $0x60] sm:$0xff] %v872
        %895 = vst [vmem:[%s881 + $0x68] sm:$0xff] %v874
        %896 = vst [vmem:[%s881 + $0x70] sm:$0xff] %v877
        %897 = vst [vmem:[%s881 + $0x78] sm:$0xff] %v879
        %s898 = scalar_lea.vmem %s346, 384 [#allocation4]
        %v899 = vld [vmem:[%s898] sm:$0xff]
        %v900 = vld [vmem:[%s898 + $0x8] sm:$0xff]
        %v901 = vld [vmem:[%s898 + $0x10] sm:$0xff]
        %v902 = vld [vmem:[%s898 + $0x18] sm:$0xff]
        %v903 = vld [vmem:[%s898 + $0x20] sm:$0xff]
        %v904 = vld [vmem:[%s898 + $0x28] sm:$0xff]
        %v905 = vld [vmem:[%s898 + $0x30] sm:$0xff]
        %v906 = vld [vmem:[%s898 + $0x38] sm:$0xff]
        %v907 = vld [vmem:[%s898 + $0x40] sm:$0xff]
        %v908 = vld [vmem:[%s898 + $0x48] sm:$0xff]
        %v909 = vld [vmem:[%s898 + $0x50] sm:$0xff]
        %v910 = vld [vmem:[%s898 + $0x58] sm:$0xff]
        %v911 = vld [vmem:[%s898 + $0x60] sm:$0xff]
        %v912 = vld [vmem:[%s898 + $0x68] sm:$0xff]
        %v913 = vld [vmem:[%s898 + $0x70] sm:$0xff]
        %v914 = vld [vmem:[%s898 + $0x78] sm:$0xff]
        %s915 = scalar_lea.vmem %s355, 3 [#allocation7]
        %v916 = vld [vmem:[%s915] sm:$0x1]
        %v918 = vperm.slane %v916, 0
        %v920 = vmul.f32 %v899, %v918
        %v921 = vmul.f32 %v900, %v918
        %v922 = vmul.f32 %v901, %v918
        %v923 = vmul.f32 %v902, %v918
        %v924 = vmul.f32 %v903, %v918
        %v925 = vmul.f32 %v904, %v918
        %v926 = vmul.f32 %v905, %v918
        %v927 = vmul.f32 %v906, %v918
        %v928 = vmul.f32 %v907, %v918
        %v929 = vmul.f32 %v908, %v918
        %v930 = vmul.f32 %v909, %v918
        %v931 = vmul.f32 %v910, %v918
        %v932 = vmul.f32 %v911, %v918
        %v933 = vmul.f32 %v912, %v918
        %v934 = vmul.f32 %v913, %v918
        %v935 = vmul.f32 %v914, %v918
        %v936 = vpack.c.bf16 %v921, %v920
        %v937 = vpack.c.bf16 %v923, %v922
        %v938 = vpack.c.bf16 %v925, %v924
        %v939 = vpack.c.bf16 %v927, %v926
        %v940 = vpack.c.bf16 %v929, %v928
        %v941 = vpack.c.bf16 %v931, %v930
        %v942 = vpack.c.bf16 %v933, %v932
        %v943 = vpack.c.bf16 %v935, %v934
        %944 = vmatpush.bf16.msra.mxu0 %v943
        %945 = vmatpush.bf16.msra.mxu0 %v942
        %946 = vmatpush.bf16.msra.mxu0 %v941
        %947 = vmatpush.bf16.msra.mxu0 %v940
        %948 = vmatpush.bf16.msra.mxu0 %v939
        %949 = vmatpush.bf16.msra.mxu0 %v938
        %950 = vmatpush.bf16.msra.mxu0 %v937
        %951 = vmatpush.bf16.msra.mxu0 %v936
        %952 = vmatmul.bf16.gmra.mxu0 %v593
        %v953 = vpop.f32.mrf.mxu0
        %v954 = vadd.f32 %v440, %v953
        %v955 = vpop.f32.mrf.mxu0
        %v956 = vadd.f32 %v445, %v955
        %957 = vmatmul.bf16.gmra.mxu0 %v594
        %v958 = vpop.f32.mrf.mxu0
        %v959 = vadd.f32 %v450, %v958
        %v960 = vpop.f32.mrf.mxu0
        %v961 = vadd.f32 %v455, %v960
        %962 = vmatmul.bf16.gmra.mxu0 %v595
        %v963 = vpop.f32.mrf.mxu0
        %v964 = vadd.f32 %v460, %v963
        %v965 = vpop.f32.mrf.mxu0
        %v966 = vadd.f32 %v465, %v965
        %967 = vmatmul.bf16.gmra.mxu0 %v596
        %v968 = vpop.f32.mrf.mxu0
        %v969 = vadd.f32 %v470, %v968
        %v970 = vpop.f32.mrf.mxu0
        %v971 = vadd.f32 %v475, %v970
        %972 = vmatmul.bf16.gmra.mxu0 %v597
        %v973 = vpop.f32.mrf.mxu0
        %v974 = vadd.f32 %v480, %v973
        %v975 = vpop.f32.mrf.mxu0
        %v976 = vadd.f32 %v485, %v975
        %977 = vmatmul.bf16.gmra.mxu0 %v598
        %v978 = vpop.f32.mrf.mxu0
        %v979 = vadd.f32 %v490, %v978
        %v980 = vpop.f32.mrf.mxu0
        %v981 = vadd.f32 %v495, %v980
        %982 = vmatmul.bf16.gmra.mxu0 %v599
        %v983 = vpop.f32.mrf.mxu0
        %v984 = vadd.f32 %v500, %v983
        %v985 = vpop.f32.mrf.mxu0
        %v986 = vadd.f32 %v505, %v985
        %987 = vmatmul.bf16.gmra.mxu0 %v600
        %v988 = vpop.f32.mrf.mxu0
        %v989 = vadd.f32 %v510, %v988
        %v990 = vpop.f32.mrf.mxu0
        %v991 = vadd.f32 %v515, %v990
        %992 = vdwg.mxu0
        %s993 = scalar_lea.vmem [#allocation2], 384
        %994 = vst [vmem:[%s993] sm:$0xff] %v954
        %995 = vst [vmem:[%s993 + $0x8] sm:$0xff] %v956
        %996 = vst [vmem:[%s993 + $0x10] sm:$0xff] %v959
        %997 = vst [vmem:[%s993 + $0x18] sm:$0xff] %v961
        %998 = vst [vmem:[%s993 + $0x20] sm:$0xff] %v964
        %999 = vst [vmem:[%s993 + $0x28] sm:$0xff] %v966
        %1000 = vst [vmem:[%s993 + $0x30] sm:$0xff] %v969
        %1001 = vst [vmem:[%s993 + $0x38] sm:$0xff] %v971
        %1002 = vst [vmem:[%s993 + $0x40] sm:$0xff] %v974
        %1003 = vst [vmem:[%s993 + $0x48] sm:$0xff] %v976
        %1004 = vst [vmem:[%s993 + $0x50] sm:$0xff] %v979
        %1005 = vst [vmem:[%s993 + $0x58] sm:$0xff] %v981
        %1006 = vst [vmem:[%s993 + $0x60] sm:$0xff] %v984
        %1007 = vst [vmem:[%s993 + $0x68] sm:$0xff] %v986
        %1008 = vst [vmem:[%s993 + $0x70] sm:$0xff] %v989
        %1009 = vst [vmem:[%s993 + $0x78] sm:$0xff] %v991
        %s1010 = scalar_lea.vmem %s346, 512 [#allocation4]
        %v1011 = vld [vmem:[%s1010] sm:$0xff]
        %v1012 = vld [vmem:[%s1010 + $0x8] sm:$0xff]
        %v1013 = vld [vmem:[%s1010 + $0x10] sm:$0xff]
        %v1014 = vld [vmem:[%s1010 + $0x18] sm:$0xff]
        %v1015 = vld [vmem:[%s1010 + $0x20] sm:$0xff]
        %v1016 = vld [vmem:[%s1010 + $0x28] sm:$0xff]
        %v1017 = vld [vmem:[%s1010 + $0x30] sm:$0xff]
        %v1018 = vld [vmem:[%s1010 + $0x38] sm:$0xff]
        %v1019 = vld [vmem:[%s1010 + $0x40] sm:$0xff]
        %v1020 = vld [vmem:[%s1010 + $0x48] sm:$0xff]
        %v1021 = vld [vmem:[%s1010 + $0x50] sm:$0xff]
        %v1022 = vld [vmem:[%s1010 + $0x58] sm:$0xff]
        %v1023 = vld [vmem:[%s1010 + $0x60] sm:$0xff]
        %v1024 = vld [vmem:[%s1010 + $0x68] sm:$0xff]
        %v1025 = vld [vmem:[%s1010 + $0x70] sm:$0xff]
        %v1026 = vld [vmem:[%s1010 + $0x78] sm:$0xff]
        %s1027 = scalar_lea.vmem %s355, 4 [#allocation7]
        %v1028 = vld [vmem:[%s1027] sm:$0x1]
        %v1030 = vperm.slane %v1028, 0
        %v1032 = vmul.f32 %v1011, %v1030
        %v1033 = vmul.f32 %v1012, %v1030
        %v1034 = vmul.f32 %v1013, %v1030
        %v1035 = vmul.f32 %v1014, %v1030
        %v1036 = vmul.f32 %v1015, %v1030
        %v1037 = vmul.f32 %v1016, %v1030
        %v1038 = vmul.f32 %v1017, %v1030
        %v1039 = vmul.f32 %v1018, %v1030
        %v1040 = vmul.f32 %v1019, %v1030
        %v1041 = vmul.f32 %v1020, %v1030
        %v1042 = vmul.f32 %v1021, %v1030
        %v1043 = vmul.f32 %v1022, %v1030
        %v1044 = vmul.f32 %v1023, %v1030
        %v1045 = vmul.f32 %v1024, %v1030
        %v1046 = vmul.f32 %v1025, %v1030
        %v1047 = vmul.f32 %v1026, %v1030
        %v1048 = vpack.c.bf16 %v1033, %v1032
        %v1049 = vpack.c.bf16 %v1035, %v1034
        %v1050 = vpack.c.bf16 %v1037, %v1036
        %v1051 = vpack.c.bf16 %v1039, %v1038
        %v1052 = vpack.c.bf16 %v1041, %v1040
        %v1053 = vpack.c.bf16 %v1043, %v1042
        %v1054 = vpack.c.bf16 %v1045, %v1044
        %v1055 = vpack.c.bf16 %v1047, %v1046
        %1056 = vmatpush.bf16.msra.mxu0 %v1055
        %1057 = vmatpush.bf16.msra.mxu0 %v1054
        %1058 = vmatpush.bf16.msra.mxu0 %v1053
        %1059 = vmatpush.bf16.msra.mxu0 %v1052
        %1060 = vmatpush.bf16.msra.mxu0 %v1051
        %1061 = vmatpush.bf16.msra.mxu0 %v1050
        %1062 = vmatpush.bf16.msra.mxu0 %v1049
        %1063 = vmatpush.bf16.msra.mxu0 %v1048
        %1064 = vmatmul.bf16.gmra.mxu0 %v593
        %v1065 = vpop.f32.mrf.mxu0
        %v1066 = vadd.f32 %v440, %v1065
        %v1067 = vpop.f32.mrf.mxu0
        %v1068 = vadd.f32 %v445, %v1067
        %1069 = vmatmul.bf16.gmra.mxu0 %v594
        %v1070 = vpop.f32.mrf.mxu0
        %v1071 = vadd.f32 %v450, %v1070
        %v1072 = vpop.f32.mrf.mxu0
        %v1073 = vadd.f32 %v455, %v1072
        %1074 = vmatmul.bf16.gmra.mxu0 %v595
        %v1075 = vpop.f32.mrf.mxu0
        %v1076 = vadd.f32 %v460, %v1075
        %v1077 = vpop.f32.mrf.mxu0
        %v1078 = vadd.f32 %v465, %v1077
        %1079 = vmatmul.bf16.gmra.mxu0 %v596
        %v1080 = vpop.f32.mrf.mxu0
        %v1081 = vadd.f32 %v470, %v1080
        %v1082 = vpop.f32.mrf.mxu0
        %v1083 = vadd.f32 %v475, %v1082
        %1084 = vmatmul.bf16.gmra.mxu0 %v597
        %v1085 = vpop.f32.mrf.mxu0
        %v1086 = vadd.f32 %v480, %v1085
        %v1087 = vpop.f32.mrf.mxu0
        %v1088 = vadd.f32 %v485, %v1087
        %1089 = vmatmul.bf16.gmra.mxu0 %v598
        %v1090 = vpop.f32.mrf.mxu0
        %v1091 = vadd.f32 %v490, %v1090
        %v1092 = vpop.f32.mrf.mxu0
        %v1093 = vadd.f32 %v495, %v1092
        %1094 = vmatmul.bf16.gmra.mxu0 %v599
        %v1095 = vpop.f32.mrf.mxu0
        %v1096 = vadd.f32 %v500, %v1095
        %v1097 = vpop.f32.mrf.mxu0
        %v1098 = vadd.f32 %v505, %v1097
        %1099 = vmatmul.bf16.gmra.mxu0 %v600
        %v1100 = vpop.f32.mrf.mxu0
        %v1101 = vadd.f32 %v510, %v1100
        %v1102 = vpop.f32.mrf.mxu0
        %v1103 = vadd.f32 %v515, %v1102
        %1104 = vdwg.mxu0
        %s1105 = scalar_lea.vmem [#allocation2], 512
        %1106 = vst [vmem:[%s1105] sm:$0xff] %v1066
        %1107 = vst [vmem:[%s1105 + $0x8] sm:$0xff] %v1068
        %1108 = vst [vmem:[%s1105 + $0x10] sm:$0xff] %v1071
        %1109 = vst [vmem:[%s1105 + $0x18] sm:$0xff] %v1073
        %1110 = vst [vmem:[%s1105 + $0x20] sm:$0xff] %v1076
        %1111 = vst [vmem:[%s1105 + $0x28] sm:$0xff] %v1078
        %1112 = vst [vmem:[%s1105 + $0x30] sm:$0xff] %v1081
        %1113 = vst [vmem:[%s1105 + $0x38] sm:$0xff] %v1083
        %1114 = vst [vmem:[%s1105 + $0x40] sm:$0xff] %v1086
        %1115 = vst [vmem:[%s1105 + $0x48] sm:$0xff] %v1088
        %1116 = vst [vmem:[%s1105 + $0x50] sm:$0xff] %v1091
        %1117 = vst [vmem:[%s1105 + $0x58] sm:$0xff] %v1093
        %1118 = vst [vmem:[%s1105 + $0x60] sm:$0xff] %v1096
        %1119 = vst [vmem:[%s1105 + $0x68] sm:$0xff] %v1098
        %1120 = vst [vmem:[%s1105 + $0x70] sm:$0xff] %v1101
        %1121 = vst [vmem:[%s1105 + $0x78] sm:$0xff] %v1103
        %s1122 = scalar_lea.vmem %s346, 640 [#allocation4]
        %v1123 = vld [vmem:[%s1122] sm:$0xff]
        %v1124 = vld [vmem:[%s1122 + $0x8] sm:$0xff]
        %v1125 = vld [vmem:[%s1122 + $0x10] sm:$0xff]
        %v1126 = vld [vmem:[%s1122 + $0x18] sm:$0xff]
        %v1127 = vld [vmem:[%s1122 + $0x20] sm:$0xff]
        %v1128 = vld [vmem:[%s1122 + $0x28] sm:$0xff]
        %v1129 = vld [vmem:[%s1122 + $0x30] sm:$0xff]
        %v1130 = vld [vmem:[%s1122 + $0x38] sm:$0xff]
        %v1131 = vld [vmem:[%s1122 + $0x40] sm:$0xff]
        %v1132 = vld [vmem:[%s1122 + $0x48] sm:$0xff]
        %v1133 = vld [vmem:[%s1122 + $0x50] sm:$0xff]
        %v1134 = vld [vmem:[%s1122 + $0x58] sm:$0xff]
        %v1135 = vld [vmem:[%s1122 + $0x60] sm:$0xff]
        %v1136 = vld [vmem:[%s1122 + $0x68] sm:$0xff]
        %v1137 = vld [vmem:[%s1122 + $0x70] sm:$0xff]
        %v1138 = vld [vmem:[%s1122 + $0x78] sm:$0xff]
        %s1139 = scalar_lea.vmem %s355, 5 [#allocation7]
        %v1140 = vld [vmem:[%s1139] sm:$0x1]
        %v1142 = vperm.slane %v1140, 0
        %v1144 = vmul.f32 %v1123, %v1142
        %v1145 = vmul.f32 %v1124, %v1142
        %v1146 = vmul.f32 %v1125, %v1142
        %v1147 = vmul.f32 %v1126, %v1142
        %v1148 = vmul.f32 %v1127, %v1142
        %v1149 = vmul.f32 %v1128, %v1142
        %v1150 = vmul.f32 %v1129, %v1142
        %v1151 = vmul.f32 %v1130, %v1142
        %v1152 = vmul.f32 %v1131, %v1142
        %v1153 = vmul.f32 %v1132, %v1142
        %v1154 = vmul.f32 %v1133, %v1142
        %v1155 = vmul.f32 %v1134, %v1142
        %v1156 = vmul.f32 %v1135, %v1142
        %v1157 = vmul.f32 %v1136, %v1142
        %v1158 = vmul.f32 %v1137, %v1142
        %v1159 = vmul.f32 %v1138, %v1142
        %v1160 = vpack.c.bf16 %v1145, %v1144
        %v1161 = vpack.c.bf16 %v1147, %v1146
        %v1162 = vpack.c.bf16 %v1149, %v1148
        %v1163 = vpack.c.bf16 %v1151, %v1150
        %v1164 = vpack.c.bf16 %v1153, %v1152
        %v1165 = vpack.c.bf16 %v1155, %v1154
        %v1166 = vpack.c.bf16 %v1157, %v1156
        %v1167 = vpack.c.bf16 %v1159, %v1158
        %1168 = vmatpush.bf16.msra.mxu0 %v1167
        %1169 = vmatpush.bf16.msra.mxu0 %v1166
        %1170 = vmatpush.bf16.msra.mxu0 %v1165
        %1171 = vmatpush.bf16.msra.mxu0 %v1164
        %1172 = vmatpush.bf16.msra.mxu0 %v1163
        %1173 = vmatpush.bf16.msra.mxu0 %v1162
        %1174 = vmatpush.bf16.msra.mxu0 %v1161
        %1175 = vmatpush.bf16.msra.mxu0 %v1160
        %1176 = vmatmul.bf16.gmra.mxu0 %v593
        %v1177 = vpop.f32.mrf.mxu0
        %v1178 = vadd.f32 %v440, %v1177
        %v1179 = vpop.f32.mrf.mxu0
        %v1180 = vadd.f32 %v445, %v1179
        %1181 = vmatmul.bf16.gmra.mxu0 %v594
        %v1182 = vpop.f32.mrf.mxu0
        %v1183 = vadd.f32 %v450, %v1182
        %v1184 = vpop.f32.mrf.mxu0
        %v1185 = vadd.f32 %v455, %v1184
        %1186 = vmatmul.bf16.gmra.mxu0 %v595
        %v1187 = vpop.f32.mrf.mxu0
        %v1188 = vadd.f32 %v460, %v1187
        %v1189 = vpop.f32.mrf.mxu0
        %v1190 = vadd.f32 %v465, %v1189
        %1191 = vmatmul.bf16.gmra.mxu0 %v596
        %v1192 = vpop.f32.mrf.mxu0
        %v1193 = vadd.f32 %v470, %v1192
        %v1194 = vpop.f32.mrf.mxu0
        %v1195 = vadd.f32 %v475, %v1194
        %1196 = vmatmul.bf16.gmra.mxu0 %v597
        %v1197 = vpop.f32.mrf.mxu0
        %v1198 = vadd.f32 %v480, %v1197
        %v1199 = vpop.f32.mrf.mxu0
        %v1200 = vadd.f32 %v485, %v1199
        %1201 = vmatmul.bf16.gmra.mxu0 %v598
        %v1202 = vpop.f32.mrf.mxu0
        %v1203 = vadd.f32 %v490, %v1202
        %v1204 = vpop.f32.mrf.mxu0
        %v1205 = vadd.f32 %v495, %v1204
        %1206 = vmatmul.bf16.gmra.mxu0 %v599
        %v1207 = vpop.f32.mrf.mxu0
        %v1208 = vadd.f32 %v500, %v1207
        %v1209 = vpop.f32.mrf.mxu0
        %v1210 = vadd.f32 %v505, %v1209
        %1211 = vmatmul.bf16.gmra.mxu0 %v600
        %v1212 = vpop.f32.mrf.mxu0
        %v1213 = vadd.f32 %v510, %v1212
        %v1214 = vpop.f32.mrf.mxu0
        %v1215 = vadd.f32 %v515, %v1214
        %1216 = vdwg.mxu0
        %s1217 = scalar_lea.vmem [#allocation2], 640
        %1218 = vst [vmem:[%s1217] sm:$0xff] %v1178
        %1219 = vst [vmem:[%s1217 + $0x8] sm:$0xff] %v1180
        %1220 = vst [vmem:[%s1217 + $0x10] sm:$0xff] %v1183
        %1221 = vst [vmem:[%s1217 + $0x18] sm:$0xff] %v1185
        %1222 = vst [vmem:[%s1217 + $0x20] sm:$0xff] %v1188
        %1223 = vst [vmem:[%s1217 + $0x28] sm:$0xff] %v1190
        %1224 = vst [vmem:[%s1217 + $0x30] sm:$0xff] %v1193
        %1225 = vst [vmem:[%s1217 + $0x38] sm:$0xff] %v1195
        %1226 = vst [vmem:[%s1217 + $0x40] sm:$0xff] %v1198
        %1227 = vst [vmem:[%s1217 + $0x48] sm:$0xff] %v1200
        %1228 = vst [vmem:[%s1217 + $0x50] sm:$0xff] %v1203
        %1229 = vst [vmem:[%s1217 + $0x58] sm:$0xff] %v1205
        %1230 = vst [vmem:[%s1217 + $0x60] sm:$0xff] %v1208
        %1231 = vst [vmem:[%s1217 + $0x68] sm:$0xff] %v1210
        %1232 = vst [vmem:[%s1217 + $0x70] sm:$0xff] %v1213
        %1233 = vst [vmem:[%s1217 + $0x78] sm:$0xff] %v1215
        %s1234 = scalar_lea.vmem %s346, 768 [#allocation4]
        %v1235 = vld [vmem:[%s1234] sm:$0xff]
        %v1236 = vld [vmem:[%s1234 + $0x8] sm:$0xff]
        %v1237 = vld [vmem:[%s1234 + $0x10] sm:$0xff]
        %v1238 = vld [vmem:[%s1234 + $0x18] sm:$0xff]
        %v1239 = vld [vmem:[%s1234 + $0x20] sm:$0xff]
        %v1240 = vld [vmem:[%s1234 + $0x28] sm:$0xff]
        %v1241 = vld [vmem:[%s1234 + $0x30] sm:$0xff]
        %v1242 = vld [vmem:[%s1234 + $0x38] sm:$0xff]
        %v1243 = vld [vmem:[%s1234 + $0x40] sm:$0xff]
        %v1244 = vld [vmem:[%s1234 + $0x48] sm:$0xff]
        %v1245 = vld [vmem:[%s1234 + $0x50] sm:$0xff]
        %v1246 = vld [vmem:[%s1234 + $0x58] sm:$0xff]
        %v1247 = vld [vmem:[%s1234 + $0x60] sm:$0xff]
        %v1248 = vld [vmem:[%s1234 + $0x68] sm:$0xff]
        %v1249 = vld [vmem:[%s1234 + $0x70] sm:$0xff]
        %v1250 = vld [vmem:[%s1234 + $0x78] sm:$0xff]
        %s1251 = scalar_lea.vmem %s355, 6 [#allocation7]
        %v1252 = vld [vmem:[%s1251] sm:$0x1]
        %v1254 = vperm.slane %v1252, 0
        %v1256 = vmul.f32 %v1235, %v1254
        %v1257 = vmul.f32 %v1236, %v1254
        %v1258 = vmul.f32 %v1237, %v1254
        %v1259 = vmul.f32 %v1238, %v1254
        %v1260 = vmul.f32 %v1239, %v1254
        %v1261 = vmul.f32 %v1240, %v1254
        %v1262 = vmul.f32 %v1241, %v1254
        %v1263 = vmul.f32 %v1242, %v1254
        %v1264 = vmul.f32 %v1243, %v1254
        %v1265 = vmul.f32 %v1244, %v1254
        %v1266 = vmul.f32 %v1245, %v1254
        %v1267 = vmul.f32 %v1246, %v1254
        %v1268 = vmul.f32 %v1247, %v1254
        %v1269 = vmul.f32 %v1248, %v1254
        %v1270 = vmul.f32 %v1249, %v1254
        %v1271 = vmul.f32 %v1250, %v1254
        %v1272 = vpack.c.bf16 %v1257, %v1256
        %v1273 = vpack.c.bf16 %v1259, %v1258
        %v1274 = vpack.c.bf16 %v1261, %v1260
        %v1275 = vpack.c.bf16 %v1263, %v1262
        %v1276 = vpack.c.bf16 %v1265, %v1264
        %v1277 = vpack.c.bf16 %v1267, %v1266
        %v1278 = vpack.c.bf16 %v1269, %v1268
        %v1279 = vpack.c.bf16 %v1271, %v1270
        %1280 = vmatpush.bf16.msra.mxu0 %v1279
        %1281 = vmatpush.bf16.msra.mxu0 %v1278
        %1282 = vmatpush.bf16.msra.mxu0 %v1277
        %1283 = vmatpush.bf16.msra.mxu0 %v1276
        %1284 = vmatpush.bf16.msra.mxu0 %v1275
        %1285 = vmatpush.bf16.msra.mxu0 %v1274
        %1286 = vmatpush.bf16.msra.mxu0 %v1273
        %1287 = vmatpush.bf16.msra.mxu0 %v1272
        %1288 = vmatmul.bf16.gmra.mxu0 %v593
        %v1289 = vpop.f32.mrf.mxu0
        %v1290 = vadd.f32 %v440, %v1289
        %v1291 = vpop.f32.mrf.mxu0
        %v1292 = vadd.f32 %v445, %v1291
        %1293 = vmatmul.bf16.gmra.mxu0 %v594
        %v1294 = vpop.f32.mrf.mxu0
        %v1295 = vadd.f32 %v450, %v1294
        %v1296 = vpop.f32.mrf.mxu0
        %v1297 = vadd.f32 %v455, %v1296
        %1298 = vmatmul.bf16.gmra.mxu0 %v595
        %v1299 = vpop.f32.mrf.mxu0
        %v1300 = vadd.f32 %v460, %v1299
        %v1301 = vpop.f32.mrf.mxu0
        %v1302 = vadd.f32 %v465, %v1301
        %1303 = vmatmul.bf16.gmra.mxu0 %v596
        %v1304 = vpop.f32.mrf.mxu0
        %v1305 = vadd.f32 %v470, %v1304
        %v1306 = vpop.f32.mrf.mxu0
        %v1307 = vadd.f32 %v475, %v1306
        %1308 = vmatmul.bf16.gmra.mxu0 %v597
        %v1309 = vpop.f32.mrf.mxu0
        %v1310 = vadd.f32 %v480, %v1309
        %v1311 = vpop.f32.mrf.mxu0
        %v1312 = vadd.f32 %v485, %v1311
        %1313 = vmatmul.bf16.gmra.mxu0 %v598
        %v1314 = vpop.f32.mrf.mxu0
        %v1315 = vadd.f32 %v490, %v1314
        %v1316 = vpop.f32.mrf.mxu0
        %v1317 = vadd.f32 %v495, %v1316
        %1318 = vmatmul.bf16.gmra.mxu0 %v599
        %v1319 = vpop.f32.mrf.mxu0
        %v1320 = vadd.f32 %v500, %v1319
        %v1321 = vpop.f32.mrf.mxu0
        %v1322 = vadd.f32 %v505, %v1321
        %1323 = vmatmul.bf16.gmra.mxu0 %v600
        %v1324 = vpop.f32.mrf.mxu0
        %v1325 = vadd.f32 %v510, %v1324
        %v1326 = vpop.f32.mrf.mxu0
        %v1327 = vadd.f32 %v515, %v1326
        %1328 = vdwg.mxu0
        %s1329 = scalar_lea.vmem [#allocation2], 768
        %1330 = vst [vmem:[%s1329] sm:$0xff] %v1290
        %1331 = vst [vmem:[%s1329 + $0x8] sm:$0xff] %v1292
        %1332 = vst [vmem:[%s1329 + $0x10] sm:$0xff] %v1295
        %1333 = vst [vmem:[%s1329 + $0x18] sm:$0xff] %v1297
        %1334 = vst [vmem:[%s1329 + $0x20] sm:$0xff] %v1300
        %1335 = vst [vmem:[%s1329 + $0x28] sm:$0xff] %v1302
        %1336 = vst [vmem:[%s1329 + $0x30] sm:$0xff] %v1305
        %1337 = vst [vmem:[%s1329 + $0x38] sm:$0xff] %v1307
        %1338 = vst [vmem:[%s1329 + $0x40] sm:$0xff] %v1310
        %1339 = vst [vmem:[%s1329 + $0x48] sm:$0xff] %v1312
        %1340 = vst [vmem:[%s1329 + $0x50] sm:$0xff] %v1315
        %1341 = vst [vmem:[%s1329 + $0x58] sm:$0xff] %v1317
        %1342 = vst [vmem:[%s1329 + $0x60] sm:$0xff] %v1320
        %1343 = vst [vmem:[%s1329 + $0x68] sm:$0xff] %v1322
        %1344 = vst [vmem:[%s1329 + $0x70] sm:$0xff] %v1325
        %1345 = vst [vmem:[%s1329 + $0x78] sm:$0xff] %v1327
        %s1346 = scalar_lea.vmem %s346, 896 [#allocation4]
        %v1347 = vld [vmem:[%s1346] sm:$0xff]
        %v1348 = vld [vmem:[%s1346 + $0x8] sm:$0xff]
        %v1349 = vld [vmem:[%s1346 + $0x10] sm:$0xff]
        %v1350 = vld [vmem:[%s1346 + $0x18] sm:$0xff]
        %v1351 = vld [vmem:[%s1346 + $0x20] sm:$0xff]
        %v1352 = vld [vmem:[%s1346 + $0x28] sm:$0xff]
        %v1353 = vld [vmem:[%s1346 + $0x30] sm:$0xff]
        %v1354 = vld [vmem:[%s1346 + $0x38] sm:$0xff]
        %v1355 = vld [vmem:[%s1346 + $0x40] sm:$0xff]
        %v1356 = vld [vmem:[%s1346 + $0x48] sm:$0xff]
        %v1357 = vld [vmem:[%s1346 + $0x50] sm:$0xff]
        %v1358 = vld [vmem:[%s1346 + $0x58] sm:$0xff]
        %v1359 = vld [vmem:[%s1346 + $0x60] sm:$0xff]
        %v1360 = vld [vmem:[%s1346 + $0x68] sm:$0xff]
        %v1361 = vld [vmem:[%s1346 + $0x70] sm:$0xff]
        %v1362 = vld [vmem:[%s1346 + $0x78] sm:$0xff]
        %s1363 = scalar_lea.vmem %s355, 7 [#allocation7]
        %v1364 = vld [vmem:[%s1363] sm:$0x1]
        %v1366 = vperm.slane %v1364, 0
        %v1368 = vmul.f32 %v1347, %v1366
        %v1369 = vmul.f32 %v1348, %v1366
        %v1370 = vmul.f32 %v1349, %v1366
        %v1371 = vmul.f32 %v1350, %v1366
        %v1372 = vmul.f32 %v1351, %v1366
        %v1373 = vmul.f32 %v1352, %v1366
        %v1374 = vmul.f32 %v1353, %v1366
        %v1375 = vmul.f32 %v1354, %v1366
        %v1376 = vmul.f32 %v1355, %v1366
        %v1377 = vmul.f32 %v1356, %v1366
        %v1378 = vmul.f32 %v1357, %v1366
        %v1379 = vmul.f32 %v1358, %v1366
        %v1380 = vmul.f32 %v1359, %v1366
        %v1381 = vmul.f32 %v1360, %v1366
        %v1382 = vmul.f32 %v1361, %v1366
        %v1383 = vmul.f32 %v1362, %v1366
        %v1384 = vpack.c.bf16 %v1369, %v1368
        %v1385 = vpack.c.bf16 %v1371, %v1370
        %v1386 = vpack.c.bf16 %v1373, %v1372
        %v1387 = vpack.c.bf16 %v1375, %v1374
        %v1388 = vpack.c.bf16 %v1377, %v1376
        %v1389 = vpack.c.bf16 %v1379, %v1378
        %v1390 = vpack.c.bf16 %v1381, %v1380
        %v1391 = vpack.c.bf16 %v1383, %v1382
        %1392 = vmatpush.bf16.msra.mxu0 %v1391
        %1393 = vmatpush.bf16.msra.mxu0 %v1390
        %1394 = vmatpush.bf16.msra.mxu0 %v1389
        %1395 = vmatpush.bf16.msra.mxu0 %v1388
        %1396 = vmatpush.bf16.msra.mxu0 %v1387
        %1397 = vmatpush.bf16.msra.mxu0 %v1386
        %1398 = vmatpush.bf16.msra.mxu0 %v1385
        %1399 = vmatpush.bf16.msra.mxu0 %v1384
        %1400 = vmatmul.bf16.gmra.mxu0 %v593
        %v1401 = vpop.f32.mrf.mxu0
        %v1402 = vadd.f32 %v440, %v1401
        %v1403 = vpop.f32.mrf.mxu0
        %v1404 = vadd.f32 %v445, %v1403
        %1405 = vmatmul.bf16.gmra.mxu0 %v594
        %v1406 = vpop.f32.mrf.mxu0
        %v1407 = vadd.f32 %v450, %v1406
        %v1408 = vpop.f32.mrf.mxu0
        %v1409 = vadd.f32 %v455, %v1408
        %1410 = vmatmul.bf16.gmra.mxu0 %v595
        %v1411 = vpop.f32.mrf.mxu0
        %v1412 = vadd.f32 %v460, %v1411
        %v1413 = vpop.f32.mrf.mxu0
        %v1414 = vadd.f32 %v465, %v1413
        %1415 = vmatmul.bf16.gmra.mxu0 %v596
        %v1416 = vpop.f32.mrf.mxu0
        %v1417 = vadd.f32 %v470, %v1416
        %v1418 = vpop.f32.mrf.mxu0
        %v1419 = vadd.f32 %v475, %v1418
        %1420 = vmatmul.bf16.gmra.mxu0 %v597
        %v1421 = vpop.f32.mrf.mxu0
        %v1422 = vadd.f32 %v480, %v1421
        %v1423 = vpop.f32.mrf.mxu0
        %v1424 = vadd.f32 %v485, %v1423
        %1425 = vmatmul.bf16.gmra.mxu0 %v598
        %v1426 = vpop.f32.mrf.mxu0
        %v1427 = vadd.f32 %v490, %v1426
        %v1428 = vpop.f32.mrf.mxu0
        %v1429 = vadd.f32 %v495, %v1428
        %1430 = vmatmul.bf16.gmra.mxu0 %v599
        %v1431 = vpop.f32.mrf.mxu0
        %v1432 = vadd.f32 %v500, %v1431
        %v1433 = vpop.f32.mrf.mxu0
        %v1434 = vadd.f32 %v505, %v1433
        %1435 = vmatmul.bf16.gmra.mxu0 %v600
        %v1436 = vpop.f32.mrf.mxu0
        %v1437 = vadd.f32 %v510, %v1436
        %v1438 = vpop.f32.mrf.mxu0
        %v1439 = vadd.f32 %v515, %v1438
        %1440 = vdwg.mxu0
        %s1441 = scalar_lea.vmem [#allocation2], 896
        %1442 = vst [vmem:[%s1441] sm:$0xff] %v1402
        %1443 = vst [vmem:[%s1441 + $0x8] sm:$0xff] %v1404
        %1444 = vst [vmem:[%s1441 + $0x10] sm:$0xff] %v1407
        %1445 = vst [vmem:[%s1441 + $0x18] sm:$0xff] %v1409
        %1446 = vst [vmem:[%s1441 + $0x20] sm:$0xff] %v1412
        %1447 = vst [vmem:[%s1441 + $0x28] sm:$0xff] %v1414
        %1448 = vst [vmem:[%s1441 + $0x30] sm:$0xff] %v1417
        %1449 = vst [vmem:[%s1441 + $0x38] sm:$0xff] %v1419
        %1450 = vst [vmem:[%s1441 + $0x40] sm:$0xff] %v1422
        %1451 = vst [vmem:[%s1441 + $0x48] sm:$0xff] %v1424
        %1452 = vst [vmem:[%s1441 + $0x50] sm:$0xff] %v1427
        %1453 = vst [vmem:[%s1441 + $0x58] sm:$0xff] %v1429
        %1454 = vst [vmem:[%s1441 + $0x60] sm:$0xff] %v1432
        %1455 = vst [vmem:[%s1441 + $0x68] sm:$0xff] %v1434
        %1456 = vst [vmem:[%s1441 + $0x70] sm:$0xff] %v1437
        %1457 = vst [vmem:[%s1441 + $0x78] sm:$0xff] %v1439
        %v1458 = vld [vmem:[#allocation2] sm:$0xff]
        %v1459 = vld [vmem:[#allocation2 + $0x8] sm:$0xff]
        %v1460 = vld [vmem:[#allocation2 + $0x10] sm:$0xff]
        %v1461 = vld [vmem:[#allocation2 + $0x18] sm:$0xff]
        %v1462 = vld [vmem:[#allocation2 + $0x20] sm:$0xff]
        %v1463 = vld [vmem:[#allocation2 + $0x28] sm:$0xff]
        %v1464 = vld [vmem:[#allocation2 + $0x30] sm:$0xff]
        %v1465 = vld [vmem:[#allocation2 + $0x38] sm:$0xff]
        %v1466 = vld [vmem:[#allocation2 + $0x40] sm:$0xff]
        %v1467 = vld [vmem:[#allocation2 + $0x48] sm:$0xff]
        %v1468 = vld [vmem:[#allocation2 + $0x50] sm:$0xff]
        %v1469 = vld [vmem:[#allocation2 + $0x58] sm:$0xff]
        %v1470 = vld [vmem:[#allocation2 + $0x60] sm:$0xff]
        %v1471 = vld [vmem:[#allocation2 + $0x68] sm:$0xff]
        %v1472 = vld [vmem:[#allocation2 + $0x70] sm:$0xff]
        %v1473 = vld [vmem:[#allocation2 + $0x78] sm:$0xff]
        %v1474 = vxor.u32 %v1458, 2147483648
        %v1475 = vxor.u32 %v1459, 2147483648
        %v1476 = vxor.u32 %v1460, 2147483648
        %v1477 = vxor.u32 %v1461, 2147483648
        %v1478 = vxor.u32 %v1462, 2147483648
        %v1479 = vxor.u32 %v1463, 2147483648
        %v1480 = vxor.u32 %v1464, 2147483648
        %v1481 = vxor.u32 %v1465, 2147483648
        %v1482 = vxor.u32 %v1466, 2147483648
        %v1483 = vxor.u32 %v1467, 2147483648
        %v1484 = vxor.u32 %v1468, 2147483648
        %v1485 = vxor.u32 %v1469, 2147483648
        %v1486 = vmul.f32 %v1474, 1.442695
        %v1487 = vpow.pop %v1486
        %v1488 = vmul.f32 %v1475, 1.442695
        %v1489 = vpow.pop %v1488
        %v1490 = vmul.f32 %v1476, 1.442695
        %v1491 = vpow.pop %v1490
        %v1492 = vmul.f32 %v1477, 1.442695
        %v1493 = vpow.pop %v1492
        %v1494 = vmul.f32 %v1478, 1.442695
        %v1495 = vpow.pop %v1494
        %v1496 = vmul.f32 %v1479, 1.442695
        %v1497 = vpow.pop %v1496
        %v1498 = vmul.f32 %v1480, 1.442695
        %v1499 = vpow.pop %v1498
        %v1500 = vmul.f32 %v1481, 1.442695
        %v1501 = vpow.pop %v1500
        %v1502 = vmul.f32 %v1482, 1.442695
        %v1503 = vpow.pop %v1502
        %v1504 = vmul.f32 %v1483, 1.442695
        %v1505 = vpow.pop %v1504
        %v1506 = vmul.f32 %v1484, 1.442695
        %v1507 = vpow.pop %v1506
        %v1508 = vmul.f32 %v1485, 1.442695
        %v1509 = vpow.pop %v1508
        %v1510 = vadd.f32 %v1487, 1.0
        %v1511 = vadd.f32 %v1489, 1.0
        %v1512 = vadd.f32 %v1491, 1.0
        %v1513 = vadd.f32 %v1493, 1.0
        %v1514 = vadd.f32 %v1495, 1.0
        %v1515 = vadd.f32 %v1497, 1.0
        %v1516 = vadd.f32 %v1499, 1.0
        %v1517 = vadd.f32 %v1501, 1.0
        %v1518 = vadd.f32 %v1503, 1.0
        %v1519 = vadd.f32 %v1505, 1.0
        %v1520 = vadd.f32 %v1507, 1.0
        %v1521 = vadd.f32 %v1509, 1.0
        %v1522 = vrcp.pop %v1510
        %v1523 = vmul.f32 %v1510, %v1522
        %v1524 = vsub.f32 1.0, %v1523
        %v1525 = vmul.f32 %v1522, %v1524
        %v1526 = vadd.f32 %v1522, %v1525
        %vm1527 = vweird.f32 %v1510
        %vm1528 = vweird.f32 %v1522
        %vm1529 = vmor %vm1527, %vm1528
        %v1530 = vsel %vm1529, %v1522, %v1526
        %v1531 = vand.u32 2147483647, %v1510
        %vm1532 = vcmp.eq.f32.partialorder %v1531, 8.507059e+37
        %v1533 = vand.u32 %v1510, 2147483648
        %v1534 = vor.u32 1.1754944e-38, %v1533
        %v1535 = vsel %vm1532, %v1534, %v1530
        %v1536 = vmul.f32 1.0, %v1535
        %v1537 = vrcp.pop %v1511
        %v1538 = vmul.f32 %v1511, %v1537
        %v1539 = vsub.f32 1.0, %v1538
        %v1540 = vmul.f32 %v1537, %v1539
        %v1541 = vadd.f32 %v1537, %v1540
        %vm1542 = vweird.f32 %v1511
        %vm1543 = vweird.f32 %v1537
        %vm1544 = vmor %vm1542, %vm1543
        %v1545 = vsel %vm1544, %v1537, %v1541
        %v1546 = vand.u32 2147483647, %v1511
        %vm1547 = vcmp.eq.f32.partialorder %v1546, 8.507059e+37
        %v1548 = vand.u32 %v1511, 2147483648
        %v1549 = vor.u32 1.1754944e-38, %v1548
        %v1550 = vsel %vm1547, %v1549, %v1545
        %v1551 = vmul.f32 1.0, %v1550
        %v1552 = vrcp.pop %v1512
        %v1553 = vmul.f32 %v1512, %v1552
        %v1554 = vsub.f32 1.0, %v1553
        %v1555 = vmul.f32 %v1552, %v1554
        %v1556 = vadd.f32 %v1552, %v1555
        %vm1557 = vweird.f32 %v1512
        %vm1558 = vweird.f32 %v1552
        %vm1559 = vmor %vm1557, %vm1558
        %v1560 = vsel %vm1559, %v1552, %v1556
        %v1561 = vand.u32 2147483647, %v1512
        %vm1562 = vcmp.eq.f32.partialorder %v1561, 8.507059e+37
        %v1563 = vand.u32 %v1512, 2147483648
        %v1564 = vor.u32 1.1754944e-38, %v1563
        %v1565 = vsel %vm1562, %v1564, %v1560
        %v1566 = vmul.f32 1.0, %v1565
        %v1567 = vrcp.pop %v1513
        %v1568 = vmul.f32 %v1513, %v1567
        %v1569 = vsub.f32 1.0, %v1568
        %v1570 = vmul.f32 %v1567, %v1569
        %v1571 = vadd.f32 %v1567, %v1570
        %vm1572 = vweird.f32 %v1513
        %vm1573 = vweird.f32 %v1567
        %vm1574 = vmor %vm1572, %vm1573
        %v1575 = vsel %vm1574, %v1567, %v1571
        %v1576 = vand.u32 2147483647, %v1513
        %vm1577 = vcmp.eq.f32.partialorder %v1576, 8.507059e+37
        %v1578 = vand.u32 %v1513, 2147483648
        %v1579 = vor.u32 1.1754944e-38, %v1578
        %v1580 = vsel %vm1577, %v1579, %v1575
        %v1581 = vmul.f32 1.0, %v1580
        %v1582 = vrcp.pop %v1514
        %v1583 = vmul.f32 %v1514, %v1582
        %v1584 = vsub.f32 1.0, %v1583
        %v1585 = vmul.f32 %v1582, %v1584
        %v1586 = vadd.f32 %v1582, %v1585
        %vm1587 = vweird.f32 %v1514
        %vm1588 = vweird.f32 %v1582
        %vm1589 = vmor %vm1587, %vm1588
        %v1590 = vsel %vm1589, %v1582, %v1586
        %v1591 = vand.u32 2147483647, %v1514
        %vm1592 = vcmp.eq.f32.partialorder %v1591, 8.507059e+37
        %v1593 = vand.u32 %v1514, 2147483648
        %v1594 = vor.u32 1.1754944e-38, %v1593
        %v1595 = vsel %vm1592, %v1594, %v1590
        %v1596 = vmul.f32 1.0, %v1595
        %v1597 = vrcp.pop %v1515
        %v1598 = vmul.f32 %v1515, %v1597
        %v1599 = vsub.f32 1.0, %v1598
        %v1600 = vmul.f32 %v1597, %v1599
        %v1601 = vadd.f32 %v1597, %v1600
        %vm1602 = vweird.f32 %v1515
        %vm1603 = vweird.f32 %v1597
        %vm1604 = vmor %vm1602, %vm1603
        %v1605 = vsel %vm1604, %v1597, %v1601
        %v1606 = vand.u32 2147483647, %v1515
        %vm1607 = vcmp.eq.f32.partialorder %v1606, 8.507059e+37
        %v1608 = vand.u32 %v1515, 2147483648
        %v1609 = vor.u32 1.1754944e-38, %v1608
        %v1610 = vsel %vm1607, %v1609, %v1605
        %v1611 = vmul.f32 1.0, %v1610
        %v1612 = vrcp.pop %v1516
        %v1613 = vmul.f32 %v1516, %v1612
        %v1614 = vsub.f32 1.0, %v1613
        %v1615 = vmul.f32 %v1612, %v1614
        %v1616 = vadd.f32 %v1612, %v1615
        %vm1617 = vweird.f32 %v1516
        %vm1618 = vweird.f32 %v1612
        %vm1619 = vmor %vm1617, %vm1618
        %v1620 = vsel %vm1619, %v1612, %v1616
        %v1621 = vand.u32 2147483647, %v1516
        %vm1622 = vcmp.eq.f32.partialorder %v1621, 8.507059e+37
        %v1623 = vand.u32 %v1516, 2147483648
        %v1624 = vor.u32 1.1754944e-38, %v1623
        %v1625 = vsel %vm1622, %v1624, %v1620
        %v1626 = vmul.f32 1.0, %v1625
        %v1627 = vrcp.pop %v1517
        %v1628 = vmul.f32 %v1517, %v1627
        %v1629 = vsub.f32 1.0, %v1628
        %v1630 = vmul.f32 %v1627, %v1629
        %v1631 = vadd.f32 %v1627, %v1630
        %vm1632 = vweird.f32 %v1517
        %vm1633 = vweird.f32 %v1627
        %vm1634 = vmor %vm1632, %vm1633
        %v1635 = vsel %vm1634, %v1627, %v1631
        %v1636 = vand.u32 2147483647, %v1517
        %vm1637 = vcmp.eq.f32.partialorder %v1636, 8.507059e+37
        %v1638 = vand.u32 %v1517, 2147483648
        %v1639 = vor.u32 1.1754944e-38, %v1638
        %v1640 = vsel %vm1637, %v1639, %v1635
        %v1641 = vmul.f32 1.0, %v1640
        %v1642 = vrcp.pop %v1518
        %v1643 = vmul.f32 %v1518, %v1642
        %v1644 = vsub.f32 1.0, %v1643
        %v1645 = vmul.f32 %v1642, %v1644
        %v1646 = vadd.f32 %v1642, %v1645
        %vm1647 = vweird.f32 %v1518
        %vm1648 = vweird.f32 %v1642
        %vm1649 = vmor %vm1647, %vm1648
        %v1650 = vsel %vm1649, %v1642, %v1646
        %v1651 = vand.u32 2147483647, %v1518
        %vm1652 = vcmp.eq.f32.partialorder %v1651, 8.507059e+37
        %v1653 = vand.u32 %v1518, 2147483648
        %v1654 = vor.u32 1.1754944e-38, %v1653
        %v1655 = vsel %vm1652, %v1654, %v1650
        %v1656 = vmul.f32 1.0, %v1655
        %v1657 = vrcp.pop %v1519
        %v1658 = vmul.f32 %v1519, %v1657
        %v1659 = vsub.f32 1.0, %v1658
        %v1660 = vmul.f32 %v1657, %v1659
        %v1661 = vadd.f32 %v1657, %v1660
        %vm1662 = vweird.f32 %v1519
        %vm1663 = vweird.f32 %v1657
        %vm1664 = vmor %vm1662, %vm1663
        %v1665 = vsel %vm1664, %v1657, %v1661
        %v1666 = vand.u32 2147483647, %v1519
        %vm1667 = vcmp.eq.f32.partialorder %v1666, 8.507059e+37
        %v1668 = vand.u32 %v1519, 2147483648
        %v1669 = vor.u32 1.1754944e-38, %v1668
        %v1670 = vsel %vm1667, %v1669, %v1665
        %v1671 = vmul.f32 1.0, %v1670
        %v1672 = vrcp.pop %v1520
        %v1673 = vmul.f32 %v1520, %v1672
        %v1674 = vsub.f32 1.0, %v1673
        %v1675 = vmul.f32 %v1672, %v1674
        %v1676 = vadd.f32 %v1672, %v1675
        %vm1677 = vweird.f32 %v1520
        %vm1678 = vweird.f32 %v1672
        %vm1679 = vmor %vm1677, %vm1678
        %v1680 = vsel %vm1679, %v1672, %v1676
        %v1681 = vand.u32 2147483647, %v1520
        %vm1682 = vcmp.eq.f32.partialorder %v1681, 8.507059e+37
        %v1683 = vand.u32 %v1520, 2147483648
        %v1684 = vor.u32 1.1754944e-38, %v1683
        %v1685 = vsel %vm1682, %v1684, %v1680
        %v1686 = vmul.f32 1.0, %v1685
        %v1687 = vrcp.pop %v1521
        %v1688 = vmul.f32 %v1521, %v1687
        %v1689 = vsub.f32 1.0, %v1688
        %v1690 = vmul.f32 %v1687, %v1689
        %v1691 = vadd.f32 %v1687, %v1690
        %vm1692 = vweird.f32 %v1521
        %vm1693 = vweird.f32 %v1687
        %vm1694 = vmor %vm1692, %vm1693
        %v1695 = vsel %vm1694, %v1687, %v1691
        %v1696 = vand.u32 2147483647, %v1521
        %vm1697 = vcmp.eq.f32.partialorder %v1696, 8.507059e+37
        %v1698 = vand.u32 %v1521, 2147483648
        %v1699 = vor.u32 1.1754944e-38, %v1698
        %v1700 = vsel %vm1697, %v1699, %v1695
        %v1701 = vmul.f32 1.0, %v1700
        %v1702 = vtanh.pop %v1470
        %v1703 = vtanh.pop %v1471
        %v1704 = vtanh.pop %v1472
        %v1705 = vtanh.pop %v1473
        %v1706 = vmul.f32 %v1596, 0.0
        %v1707 = vmul.f32 %v1611, 0.0
        %v1708 = vmul.f32 %v1626, 0.0
        %v1709 = vmul.f32 %v1641, 0.0
        %v1710 = vmul.f32 %v1536, %v1702
        %v1711 = vmul.f32 %v1551, %v1703
        %v1712 = vmul.f32 %v1566, %v1704
        %v1713 = vmul.f32 %v1581, %v1705
        %v1714 = vadd.f32 %v1706, %v1710
        %v1715 = vadd.f32 %v1707, %v1711
        %v1716 = vadd.f32 %v1708, %v1712
        %v1717 = vadd.f32 %v1709, %v1713
        %v1718 = vtanh.pop %v1714
        %v1719 = vtanh.pop %v1715
        %v1720 = vtanh.pop %v1716
        %v1721 = vtanh.pop %v1717
        %v1722 = vmul.f32 %v1656, %v1718
        %v1723 = vmul.f32 %v1671, %v1719
        %v1724 = vmul.f32 %v1686, %v1720
        %v1725 = vmul.f32 %v1701, %v1721
        %v1726 = vld [vmem:[%s769] sm:$0xff]
        %v1727 = vld [vmem:[%s769 + $0x8] sm:$0xff]
        %v1728 = vld [vmem:[%s769 + $0x10] sm:$0xff]
        %v1729 = vld [vmem:[%s769 + $0x18] sm:$0xff]
        %v1730 = vld [vmem:[%s769 + $0x20] sm:$0xff]
        %v1731 = vld [vmem:[%s769 + $0x28] sm:$0xff]
        %v1732 = vld [vmem:[%s769 + $0x30] sm:$0xff]
        %v1733 = vld [vmem:[%s769 + $0x38] sm:$0xff]
        %v1734 = vld [vmem:[%s769 + $0x40] sm:$0xff]
        %v1735 = vld [vmem:[%s769 + $0x48] sm:$0xff]
        %v1736 = vld [vmem:[%s769 + $0x50] sm:$0xff]
        %v1737 = vld [vmem:[%s769 + $0x58] sm:$0xff]
        %v1738 = vld [vmem:[%s769 + $0x60] sm:$0xff]
        %v1739 = vld [vmem:[%s769 + $0x68] sm:$0xff]
        %v1740 = vld [vmem:[%s769 + $0x70] sm:$0xff]
        %v1741 = vld [vmem:[%s769 + $0x78] sm:$0xff]
        %v1742 = vpack.c.bf16 %v1723, %v1722
        %v1743 = vpack.c.bf16 %v1725, %v1724
        %v1760 = vunpack.c.l.b16 %v405
        %v1761 = vunpack.c.l.b16 %v406
        %v1762 = vunpack.c.l.b16 %v407
        %v1763 = vunpack.c.l.b16 %v408
        %v1764 = vunpack.c.l.b16 %v409
        %v1765 = vunpack.c.l.b16 %v410
        %v1766 = vunpack.c.l.b16 %v411
        %v1767 = vunpack.c.l.b16 %v412
        %v1768 = vunpack.c.l.b16 %v413
        %v1769 = vunpack.c.l.b16 %v414
        %v1770 = vunpack.c.l.b16 %v415
        %v1771 = vunpack.c.l.b16 %v416
        %v1772 = vunpack.c.l.b16 %v417
        %v1773 = vunpack.c.l.b16 %v418
        %v1774 = vunpack.c.l.b16 %v419
        %v1775 = vunpack.c.l.b16 %v420
        %v1776 = vpack.c.b16 %v1761, %v1760
        %v1777 = vpack.c.b16 %v1763, %v1762
        %v1778 = vpack.c.b16 %v1765, %v1764
        %v1779 = vpack.c.b16 %v1767, %v1766
        %v1780 = vpack.c.b16 %v1769, %v1768
        %v1781 = vpack.c.b16 %v1771, %v1770
        %v1782 = vpack.c.b16 %v1773, %v1772
        %v1783 = vpack.c.b16 %v1775, %v1774
        %vm1784 = vcmask 261120
        %v1786 = vsel %vm1784, %v1776, 0
        %v1789 = vsel %vm1784, %v1777, 0
        %v1792 = vsel %vm1784, %v1778, 0
        %v1795 = vsel %vm1784, %v1779, 0
        %v1798 = vsel %vm1784, %v1780, 0
        %v1801 = vsel %vm1784, %v1781, 0
        %v1804 = vsel %vm1784, %v1782, 0
        %v1807 = vsel %vm1784, %v1783, 0
        %1809 = vmatpush.bf16.msra.mxu0 0
        %1810 = vmatpush.bf16.msra.mxu0 0
        %1811 = vmatpush.bf16.msra.mxu0 0
        %1812 = vmatpush.bf16.msra.mxu0 0
        %1813 = vmatpush.bf16.msra.mxu0 0
        %1814 = vmatpush.bf16.msra.mxu0 0
        %1815 = vmatpush.bf16.msra.mxu0 %v1743
        %1816 = vmatpush.bf16.msra.mxu0 %v1742
        %1817 = vmatmul.bf16.gmra.mxu0 %v1786
        %v1818 = vpop.f32.mrf.mxu0
        %v1819 = vadd.f32 0.0, %v1818
        %v1820 = vpop.f32.mrf.mxu0
        %v1821 = vadd.f32 0.0, %v1820
        %1822 = vmatmul.bf16.gmra.mxu0 %v1789
        %v1823 = vpop.f32.mrf.mxu0
        %v1824 = vadd.f32 0.0, %v1823
        %v1825 = vpop.f32.mrf.mxu0
        %v1826 = vadd.f32 0.0, %v1825
        %1827 = vmatmul.bf16.gmra.mxu0 %v1792
        %v1828 = vpop.f32.mrf.mxu0
        %v1829 = vadd.f32 0.0, %v1828
        %v1830 = vpop.f32.mrf.mxu0
        %v1831 = vadd.f32 0.0, %v1830
        %1832 = vmatmul.bf16.gmra.mxu0 %v1795
        %v1833 = vpop.f32.mrf.mxu0
        %v1834 = vadd.f32 0.0, %v1833
        %v1835 = vpop.f32.mrf.mxu0
        %v1836 = vadd.f32 0.0, %v1835
        %1837 = vmatmul.bf16.gmra.mxu0 %v1798
        %v1838 = vpop.f32.mrf.mxu0
        %v1839 = vadd.f32 0.0, %v1838
        %v1840 = vpop.f32.mrf.mxu0
        %v1841 = vadd.f32 0.0, %v1840
        %1842 = vmatmul.bf16.gmra.mxu0 %v1801
        %v1843 = vpop.f32.mrf.mxu0
        %v1844 = vadd.f32 0.0, %v1843
        %v1845 = vpop.f32.mrf.mxu0
        %v1846 = vadd.f32 0.0, %v1845
        %1847 = vmatmul.bf16.gmra.mxu0 %v1804
        %v1848 = vpop.f32.mrf.mxu0
        %v1849 = vadd.f32 0.0, %v1848
        %v1850 = vpop.f32.mrf.mxu0
        %v1851 = vadd.f32 0.0, %v1850
        %1852 = vmatmul.bf16.gmra.mxu0 %v1807
        %v1853 = vpop.f32.mrf.mxu0
        %v1854 = vadd.f32 0.0, %v1853
        %v1855 = vpop.f32.mrf.mxu0
        %v1856 = vadd.f32 0.0, %v1855
        %1857 = vdwg.mxu0
        %v1858 = vadd.f32 %v1726, %v1819
        %v1859 = vadd.f32 %v1727, %v1821
        %v1860 = vadd.f32 %v1728, %v1824
        %v1861 = vadd.f32 %v1729, %v1826
        %v1862 = vadd.f32 %v1730, %v1829
        %v1863 = vadd.f32 %v1731, %v1831
        %v1864 = vadd.f32 %v1732, %v1834
        %v1865 = vadd.f32 %v1733, %v1836
        %v1866 = vadd.f32 %v1734, %v1839
        %v1867 = vadd.f32 %v1735, %v1841
        %v1868 = vadd.f32 %v1736, %v1844
        %v1869 = vadd.f32 %v1737, %v1846
        %v1870 = vadd.f32 %v1738, %v1849
        %v1871 = vadd.f32 %v1739, %v1851
        %v1872 = vadd.f32 %v1740, %v1854
        %v1873 = vadd.f32 %v1741, %v1856
        %v1874 = vxor.u32 %v1858, 2147483648
        %v1875 = vxor.u32 %v1859, 2147483648
        %v1876 = vxor.u32 %v1860, 2147483648
        %v1877 = vxor.u32 %v1861, 2147483648
        %v1878 = vxor.u32 %v1862, 2147483648
        %v1879 = vxor.u32 %v1863, 2147483648
        %v1880 = vxor.u32 %v1864, 2147483648
        %v1881 = vxor.u32 %v1865, 2147483648
        %v1882 = vxor.u32 %v1866, 2147483648
        %v1883 = vxor.u32 %v1867, 2147483648
        %v1884 = vxor.u32 %v1868, 2147483648
        %v1885 = vxor.u32 %v1869, 2147483648
        %v1886 = vmul.f32 %v1874, 1.442695
        %v1887 = vpow.pop %v1886
        %v1888 = vmul.f32 %v1875, 1.442695
        %v1889 = vpow.pop %v1888
        %v1890 = vmul.f32 %v1876, 1.442695
        %v1891 = vpow.pop %v1890
        %v1892 = vmul.f32 %v1877, 1.442695
        %v1893 = vpow.pop %v1892
        %v1894 = vmul.f32 %v1878, 1.442695
        %v1895 = vpow.pop %v1894
        %v1896 = vmul.f32 %v1879, 1.442695
        %v1897 = vpow.pop %v1896
        %v1898 = vmul.f32 %v1880, 1.442695
        %v1899 = vpow.pop %v1898
        %v1900 = vmul.f32 %v1881, 1.442695
        %v1901 = vpow.pop %v1900
        %v1902 = vmul.f32 %v1882, 1.442695
        %v1903 = vpow.pop %v1902
        %v1904 = vmul.f32 %v1883, 1.442695
        %v1905 = vpow.pop %v1904
        %v1906 = vmul.f32 %v1884, 1.442695
        %v1907 = vpow.pop %v1906
        %v1908 = vmul.f32 %v1885, 1.442695
        %v1909 = vpow.pop %v1908
        %v1910 = vadd.f32 %v1887, 1.0
        %v1911 = vadd.f32 %v1889, 1.0
        %v1912 = vadd.f32 %v1891, 1.0
        %v1913 = vadd.f32 %v1893, 1.0
        %v1914 = vadd.f32 %v1895, 1.0
        %v1915 = vadd.f32 %v1897, 1.0
        %v1916 = vadd.f32 %v1899, 1.0
        %v1917 = vadd.f32 %v1901, 1.0
        %v1918 = vadd.f32 %v1903, 1.0
        %v1919 = vadd.f32 %v1905, 1.0
        %v1920 = vadd.f32 %v1907, 1.0
        %v1921 = vadd.f32 %v1909, 1.0
        %v1922 = vrcp.pop %v1910
        %v1923 = vmul.f32 %v1910, %v1922
        %v1924 = vsub.f32 1.0, %v1923
        %v1925 = vmul.f32 %v1922, %v1924
        %v1926 = vadd.f32 %v1922, %v1925
        %vm1927 = vweird.f32 %v1910
        %vm1928 = vweird.f32 %v1922
        %vm1929 = vmor %vm1927, %vm1928
        %v1930 = vsel %vm1929, %v1922, %v1926
        %v1931 = vand.u32 2147483647, %v1910
        %vm1932 = vcmp.eq.f32.partialorder %v1931, 8.507059e+37
        %v1933 = vand.u32 %v1910, 2147483648
        %v1934 = vor.u32 1.1754944e-38, %v1933
        %v1935 = vsel %vm1932, %v1934, %v1930
        %v1936 = vmul.f32 1.0, %v1935
        %v1937 = vrcp.pop %v1911
        %v1938 = vmul.f32 %v1911, %v1937
        %v1939 = vsub.f32 1.0, %v1938
        %v1940 = vmul.f32 %v1937, %v1939
        %v1941 = vadd.f32 %v1937, %v1940
        %vm1942 = vweird.f32 %v1911
        %vm1943 = vweird.f32 %v1937
        %vm1944 = vmor %vm1942, %vm1943
        %v1945 = vsel %vm1944, %v1937, %v1941
        %v1946 = vand.u32 2147483647, %v1911
        %vm1947 = vcmp.eq.f32.partialorder %v1946, 8.507059e+37
        %v1948 = vand.u32 %v1911, 2147483648
        %v1949 = vor.u32 1.1754944e-38, %v1948
        %v1950 = vsel %vm1947, %v1949, %v1945
        %v1951 = vmul.f32 1.0, %v1950
        %v1952 = vrcp.pop %v1912
        %v1953 = vmul.f32 %v1912, %v1952
        %v1954 = vsub.f32 1.0, %v1953
        %v1955 = vmul.f32 %v1952, %v1954
        %v1956 = vadd.f32 %v1952, %v1955
        %vm1957 = vweird.f32 %v1912
        %vm1958 = vweird.f32 %v1952
        %vm1959 = vmor %vm1957, %vm1958
        %v1960 = vsel %vm1959, %v1952, %v1956
        %v1961 = vand.u32 2147483647, %v1912
        %vm1962 = vcmp.eq.f32.partialorder %v1961, 8.507059e+37
        %v1963 = vand.u32 %v1912, 2147483648
        %v1964 = vor.u32 1.1754944e-38, %v1963
        %v1965 = vsel %vm1962, %v1964, %v1960
        %v1966 = vmul.f32 1.0, %v1965
        %v1967 = vrcp.pop %v1913
        %v1968 = vmul.f32 %v1913, %v1967
        %v1969 = vsub.f32 1.0, %v1968
        %v1970 = vmul.f32 %v1967, %v1969
        %v1971 = vadd.f32 %v1967, %v1970
        %vm1972 = vweird.f32 %v1913
        %vm1973 = vweird.f32 %v1967
        %vm1974 = vmor %vm1972, %vm1973
        %v1975 = vsel %vm1974, %v1967, %v1971
        %v1976 = vand.u32 2147483647, %v1913
        %vm1977 = vcmp.eq.f32.partialorder %v1976, 8.507059e+37
        %v1978 = vand.u32 %v1913, 2147483648
        %v1979 = vor.u32 1.1754944e-38, %v1978
        %v1980 = vsel %vm1977, %v1979, %v1975
        %v1981 = vmul.f32 1.0, %v1980
        %v1982 = vrcp.pop %v1914
        %v1983 = vmul.f32 %v1914, %v1982
        %v1984 = vsub.f32 1.0, %v1983
        %v1985 = vmul.f32 %v1982, %v1984
        %v1986 = vadd.f32 %v1982, %v1985
        %vm1987 = vweird.f32 %v1914
        %vm1988 = vweird.f32 %v1982
        %vm1989 = vmor %vm1987, %vm1988
        %v1990 = vsel %vm1989, %v1982, %v1986
        %v1991 = vand.u32 2147483647, %v1914
        %vm1992 = vcmp.eq.f32.partialorder %v1991, 8.507059e+37
        %v1993 = vand.u32 %v1914, 2147483648
        %v1994 = vor.u32 1.1754944e-38, %v1993
        %v1995 = vsel %vm1992, %v1994, %v1990
        %v1996 = vmul.f32 1.0, %v1995
        %v1997 = vrcp.pop %v1915
        %v1998 = vmul.f32 %v1915, %v1997
        %v1999 = vsub.f32 1.0, %v1998
        %v2000 = vmul.f32 %v1997, %v1999
        %v2001 = vadd.f32 %v1997, %v2000
        %vm2002 = vweird.f32 %v1915
        %vm2003 = vweird.f32 %v1997
        %vm2004 = vmor %vm2002, %vm2003
        %v2005 = vsel %vm2004, %v1997, %v2001
        %v2006 = vand.u32 2147483647, %v1915
        %vm2007 = vcmp.eq.f32.partialorder %v2006, 8.507059e+37
        %v2008 = vand.u32 %v1915, 2147483648
        %v2009 = vor.u32 1.1754944e-38, %v2008
        %v2010 = vsel %vm2007, %v2009, %v2005
        %v2011 = vmul.f32 1.0, %v2010
        %v2012 = vrcp.pop %v1916
        %v2013 = vmul.f32 %v1916, %v2012
        %v2014 = vsub.f32 1.0, %v2013
        %v2015 = vmul.f32 %v2012, %v2014
        %v2016 = vadd.f32 %v2012, %v2015
        %vm2017 = vweird.f32 %v1916
        %vm2018 = vweird.f32 %v2012
        %vm2019 = vmor %vm2017, %vm2018
        %v2020 = vsel %vm2019, %v2012, %v2016
        %v2021 = vand.u32 2147483647, %v1916
        %vm2022 = vcmp.eq.f32.partialorder %v2021, 8.507059e+37
        %v2023 = vand.u32 %v1916, 2147483648
        %v2024 = vor.u32 1.1754944e-38, %v2023
        %v2025 = vsel %vm2022, %v2024, %v2020
        %v2026 = vmul.f32 1.0, %v2025
        %v2027 = vrcp.pop %v1917
        %v2028 = vmul.f32 %v1917, %v2027
        %v2029 = vsub.f32 1.0, %v2028
        %v2030 = vmul.f32 %v2027, %v2029
        %v2031 = vadd.f32 %v2027, %v2030
        %vm2032 = vweird.f32 %v1917
        %vm2033 = vweird.f32 %v2027
        %vm2034 = vmor %vm2032, %vm2033
        %v2035 = vsel %vm2034, %v2027, %v2031
        %v2036 = vand.u32 2147483647, %v1917
        %vm2037 = vcmp.eq.f32.partialorder %v2036, 8.507059e+37
        %v2038 = vand.u32 %v1917, 2147483648
        %v2039 = vor.u32 1.1754944e-38, %v2038
        %v2040 = vsel %vm2037, %v2039, %v2035
        %v2041 = vmul.f32 1.0, %v2040
        %v2042 = vrcp.pop %v1918
        %v2043 = vmul.f32 %v1918, %v2042
        %v2044 = vsub.f32 1.0, %v2043
        %v2045 = vmul.f32 %v2042, %v2044
        %v2046 = vadd.f32 %v2042, %v2045
        %vm2047 = vweird.f32 %v1918
        %vm2048 = vweird.f32 %v2042
        %vm2049 = vmor %vm2047, %vm2048
        %v2050 = vsel %vm2049, %v2042, %v2046
        %v2051 = vand.u32 2147483647, %v1918
        %vm2052 = vcmp.eq.f32.partialorder %v2051, 8.507059e+37
        %v2053 = vand.u32 %v1918, 2147483648
        %v2054 = vor.u32 1.1754944e-38, %v2053
        %v2055 = vsel %vm2052, %v2054, %v2050
        %v2056 = vmul.f32 1.0, %v2055
        %v2057 = vrcp.pop %v1919
        %v2058 = vmul.f32 %v1919, %v2057
        %v2059 = vsub.f32 1.0, %v2058
        %v2060 = vmul.f32 %v2057, %v2059
        %v2061 = vadd.f32 %v2057, %v2060
        %vm2062 = vweird.f32 %v1919
        %vm2063 = vweird.f32 %v2057
        %vm2064 = vmor %vm2062, %vm2063
        %v2065 = vsel %vm2064, %v2057, %v2061
        %v2066 = vand.u32 2147483647, %v1919
        %vm2067 = vcmp.eq.f32.partialorder %v2066, 8.507059e+37
        %v2068 = vand.u32 %v1919, 2147483648
        %v2069 = vor.u32 1.1754944e-38, %v2068
        %v2070 = vsel %vm2067, %v2069, %v2065
        %v2071 = vmul.f32 1.0, %v2070
        %v2072 = vrcp.pop %v1920
        %v2073 = vmul.f32 %v1920, %v2072
        %v2074 = vsub.f32 1.0, %v2073
        %v2075 = vmul.f32 %v2072, %v2074
        %v2076 = vadd.f32 %v2072, %v2075
        %vm2077 = vweird.f32 %v1920
        %vm2078 = vweird.f32 %v2072
        %vm2079 = vmor %vm2077, %vm2078
        %v2080 = vsel %vm2079, %v2072, %v2076
        %v2081 = vand.u32 2147483647, %v1920
        %vm2082 = vcmp.eq.f32.partialorder %v2081, 8.507059e+37
        %v2083 = vand.u32 %v1920, 2147483648
        %v2084 = vor.u32 1.1754944e-38, %v2083
        %v2085 = vsel %vm2082, %v2084, %v2080
        %v2086 = vmul.f32 1.0, %v2085
        %v2087 = vrcp.pop %v1921
        %v2088 = vmul.f32 %v1921, %v2087
        %v2089 = vsub.f32 1.0, %v2088
        %v2090 = vmul.f32 %v2087, %v2089
        %v2091 = vadd.f32 %v2087, %v2090
        %vm2092 = vweird.f32 %v1921
        %vm2093 = vweird.f32 %v2087
        %vm2094 = vmor %vm2092, %vm2093
        %v2095 = vsel %vm2094, %v2087, %v2091
        %v2096 = vand.u32 2147483647, %v1921
        %vm2097 = vcmp.eq.f32.partialorder %v2096, 8.507059e+37
        %v2098 = vand.u32 %v1921, 2147483648
        %v2099 = vor.u32 1.1754944e-38, %v2098
        %v2100 = vsel %vm2097, %v2099, %v2095
        %v2101 = vmul.f32 1.0, %v2100
        %v2102 = vtanh.pop %v1870
        %v2103 = vtanh.pop %v1871
        %v2104 = vtanh.pop %v1872
        %v2105 = vtanh.pop %v1873
        %v2106 = vmul.f32 %v1996, %v1714
        %v2107 = vmul.f32 %v2011, %v1715
        %v2108 = vmul.f32 %v2026, %v1716
        %v2109 = vmul.f32 %v2041, %v1717
        %v2110 = vmul.f32 %v1936, %v2102
        %v2111 = vmul.f32 %v1951, %v2103
        %v2112 = vmul.f32 %v1966, %v2104
        %v2113 = vmul.f32 %v1981, %v2105
        %v2114 = vadd.f32 %v2106, %v2110
        %v2115 = vadd.f32 %v2107, %v2111
        %v2116 = vadd.f32 %v2108, %v2112
        %v2117 = vadd.f32 %v2109, %v2113
        %v2118 = vtanh.pop %v2114
        %v2119 = vtanh.pop %v2115
        %v2120 = vtanh.pop %v2116
        %v2121 = vtanh.pop %v2117
        %v2122 = vmul.f32 %v2056, %v2118
        %v2123 = vmul.f32 %v2071, %v2119
        %v2124 = vmul.f32 %v2086, %v2120
        %v2125 = vmul.f32 %v2101, %v2121
        %v2126 = vld [vmem:[%s881] sm:$0xff]
        %v2127 = vld [vmem:[%s881 + $0x8] sm:$0xff]
        %v2128 = vld [vmem:[%s881 + $0x10] sm:$0xff]
        %v2129 = vld [vmem:[%s881 + $0x18] sm:$0xff]
        %v2130 = vld [vmem:[%s881 + $0x20] sm:$0xff]
        %v2131 = vld [vmem:[%s881 + $0x28] sm:$0xff]
        %v2132 = vld [vmem:[%s881 + $0x30] sm:$0xff]
        %v2133 = vld [vmem:[%s881 + $0x38] sm:$0xff]
        %v2134 = vld [vmem:[%s881 + $0x40] sm:$0xff]
        %v2135 = vld [vmem:[%s881 + $0x48] sm:$0xff]
        %v2136 = vld [vmem:[%s881 + $0x50] sm:$0xff]
        %v2137 = vld [vmem:[%s881 + $0x58] sm:$0xff]
        %v2138 = vld [vmem:[%s881 + $0x60] sm:$0xff]
        %v2139 = vld [vmem:[%s881 + $0x68] sm:$0xff]
        %v2140 = vld [vmem:[%s881 + $0x70] sm:$0xff]
        %v2141 = vld [vmem:[%s881 + $0x78] sm:$0xff]
        %v2142 = vpack.c.bf16 %v2123, %v2122
        %v2143 = vpack.c.bf16 %v2125, %v2124
        %2144 = vmatpush.bf16.msra.mxu0 0
        %2145 = vmatpush.bf16.msra.mxu0 0
        %2146 = vmatpush.bf16.msra.mxu0 0
        %2147 = vmatpush.bf16.msra.mxu0 0
        %2148 = vmatpush.bf16.msra.mxu0 0
        %2149 = vmatpush.bf16.msra.mxu0 0
        %2150 = vmatpush.bf16.msra.mxu0 %v2143
        %2151 = vmatpush.bf16.msra.mxu0 %v2142
        %2152 = vmatmul.bf16.gmra.mxu0 %v1786
        %v2153 = vpop.f32.mrf.mxu0
        %v2154 = vadd.f32 0.0, %v2153
        %v2155 = vpop.f32.mrf.mxu0
        %v2156 = vadd.f32 0.0, %v2155
        %2157 = vmatmul.bf16.gmra.mxu0 %v1789
        %v2158 = vpop.f32.mrf.mxu0
        %v2159 = vadd.f32 0.0, %v2158
        %v2160 = vpop.f32.mrf.mxu0
        %v2161 = vadd.f32 0.0, %v2160
        %2162 = vmatmul.bf16.gmra.mxu0 %v1792
        %v2163 = vpop.f32.mrf.mxu0
        %v2164 = vadd.f32 0.0, %v2163
        %v2165 = vpop.f32.mrf.mxu0
        %v2166 = vadd.f32 0.0, %v2165
        %2167 = vmatmul.bf16.gmra.mxu0 %v1795
        %v2168 = vpop.f32.mrf.mxu0
        %v2169 = vadd.f32 0.0, %v2168
        %v2170 = vpop.f32.mrf.mxu0
        %v2171 = vadd.f32 0.0, %v2170
        %2172 = vmatmul.bf16.gmra.mxu0 %v1798
        %v2173 = vpop.f32.mrf.mxu0
        %v2174 = vadd.f32 0.0, %v2173
        %v2175 = vpop.f32.mrf.mxu0
        %v2176 = vadd.f32 0.0, %v2175
        %2177 = vmatmul.bf16.gmra.mxu0 %v1801
        %v2178 = vpop.f32.mrf.mxu0
        %v2179 = vadd.f32 0.0, %v2178
        %v2180 = vpop.f32.mrf.mxu0
        %v2181 = vadd.f32 0.0, %v2180
        %2182 = vmatmul.bf16.gmra.mxu0 %v1804
        %v2183 = vpop.f32.mrf.mxu0
        %v2184 = vadd.f32 0.0, %v2183
        %v2185 = vpop.f32.mrf.mxu0
        %v2186 = vadd.f32 0.0, %v2185
        %2187 = vmatmul.bf16.gmra.mxu0 %v1807
        %v2188 = vpop.f32.mrf.mxu0
        %v2189 = vadd.f32 0.0, %v2188
        %v2190 = vpop.f32.mrf.mxu0
        %v2191 = vadd.f32 0.0, %v2190
        %2192 = vdwg.mxu0
        %v2193 = vadd.f32 %v2126, %v2154
        %v2194 = vadd.f32 %v2127, %v2156
        %v2195 = vadd.f32 %v2128, %v2159
        %v2196 = vadd.f32 %v2129, %v2161
        %v2197 = vadd.f32 %v2130, %v2164
        %v2198 = vadd.f32 %v2131, %v2166
        %v2199 = vadd.f32 %v2132, %v2169
        %v2200 = vadd.f32 %v2133, %v2171
        %v2201 = vadd.f32 %v2134, %v2174
        %v2202 = vadd.f32 %v2135, %v2176
        %v2203 = vadd.f32 %v2136, %v2179
        %v2204 = vadd.f32 %v2137, %v2181
        %v2205 = vadd.f32 %v2138, %v2184
        %v2206 = vadd.f32 %v2139, %v2186
        %v2207 = vadd.f32 %v2140, %v2189
        %v2208 = vadd.f32 %v2141, %v2191
        %v2209 = vxor.u32 %v2193, 2147483648
        %v2210 = vxor.u32 %v2194, 2147483648
        %v2211 = vxor.u32 %v2195, 2147483648
        %v2212 = vxor.u32 %v2196, 2147483648
        %v2213 = vxor.u32 %v2197, 2147483648
        %v2214 = vxor.u32 %v2198, 2147483648
        %v2215 = vxor.u32 %v2199, 2147483648
        %v2216 = vxor.u32 %v2200, 2147483648
        %v2217 = vxor.u32 %v2201, 2147483648
        %v2218 = vxor.u32 %v2202, 2147483648
        %v2219 = vxor.u32 %v2203, 2147483648
        %v2220 = vxor.u32 %v2204, 2147483648
        %v2221 = vmul.f32 %v2209, 1.442695
        %v2222 = vpow.pop %v2221
        %v2223 = vmul.f32 %v2210, 1.442695
        %v2224 = vpow.pop %v2223
        %v2225 = vmul.f32 %v2211, 1.442695
        %v2226 = vpow.pop %v2225
        %v2227 = vmul.f32 %v2212, 1.442695
        %v2228 = vpow.pop %v2227
        %v2229 = vmul.f32 %v2213, 1.442695
        %v2230 = vpow.pop %v2229
        %v2231 = vmul.f32 %v2214, 1.442695
        %v2232 = vpow.pop %v2231
        %v2233 = vmul.f32 %v2215, 1.442695
        %v2234 = vpow.pop %v2233
        %v2235 = vmul.f32 %v2216, 1.442695
        %v2236 = vpow.pop %v2235
        %v2237 = vmul.f32 %v2217, 1.442695
        %v2238 = vpow.pop %v2237
        %v2239 = vmul.f32 %v2218, 1.442695
        %v2240 = vpow.pop %v2239
        %v2241 = vmul.f32 %v2219, 1.442695
        %v2242 = vpow.pop %v2241
        %v2243 = vmul.f32 %v2220, 1.442695
        %v2244 = vpow.pop %v2243
        %v2245 = vadd.f32 %v2222, 1.0
        %v2246 = vadd.f32 %v2224, 1.0
        %v2247 = vadd.f32 %v2226, 1.0
        %v2248 = vadd.f32 %v2228, 1.0
        %v2249 = vadd.f32 %v2230, 1.0
        %v2250 = vadd.f32 %v2232, 1.0
        %v2251 = vadd.f32 %v2234, 1.0
        %v2252 = vadd.f32 %v2236, 1.0
        %v2253 = vadd.f32 %v2238, 1.0
        %v2254 = vadd.f32 %v2240, 1.0
        %v2255 = vadd.f32 %v2242, 1.0
        %v2256 = vadd.f32 %v2244, 1.0
        %v2257 = vrcp.pop %v2245
        %v2258 = vmul.f32 %v2245, %v2257
        %v2259 = vsub.f32 1.0, %v2258
        %v2260 = vmul.f32 %v2257, %v2259
        %v2261 = vadd.f32 %v2257, %v2260
        %vm2262 = vweird.f32 %v2245
        %vm2263 = vweird.f32 %v2257
        %vm2264 = vmor %vm2262, %vm2263
        %v2265 = vsel %vm2264, %v2257, %v2261
        %v2266 = vand.u32 2147483647, %v2245
        %vm2267 = vcmp.eq.f32.partialorder %v2266, 8.507059e+37
        %v2268 = vand.u32 %v2245, 2147483648
        %v2269 = vor.u32 1.1754944e-38, %v2268
        %v2270 = vsel %vm2267, %v2269, %v2265
        %v2271 = vmul.f32 1.0, %v2270
        %v2272 = vrcp.pop %v2246
        %v2273 = vmul.f32 %v2246, %v2272
        %v2274 = vsub.f32 1.0, %v2273
        %v2275 = vmul.f32 %v2272, %v2274
        %v2276 = vadd.f32 %v2272, %v2275
        %vm2277 = vweird.f32 %v2246
        %vm2278 = vweird.f32 %v2272
        %vm2279 = vmor %vm2277, %vm2278
        %v2280 = vsel %vm2279, %v2272, %v2276
        %v2281 = vand.u32 2147483647, %v2246
        %vm2282 = vcmp.eq.f32.partialorder %v2281, 8.507059e+37
        %v2283 = vand.u32 %v2246, 2147483648
        %v2284 = vor.u32 1.1754944e-38, %v2283
        %v2285 = vsel %vm2282, %v2284, %v2280
        %v2286 = vmul.f32 1.0, %v2285
        %v2287 = vrcp.pop %v2247
        %v2288 = vmul.f32 %v2247, %v2287
        %v2289 = vsub.f32 1.0, %v2288
        %v2290 = vmul.f32 %v2287, %v2289
        %v2291 = vadd.f32 %v2287, %v2290
        %vm2292 = vweird.f32 %v2247
        %vm2293 = vweird.f32 %v2287
        %vm2294 = vmor %vm2292, %vm2293
        %v2295 = vsel %vm2294, %v2287, %v2291
        %v2296 = vand.u32 2147483647, %v2247
        %vm2297 = vcmp.eq.f32.partialorder %v2296, 8.507059e+37
        %v2298 = vand.u32 %v2247, 2147483648
        %v2299 = vor.u32 1.1754944e-38, %v2298
        %v2300 = vsel %vm2297, %v2299, %v2295
        %v2301 = vmul.f32 1.0, %v2300
        %v2302 = vrcp.pop %v2248
        %v2303 = vmul.f32 %v2248, %v2302
        %v2304 = vsub.f32 1.0, %v2303
        %v2305 = vmul.f32 %v2302, %v2304
        %v2306 = vadd.f32 %v2302, %v2305
        %vm2307 = vweird.f32 %v2248
        %vm2308 = vweird.f32 %v2302
        %vm2309 = vmor %vm2307, %vm2308
        %v2310 = vsel %vm2309, %v2302, %v2306
        %v2311 = vand.u32 2147483647, %v2248
        %vm2312 = vcmp.eq.f32.partialorder %v2311, 8.507059e+37
        %v2313 = vand.u32 %v2248, 2147483648
        %v2314 = vor.u32 1.1754944e-38, %v2313
        %v2315 = vsel %vm2312, %v2314, %v2310
        %v2316 = vmul.f32 1.0, %v2315
        %v2317 = vrcp.pop %v2249
        %v2318 = vmul.f32 %v2249, %v2317
        %v2319 = vsub.f32 1.0, %v2318
        %v2320 = vmul.f32 %v2317, %v2319
        %v2321 = vadd.f32 %v2317, %v2320
        %vm2322 = vweird.f32 %v2249
        %vm2323 = vweird.f32 %v2317
        %vm2324 = vmor %vm2322, %vm2323
        %v2325 = vsel %vm2324, %v2317, %v2321
        %v2326 = vand.u32 2147483647, %v2249
        %vm2327 = vcmp.eq.f32.partialorder %v2326, 8.507059e+37
        %v2328 = vand.u32 %v2249, 2147483648
        %v2329 = vor.u32 1.1754944e-38, %v2328
        %v2330 = vsel %vm2327, %v2329, %v2325
        %v2331 = vmul.f32 1.0, %v2330
        %v2332 = vrcp.pop %v2250
        %v2333 = vmul.f32 %v2250, %v2332
        %v2334 = vsub.f32 1.0, %v2333
        %v2335 = vmul.f32 %v2332, %v2334
        %v2336 = vadd.f32 %v2332, %v2335
        %vm2337 = vweird.f32 %v2250
        %vm2338 = vweird.f32 %v2332
        %vm2339 = vmor %vm2337, %vm2338
        %v2340 = vsel %vm2339, %v2332, %v2336
        %v2341 = vand.u32 2147483647, %v2250
        %vm2342 = vcmp.eq.f32.partialorder %v2341, 8.507059e+37
        %v2343 = vand.u32 %v2250, 2147483648
        %v2344 = vor.u32 1.1754944e-38, %v2343
        %v2345 = vsel %vm2342, %v2344, %v2340
        %v2346 = vmul.f32 1.0, %v2345
        %v2347 = vrcp.pop %v2251
        %v2348 = vmul.f32 %v2251, %v2347
        %v2349 = vsub.f32 1.0, %v2348
        %v2350 = vmul.f32 %v2347, %v2349
        %v2351 = vadd.f32 %v2347, %v2350
        %vm2352 = vweird.f32 %v2251
        %vm2353 = vweird.f32 %v2347
        %vm2354 = vmor %vm2352, %vm2353
        %v2355 = vsel %vm2354, %v2347, %v2351
        %v2356 = vand.u32 2147483647, %v2251
        %vm2357 = vcmp.eq.f32.partialorder %v2356, 8.507059e+37
        %v2358 = vand.u32 %v2251, 2147483648
        %v2359 = vor.u32 1.1754944e-38, %v2358
        %v2360 = vsel %vm2357, %v2359, %v2355
        %v2361 = vmul.f32 1.0, %v2360
        %v2362 = vrcp.pop %v2252
        %v2363 = vmul.f32 %v2252, %v2362
        %v2364 = vsub.f32 1.0, %v2363
        %v2365 = vmul.f32 %v2362, %v2364
        %v2366 = vadd.f32 %v2362, %v2365
        %vm2367 = vweird.f32 %v2252
        %vm2368 = vweird.f32 %v2362
        %vm2369 = vmor %vm2367, %vm2368
        %v2370 = vsel %vm2369, %v2362, %v2366
        %v2371 = vand.u32 2147483647, %v2252
        %vm2372 = vcmp.eq.f32.partialorder %v2371, 8.507059e+37
        %v2373 = vand.u32 %v2252, 2147483648
        %v2374 = vor.u32 1.1754944e-38, %v2373
        %v2375 = vsel %vm2372, %v2374, %v2370
        %v2376 = vmul.f32 1.0, %v2375
        %v2377 = vrcp.pop %v2253
        %v2378 = vmul.f32 %v2253, %v2377
        %v2379 = vsub.f32 1.0, %v2378
        %v2380 = vmul.f32 %v2377, %v2379
        %v2381 = vadd.f32 %v2377, %v2380
        %vm2382 = vweird.f32 %v2253
        %vm2383 = vweird.f32 %v2377
        %vm2384 = vmor %vm2382, %vm2383
        %v2385 = vsel %vm2384, %v2377, %v2381
        %v2386 = vand.u32 2147483647, %v2253
        %vm2387 = vcmp.eq.f32.partialorder %v2386, 8.507059e+37
        %v2388 = vand.u32 %v2253, 2147483648
        %v2389 = vor.u32 1.1754944e-38, %v2388
        %v2390 = vsel %vm2387, %v2389, %v2385
        %v2391 = vmul.f32 1.0, %v2390
        %v2392 = vrcp.pop %v2254
        %v2393 = vmul.f32 %v2254, %v2392
        %v2394 = vsub.f32 1.0, %v2393
        %v2395 = vmul.f32 %v2392, %v2394
        %v2396 = vadd.f32 %v2392, %v2395
        %vm2397 = vweird.f32 %v2254
        %vm2398 = vweird.f32 %v2392
        %vm2399 = vmor %vm2397, %vm2398
        %v2400 = vsel %vm2399, %v2392, %v2396
        %v2401 = vand.u32 2147483647, %v2254
        %vm2402 = vcmp.eq.f32.partialorder %v2401, 8.507059e+37
        %v2403 = vand.u32 %v2254, 2147483648
        %v2404 = vor.u32 1.1754944e-38, %v2403
        %v2405 = vsel %vm2402, %v2404, %v2400
        %v2406 = vmul.f32 1.0, %v2405
        %v2407 = vrcp.pop %v2255
        %v2408 = vmul.f32 %v2255, %v2407
        %v2409 = vsub.f32 1.0, %v2408
        %v2410 = vmul.f32 %v2407, %v2409
        %v2411 = vadd.f32 %v2407, %v2410
        %vm2412 = vweird.f32 %v2255
        %vm2413 = vweird.f32 %v2407
        %vm2414 = vmor %vm2412, %vm2413
        %v2415 = vsel %vm2414, %v2407, %v2411
        %v2416 = vand.u32 2147483647, %v2255
        %vm2417 = vcmp.eq.f32.partialorder %v2416, 8.507059e+37
        %v2418 = vand.u32 %v2255, 2147483648
        %v2419 = vor.u32 1.1754944e-38, %v2418
        %v2420 = vsel %vm2417, %v2419, %v2415
        %v2421 = vmul.f32 1.0, %v2420
        %v2422 = vrcp.pop %v2256
        %v2423 = vmul.f32 %v2256, %v2422
        %v2424 = vsub.f32 1.0, %v2423
        %v2425 = vmul.f32 %v2422, %v2424
        %v2426 = vadd.f32 %v2422, %v2425
        %vm2427 = vweird.f32 %v2256
        %vm2428 = vweird.f32 %v2422
        %vm2429 = vmor %vm2427, %vm2428
        %v2430 = vsel %vm2429, %v2422, %v2426
        %v2431 = vand.u32 2147483647, %v2256
        %vm2432 = vcmp.eq.f32.partialorder %v2431, 8.507059e+37
        %v2433 = vand.u32 %v2256, 2147483648
        %v2434 = vor.u32 1.1754944e-38, %v2433
        %v2435 = vsel %vm2432, %v2434, %v2430
        %v2436 = vmul.f32 1.0, %v2435
        %v2437 = vtanh.pop %v2205
        %v2438 = vtanh.pop %v2206
        %v2439 = vtanh.pop %v2207
        %v2440 = vtanh.pop %v2208
        %v2441 = vmul.f32 %v2331, %v2114
        %v2442 = vmul.f32 %v2346, %v2115
        %v2443 = vmul.f32 %v2361, %v2116
        %v2444 = vmul.f32 %v2376, %v2117
        %v2445 = vmul.f32 %v2271, %v2437
        %v2446 = vmul.f32 %v2286, %v2438
        %v2447 = vmul.f32 %v2301, %v2439
        %v2448 = vmul.f32 %v2316, %v2440
        %v2449 = vadd.f32 %v2441, %v2445
        %v2450 = vadd.f32 %v2442, %v2446
        %v2451 = vadd.f32 %v2443, %v2447
        %v2452 = vadd.f32 %v2444, %v2448
        %v2453 = vtanh.pop %v2449
        %v2454 = vtanh.pop %v2450
        %v2455 = vtanh.pop %v2451
        %v2456 = vtanh.pop %v2452
        %v2457 = vmul.f32 %v2391, %v2453
        %v2458 = vmul.f32 %v2406, %v2454
        %v2459 = vmul.f32 %v2421, %v2455
        %v2460 = vmul.f32 %v2436, %v2456
        %v2461 = vld [vmem:[%s993] sm:$0xff]
        %v2462 = vld [vmem:[%s993 + $0x8] sm:$0xff]
        %v2463 = vld [vmem:[%s993 + $0x10] sm:$0xff]
        %v2464 = vld [vmem:[%s993 + $0x18] sm:$0xff]
        %v2465 = vld [vmem:[%s993 + $0x20] sm:$0xff]
        %v2466 = vld [vmem:[%s993 + $0x28] sm:$0xff]
        %v2467 = vld [vmem:[%s993 + $0x30] sm:$0xff]
        %v2468 = vld [vmem:[%s993 + $0x38] sm:$0xff]
        %v2469 = vld [vmem:[%s993 + $0x40] sm:$0xff]
        %v2470 = vld [vmem:[%s993 + $0x48] sm:$0xff]
        %v2471 = vld [vmem:[%s993 + $0x50] sm:$0xff]
        %v2472 = vld [vmem:[%s993 + $0x58] sm:$0xff]
        %v2473 = vld [vmem:[%s993 + $0x60] sm:$0xff]
        %v2474 = vld [vmem:[%s993 + $0x68] sm:$0xff]
        %v2475 = vld [vmem:[%s993 + $0x70] sm:$0xff]
        %v2476 = vld [vmem:[%s993 + $0x78] sm:$0xff]
        %v2477 = vpack.c.bf16 %v2458, %v2457
        %v2478 = vpack.c.bf16 %v2460, %v2459
        %2479 = vmatpush.bf16.msra.mxu0 0
        %2480 = vmatpush.bf16.msra.mxu0 0
        %2481 = vmatpush.bf16.msra.mxu0 0
        %2482 = vmatpush.bf16.msra.mxu0 0
        %2483 = vmatpush.bf16.msra.mxu0 0
        %2484 = vmatpush.bf16.msra.mxu0 0
        %2485 = vmatpush.bf16.msra.mxu0 %v2478
        %2486 = vmatpush.bf16.msra.mxu0 %v2477
        %2487 = vmatmul.bf16.gmra.mxu0 %v1786
        %v2488 = vpop.f32.mrf.mxu0
        %v2489 = vadd.f32 0.0, %v2488
        %v2490 = vpop.f32.mrf.mxu0
        %v2491 = vadd.f32 0.0, %v2490
        %2492 = vmatmul.bf16.gmra.mxu0 %v1789
        %v2493 = vpop.f32.mrf.mxu0
        %v2494 = vadd.f32 0.0, %v2493
        %v2495 = vpop.f32.mrf.mxu0
        %v2496 = vadd.f32 0.0, %v2495
        %2497 = vmatmul.bf16.gmra.mxu0 %v1792
        %v2498 = vpop.f32.mrf.mxu0
        %v2499 = vadd.f32 0.0, %v2498
        %v2500 = vpop.f32.mrf.mxu0
        %v2501 = vadd.f32 0.0, %v2500
        %2502 = vmatmul.bf16.gmra.mxu0 %v1795
        %v2503 = vpop.f32.mrf.mxu0
        %v2504 = vadd.f32 0.0, %v2503
        %v2505 = vpop.f32.mrf.mxu0
        %v2506 = vadd.f32 0.0, %v2505
        %2507 = vmatmul.bf16.gmra.mxu0 %v1798
        %v2508 = vpop.f32.mrf.mxu0
        %v2509 = vadd.f32 0.0, %v2508
        %v2510 = vpop.f32.mrf.mxu0
        %v2511 = vadd.f32 0.0, %v2510
        %2512 = vmatmul.bf16.gmra.mxu0 %v1801
        %v2513 = vpop.f32.mrf.mxu0
        %v2514 = vadd.f32 0.0, %v2513
        %v2515 = vpop.f32.mrf.mxu0
        %v2516 = vadd.f32 0.0, %v2515
        %2517 = vmatmul.bf16.gmra.mxu0 %v1804
        %v2518 = vpop.f32.mrf.mxu0
        %v2519 = vadd.f32 0.0, %v2518
        %v2520 = vpop.f32.mrf.mxu0
        %v2521 = vadd.f32 0.0, %v2520
        %2522 = vmatmul.bf16.gmra.mxu0 %v1807
        %v2523 = vpop.f32.mrf.mxu0
        %v2524 = vadd.f32 0.0, %v2523
        %v2525 = vpop.f32.mrf.mxu0
        %v2526 = vadd.f32 0.0, %v2525
        %2527 = vdwg.mxu0
        %v2528 = vadd.f32 %v2461, %v2489
        %v2529 = vadd.f32 %v2462, %v2491
        %v2530 = vadd.f32 %v2463, %v2494
        %v2531 = vadd.f32 %v2464, %v2496
        %v2532 = vadd.f32 %v2465, %v2499
        %v2533 = vadd.f32 %v2466, %v2501
        %v2534 = vadd.f32 %v2467, %v2504
        %v2535 = vadd.f32 %v2468, %v2506
        %v2536 = vadd.f32 %v2469, %v2509
        %v2537 = vadd.f32 %v2470, %v2511
        %v2538 = vadd.f32 %v2471, %v2514
        %v2539 = vadd.f32 %v2472, %v2516
        %v2540 = vadd.f32 %v2473, %v2519
        %v2541 = vadd.f32 %v2474, %v2521
        %v2542 = vadd.f32 %v2475, %v2524
        %v2543 = vadd.f32 %v2476, %v2526
        %v2544 = vxor.u32 %v2528, 2147483648
        %v2545 = vxor.u32 %v2529, 2147483648
        %v2546 = vxor.u32 %v2530, 2147483648
        %v2547 = vxor.u32 %v2531, 2147483648
        %v2548 = vxor.u32 %v2532, 2147483648
        %v2549 = vxor.u32 %v2533, 2147483648
        %v2550 = vxor.u32 %v2534, 2147483648
        %v2551 = vxor.u32 %v2535, 2147483648
        %v2552 = vxor.u32 %v2536, 2147483648
        %v2553 = vxor.u32 %v2537, 2147483648
        %v2554 = vxor.u32 %v2538, 2147483648
        %v2555 = vxor.u32 %v2539, 2147483648
        %v2556 = vmul.f32 %v2544, 1.442695
        %v2557 = vpow.pop %v2556
        %v2558 = vmul.f32 %v2545, 1.442695
        %v2559 = vpow.pop %v2558
        %v2560 = vmul.f32 %v2546, 1.442695
        %v2561 = vpow.pop %v2560
        %v2562 = vmul.f32 %v2547, 1.442695
        %v2563 = vpow.pop %v2562
        %v2564 = vmul.f32 %v2548, 1.442695
        %v2565 = vpow.pop %v2564
        %v2566 = vmul.f32 %v2549, 1.442695
        %v2567 = vpow.pop %v2566
        %v2568 = vmul.f32 %v2550, 1.442695
        %v2569 = vpow.pop %v2568
        %v2570 = vmul.f32 %v2551, 1.442695
        %v2571 = vpow.pop %v2570
        %v2572 = vmul.f32 %v2552, 1.442695
        %v2573 = vpow.pop %v2572
        %v2574 = vmul.f32 %v2553, 1.442695
        %v2575 = vpow.pop %v2574
        %v2576 = vmul.f32 %v2554, 1.442695
        %v2577 = vpow.pop %v2576
        %v2578 = vmul.f32 %v2555, 1.442695
        %v2579 = vpow.pop %v2578
        %v2580 = vadd.f32 %v2557, 1.0
        %v2581 = vadd.f32 %v2559, 1.0
        %v2582 = vadd.f32 %v2561, 1.0
        %v2583 = vadd.f32 %v2563, 1.0
        %v2584 = vadd.f32 %v2565, 1.0
        %v2585 = vadd.f32 %v2567, 1.0
        %v2586 = vadd.f32 %v2569, 1.0
        %v2587 = vadd.f32 %v2571, 1.0
        %v2588 = vadd.f32 %v2573, 1.0
        %v2589 = vadd.f32 %v2575, 1.0
        %v2590 = vadd.f32 %v2577, 1.0
        %v2591 = vadd.f32 %v2579, 1.0
        %v2592 = vrcp.pop %v2580
        %v2593 = vmul.f32 %v2580, %v2592
        %v2594 = vsub.f32 1.0, %v2593
        %v2595 = vmul.f32 %v2592, %v2594
        %v2596 = vadd.f32 %v2592, %v2595
        %vm2597 = vweird.f32 %v2580
        %vm2598 = vweird.f32 %v2592
        %vm2599 = vmor %vm2597, %vm2598
        %v2600 = vsel %vm2599, %v2592, %v2596
        %v2601 = vand.u32 2147483647, %v2580
        %vm2602 = vcmp.eq.f32.partialorder %v2601, 8.507059e+37
        %v2603 = vand.u32 %v2580, 2147483648
        %v2604 = vor.u32 1.1754944e-38, %v2603
        %v2605 = vsel %vm2602, %v2604, %v2600
        %v2606 = vmul.f32 1.0, %v2605
        %v2607 = vrcp.pop %v2581
        %v2608 = vmul.f32 %v2581, %v2607
        %v2609 = vsub.f32 1.0, %v2608
        %v2610 = vmul.f32 %v2607, %v2609
        %v2611 = vadd.f32 %v2607, %v2610
        %vm2612 = vweird.f32 %v2581
        %vm2613 = vweird.f32 %v2607
        %vm2614 = vmor %vm2612, %vm2613
        %v2615 = vsel %vm2614, %v2607, %v2611
        %v2616 = vand.u32 2147483647, %v2581
        %vm2617 = vcmp.eq.f32.partialorder %v2616, 8.507059e+37
        %v2618 = vand.u32 %v2581, 2147483648
        %v2619 = vor.u32 1.1754944e-38, %v2618
        %v2620 = vsel %vm2617, %v2619, %v2615
        %v2621 = vmul.f32 1.0, %v2620
        %v2622 = vrcp.pop %v2582
        %v2623 = vmul.f32 %v2582, %v2622
        %v2624 = vsub.f32 1.0, %v2623
        %v2625 = vmul.f32 %v2622, %v2624
        %v2626 = vadd.f32 %v2622, %v2625
        %vm2627 = vweird.f32 %v2582
        %vm2628 = vweird.f32 %v2622
        %vm2629 = vmor %vm2627, %vm2628
        %v2630 = vsel %vm2629, %v2622, %v2626
        %v2631 = vand.u32 2147483647, %v2582
        %vm2632 = vcmp.eq.f32.partialorder %v2631, 8.507059e+37
        %v2633 = vand.u32 %v2582, 2147483648
        %v2634 = vor.u32 1.1754944e-38, %v2633
        %v2635 = vsel %vm2632, %v2634, %v2630
        %v2636 = vmul.f32 1.0, %v2635
        %v2637 = vrcp.pop %v2583
        %v2638 = vmul.f32 %v2583, %v2637
        %v2639 = vsub.f32 1.0, %v2638
        %v2640 = vmul.f32 %v2637, %v2639
        %v2641 = vadd.f32 %v2637, %v2640
        %vm2642 = vweird.f32 %v2583
        %vm2643 = vweird.f32 %v2637
        %vm2644 = vmor %vm2642, %vm2643
        %v2645 = vsel %vm2644, %v2637, %v2641
        %v2646 = vand.u32 2147483647, %v2583
        %vm2647 = vcmp.eq.f32.partialorder %v2646, 8.507059e+37
        %v2648 = vand.u32 %v2583, 2147483648
        %v2649 = vor.u32 1.1754944e-38, %v2648
        %v2650 = vsel %vm2647, %v2649, %v2645
        %v2651 = vmul.f32 1.0, %v2650
        %v2652 = vrcp.pop %v2584
        %v2653 = vmul.f32 %v2584, %v2652
        %v2654 = vsub.f32 1.0, %v2653
        %v2655 = vmul.f32 %v2652, %v2654
        %v2656 = vadd.f32 %v2652, %v2655
        %vm2657 = vweird.f32 %v2584
        %vm2658 = vweird.f32 %v2652
        %vm2659 = vmor %vm2657, %vm2658
        %v2660 = vsel %vm2659, %v2652, %v2656
        %v2661 = vand.u32 2147483647, %v2584
        %vm2662 = vcmp.eq.f32.partialorder %v2661, 8.507059e+37
        %v2663 = vand.u32 %v2584, 2147483648
        %v2664 = vor.u32 1.1754944e-38, %v2663
        %v2665 = vsel %vm2662, %v2664, %v2660
        %v2666 = vmul.f32 1.0, %v2665
        %v2667 = vrcp.pop %v2585
        %v2668 = vmul.f32 %v2585, %v2667
        %v2669 = vsub.f32 1.0, %v2668
        %v2670 = vmul.f32 %v2667, %v2669
        %v2671 = vadd.f32 %v2667, %v2670
        %vm2672 = vweird.f32 %v2585
        %vm2673 = vweird.f32 %v2667
        %vm2674 = vmor %vm2672, %vm2673
        %v2675 = vsel %vm2674, %v2667, %v2671
        %v2676 = vand.u32 2147483647, %v2585
        %vm2677 = vcmp.eq.f32.partialorder %v2676, 8.507059e+37
        %v2678 = vand.u32 %v2585, 2147483648
        %v2679 = vor.u32 1.1754944e-38, %v2678
        %v2680 = vsel %vm2677, %v2679, %v2675
        %v2681 = vmul.f32 1.0, %v2680
        %v2682 = vrcp.pop %v2586
        %v2683 = vmul.f32 %v2586, %v2682
        %v2684 = vsub.f32 1.0, %v2683
        %v2685 = vmul.f32 %v2682, %v2684
        %v2686 = vadd.f32 %v2682, %v2685
        %vm2687 = vweird.f32 %v2586
        %vm2688 = vweird.f32 %v2682
        %vm2689 = vmor %vm2687, %vm2688
        %v2690 = vsel %vm2689, %v2682, %v2686
        %v2691 = vand.u32 2147483647, %v2586
        %vm2692 = vcmp.eq.f32.partialorder %v2691, 8.507059e+37
        %v2693 = vand.u32 %v2586, 2147483648
        %v2694 = vor.u32 1.1754944e-38, %v2693
        %v2695 = vsel %vm2692, %v2694, %v2690
        %v2696 = vmul.f32 1.0, %v2695
        %v2697 = vrcp.pop %v2587
        %v2698 = vmul.f32 %v2587, %v2697
        %v2699 = vsub.f32 1.0, %v2698
        %v2700 = vmul.f32 %v2697, %v2699
        %v2701 = vadd.f32 %v2697, %v2700
        %vm2702 = vweird.f32 %v2587
        %vm2703 = vweird.f32 %v2697
        %vm2704 = vmor %vm2702, %vm2703
        %v2705 = vsel %vm2704, %v2697, %v2701
        %v2706 = vand.u32 2147483647, %v2587
        %vm2707 = vcmp.eq.f32.partialorder %v2706, 8.507059e+37
        %v2708 = vand.u32 %v2587, 2147483648
        %v2709 = vor.u32 1.1754944e-38, %v2708
        %v2710 = vsel %vm2707, %v2709, %v2705
        %v2711 = vmul.f32 1.0, %v2710
        %v2712 = vrcp.pop %v2588
        %v2713 = vmul.f32 %v2588, %v2712
        %v2714 = vsub.f32 1.0, %v2713
        %v2715 = vmul.f32 %v2712, %v2714
        %v2716 = vadd.f32 %v2712, %v2715
        %vm2717 = vweird.f32 %v2588
        %vm2718 = vweird.f32 %v2712
        %vm2719 = vmor %vm2717, %vm2718
        %v2720 = vsel %vm2719, %v2712, %v2716
        %v2721 = vand.u32 2147483647, %v2588
        %vm2722 = vcmp.eq.f32.partialorder %v2721, 8.507059e+37
        %v2723 = vand.u32 %v2588, 2147483648
        %v2724 = vor.u32 1.1754944e-38, %v2723
        %v2725 = vsel %vm2722, %v2724, %v2720
        %v2726 = vmul.f32 1.0, %v2725
        %v2727 = vrcp.pop %v2589
        %v2728 = vmul.f32 %v2589, %v2727
        %v2729 = vsub.f32 1.0, %v2728
        %v2730 = vmul.f32 %v2727, %v2729
        %v2731 = vadd.f32 %v2727, %v2730
        %vm2732 = vweird.f32 %v2589
        %vm2733 = vweird.f32 %v2727
        %vm2734 = vmor %vm2732, %vm2733
        %v2735 = vsel %vm2734, %v2727, %v2731
        %v2736 = vand.u32 2147483647, %v2589
        %vm2737 = vcmp.eq.f32.partialorder %v2736, 8.507059e+37
        %v2738 = vand.u32 %v2589, 2147483648
        %v2739 = vor.u32 1.1754944e-38, %v2738
        %v2740 = vsel %vm2737, %v2739, %v2735
        %v2741 = vmul.f32 1.0, %v2740
        %v2742 = vrcp.pop %v2590
        %v2743 = vmul.f32 %v2590, %v2742
        %v2744 = vsub.f32 1.0, %v2743
        %v2745 = vmul.f32 %v2742, %v2744
        %v2746 = vadd.f32 %v2742, %v2745
        %vm2747 = vweird.f32 %v2590
        %vm2748 = vweird.f32 %v2742
        %vm2749 = vmor %vm2747, %vm2748
        %v2750 = vsel %vm2749, %v2742, %v2746
        %v2751 = vand.u32 2147483647, %v2590
        %vm2752 = vcmp.eq.f32.partialorder %v2751, 8.507059e+37
        %v2753 = vand.u32 %v2590, 2147483648
        %v2754 = vor.u32 1.1754944e-38, %v2753
        %v2755 = vsel %vm2752, %v2754, %v2750
        %v2756 = vmul.f32 1.0, %v2755
        %v2757 = vrcp.pop %v2591
        %v2758 = vmul.f32 %v2591, %v2757
        %v2759 = vsub.f32 1.0, %v2758
        %v2760 = vmul.f32 %v2757, %v2759
        %v2761 = vadd.f32 %v2757, %v2760
        %vm2762 = vweird.f32 %v2591
        %vm2763 = vweird.f32 %v2757
        %vm2764 = vmor %vm2762, %vm2763
        %v2765 = vsel %vm2764, %v2757, %v2761
        %v2766 = vand.u32 2147483647, %v2591
        %vm2767 = vcmp.eq.f32.partialorder %v2766, 8.507059e+37
        %v2768 = vand.u32 %v2591, 2147483648
        %v2769 = vor.u32 1.1754944e-38, %v2768
        %v2770 = vsel %vm2767, %v2769, %v2765
        %v2771 = vmul.f32 1.0, %v2770
        %v2772 = vtanh.pop %v2540
        %v2773 = vtanh.pop %v2541
        %v2774 = vtanh.pop %v2542
        %v2775 = vtanh.pop %v2543
        %v2776 = vmul.f32 %v2666, %v2449
        %v2777 = vmul.f32 %v2681, %v2450
        %v2778 = vmul.f32 %v2696, %v2451
        %v2779 = vmul.f32 %v2711, %v2452
        %v2780 = vmul.f32 %v2606, %v2772
        %v2781 = vmul.f32 %v2621, %v2773
        %v2782 = vmul.f32 %v2636, %v2774
        %v2783 = vmul.f32 %v2651, %v2775
        %v2784 = vadd.f32 %v2776, %v2780
        %v2785 = vadd.f32 %v2777, %v2781
        %v2786 = vadd.f32 %v2778, %v2782
        %v2787 = vadd.f32 %v2779, %v2783
        %v2788 = vtanh.pop %v2784
        %v2789 = vtanh.pop %v2785
        %v2790 = vtanh.pop %v2786
        %v2791 = vtanh.pop %v2787
        %v2792 = vmul.f32 %v2726, %v2788
        %v2793 = vmul.f32 %v2741, %v2789
        %v2794 = vmul.f32 %v2756, %v2790
        %v2795 = vmul.f32 %v2771, %v2791
        %v2796 = vld [vmem:[%s1105] sm:$0xff]
        %v2797 = vld [vmem:[%s1105 + $0x8] sm:$0xff]
        %v2798 = vld [vmem:[%s1105 + $0x10] sm:$0xff]
        %v2799 = vld [vmem:[%s1105 + $0x18] sm:$0xff]
        %v2800 = vld [vmem:[%s1105 + $0x20] sm:$0xff]
        %v2801 = vld [vmem:[%s1105 + $0x28] sm:$0xff]
        %v2802 = vld [vmem:[%s1105 + $0x30] sm:$0xff]
        %v2803 = vld [vmem:[%s1105 + $0x38] sm:$0xff]
        %v2804 = vld [vmem:[%s1105 + $0x40] sm:$0xff]
        %v2805 = vld [vmem:[%s1105 + $0x48] sm:$0xff]
        %v2806 = vld [vmem:[%s1105 + $0x50] sm:$0xff]
        %v2807 = vld [vmem:[%s1105 + $0x58] sm:$0xff]
        %v2808 = vld [vmem:[%s1105 + $0x60] sm:$0xff]
        %v2809 = vld [vmem:[%s1105 + $0x68] sm:$0xff]
        %v2810 = vld [vmem:[%s1105 + $0x70] sm:$0xff]
        %v2811 = vld [vmem:[%s1105 + $0x78] sm:$0xff]
        %v2812 = vpack.c.bf16 %v2793, %v2792
        %v2813 = vpack.c.bf16 %v2795, %v2794
        %2814 = vmatpush.bf16.msra.mxu0 0
        %2815 = vmatpush.bf16.msra.mxu0 0
        %2816 = vmatpush.bf16.msra.mxu0 0
        %2817 = vmatpush.bf16.msra.mxu0 0
        %2818 = vmatpush.bf16.msra.mxu0 0
        %2819 = vmatpush.bf16.msra.mxu0 0
        %2820 = vmatpush.bf16.msra.mxu0 %v2813
        %2821 = vmatpush.bf16.msra.mxu0 %v2812
        %2822 = vmatmul.bf16.gmra.mxu0 %v1786
        %v2823 = vpop.f32.mrf.mxu0
        %v2824 = vadd.f32 0.0, %v2823
        %v2825 = vpop.f32.mrf.mxu0
        %v2826 = vadd.f32 0.0, %v2825
        %2827 = vmatmul.bf16.gmra.mxu0 %v1789
        %v2828 = vpop.f32.mrf.mxu0
        %v2829 = vadd.f32 0.0, %v2828
        %v2830 = vpop.f32.mrf.mxu0
        %v2831 = vadd.f32 0.0, %v2830
        %2832 = vmatmul.bf16.gmra.mxu0 %v1792
        %v2833 = vpop.f32.mrf.mxu0
        %v2834 = vadd.f32 0.0, %v2833
        %v2835 = vpop.f32.mrf.mxu0
        %v2836 = vadd.f32 0.0, %v2835
        %2837 = vmatmul.bf16.gmra.mxu0 %v1795
        %v2838 = vpop.f32.mrf.mxu0
        %v2839 = vadd.f32 0.0, %v2838
        %v2840 = vpop.f32.mrf.mxu0
        %v2841 = vadd.f32 0.0, %v2840
        %2842 = vmatmul.bf16.gmra.mxu0 %v1798
        %v2843 = vpop.f32.mrf.mxu0
        %v2844 = vadd.f32 0.0, %v2843
        %v2845 = vpop.f32.mrf.mxu0
        %v2846 = vadd.f32 0.0, %v2845
        %2847 = vmatmul.bf16.gmra.mxu0 %v1801
        %v2848 = vpop.f32.mrf.mxu0
        %v2849 = vadd.f32 0.0, %v2848
        %v2850 = vpop.f32.mrf.mxu0
        %v2851 = vadd.f32 0.0, %v2850
        %2852 = vmatmul.bf16.gmra.mxu0 %v1804
        %v2853 = vpop.f32.mrf.mxu0
        %v2854 = vadd.f32 0.0, %v2853
        %v2855 = vpop.f32.mrf.mxu0
        %v2856 = vadd.f32 0.0, %v2855
        %2857 = vmatmul.bf16.gmra.mxu0 %v1807
        %v2858 = vpop.f32.mrf.mxu0
        %v2859 = vadd.f32 0.0, %v2858
        %v2860 = vpop.f32.mrf.mxu0
        %v2861 = vadd.f32 0.0, %v2860
        %2862 = vdwg.mxu0
        %v2863 = vadd.f32 %v2796, %v2824
        %v2864 = vadd.f32 %v2797, %v2826
        %v2865 = vadd.f32 %v2798, %v2829
        %v2866 = vadd.f32 %v2799, %v2831
        %v2867 = vadd.f32 %v2800, %v2834
        %v2868 = vadd.f32 %v2801, %v2836
        %v2869 = vadd.f32 %v2802, %v2839
        %v2870 = vadd.f32 %v2803, %v2841
        %v2871 = vadd.f32 %v2804, %v2844
        %v2872 = vadd.f32 %v2805, %v2846
        %v2873 = vadd.f32 %v2806, %v2849
        %v2874 = vadd.f32 %v2807, %v2851
        %v2875 = vadd.f32 %v2808, %v2854
        %v2876 = vadd.f32 %v2809, %v2856
        %v2877 = vadd.f32 %v2810, %v2859
        %v2878 = vadd.f32 %v2811, %v2861
        %v2879 = vxor.u32 %v2863, 2147483648
        %v2880 = vxor.u32 %v2864, 2147483648
        %v2881 = vxor.u32 %v2865, 2147483648
        %v2882 = vxor.u32 %v2866, 2147483648
        %v2883 = vxor.u32 %v2867, 2147483648
        %v2884 = vxor.u32 %v2868, 2147483648
        %v2885 = vxor.u32 %v2869, 2147483648
        %v2886 = vxor.u32 %v2870, 2147483648
        %v2887 = vxor.u32 %v2871, 2147483648
        %v2888 = vxor.u32 %v2872, 2147483648
        %v2889 = vxor.u32 %v2873, 2147483648
        %v2890 = vxor.u32 %v2874, 2147483648
        %v2891 = vmul.f32 %v2879, 1.442695
        %v2892 = vpow.pop %v2891
        %v2893 = vmul.f32 %v2880, 1.442695
        %v2894 = vpow.pop %v2893
        %v2895 = vmul.f32 %v2881, 1.442695
        %v2896 = vpow.pop %v2895
        %v2897 = vmul.f32 %v2882, 1.442695
        %v2898 = vpow.pop %v2897
        %v2899 = vmul.f32 %v2883, 1.442695
        %v2900 = vpow.pop %v2899
        %v2901 = vmul.f32 %v2884, 1.442695
        %v2902 = vpow.pop %v2901
        %v2903 = vmul.f32 %v2885, 1.442695
        %v2904 = vpow.pop %v2903
        %v2905 = vmul.f32 %v2886, 1.442695
        %v2906 = vpow.pop %v2905
        %v2907 = vmul.f32 %v2887, 1.442695
        %v2908 = vpow.pop %v2907
        %v2909 = vmul.f32 %v2888, 1.442695
        %v2910 = vpow.pop %v2909
        %v2911 = vmul.f32 %v2889, 1.442695
        %v2912 = vpow.pop %v2911
        %v2913 = vmul.f32 %v2890, 1.442695
        %v2914 = vpow.pop %v2913
        %v2915 = vadd.f32 %v2892, 1.0
        %v2916 = vadd.f32 %v2894, 1.0
        %v2917 = vadd.f32 %v2896, 1.0
        %v2918 = vadd.f32 %v2898, 1.0
        %v2919 = vadd.f32 %v2900, 1.0
        %v2920 = vadd.f32 %v2902, 1.0
        %v2921 = vadd.f32 %v2904, 1.0
        %v2922 = vadd.f32 %v2906, 1.0
        %v2923 = vadd.f32 %v2908, 1.0
        %v2924 = vadd.f32 %v2910, 1.0
        %v2925 = vadd.f32 %v2912, 1.0
        %v2926 = vadd.f32 %v2914, 1.0
        %v2927 = vrcp.pop %v2915
        %v2928 = vmul.f32 %v2915, %v2927
        %v2929 = vsub.f32 1.0, %v2928
        %v2930 = vmul.f32 %v2927, %v2929
        %v2931 = vadd.f32 %v2927, %v2930
        %vm2932 = vweird.f32 %v2915
        %vm2933 = vweird.f32 %v2927
        %vm2934 = vmor %vm2932, %vm2933
        %v2935 = vsel %vm2934, %v2927, %v2931
        %v2936 = vand.u32 2147483647, %v2915
        %vm2937 = vcmp.eq.f32.partialorder %v2936, 8.507059e+37
        %v2938 = vand.u32 %v2915, 2147483648
        %v2939 = vor.u32 1.1754944e-38, %v2938
        %v2940 = vsel %vm2937, %v2939, %v2935
        %v2941 = vmul.f32 1.0, %v2940
        %v2942 = vrcp.pop %v2916
        %v2943 = vmul.f32 %v2916, %v2942
        %v2944 = vsub.f32 1.0, %v2943
        %v2945 = vmul.f32 %v2942, %v2944
        %v2946 = vadd.f32 %v2942, %v2945
        %vm2947 = vweird.f32 %v2916
        %vm2948 = vweird.f32 %v2942
        %vm2949 = vmor %vm2947, %vm2948
        %v2950 = vsel %vm2949, %v2942, %v2946
        %v2951 = vand.u32 2147483647, %v2916
        %vm2952 = vcmp.eq.f32.partialorder %v2951, 8.507059e+37
        %v2953 = vand.u32 %v2916, 2147483648
        %v2954 = vor.u32 1.1754944e-38, %v2953
        %v2955 = vsel %vm2952, %v2954, %v2950
        %v2956 = vmul.f32 1.0, %v2955
        %v2957 = vrcp.pop %v2917
        %v2958 = vmul.f32 %v2917, %v2957
        %v2959 = vsub.f32 1.0, %v2958
        %v2960 = vmul.f32 %v2957, %v2959
        %v2961 = vadd.f32 %v2957, %v2960
        %vm2962 = vweird.f32 %v2917
        %vm2963 = vweird.f32 %v2957
        %vm2964 = vmor %vm2962, %vm2963
        %v2965 = vsel %vm2964, %v2957, %v2961
        %v2966 = vand.u32 2147483647, %v2917
        %vm2967 = vcmp.eq.f32.partialorder %v2966, 8.507059e+37
        %v2968 = vand.u32 %v2917, 2147483648
        %v2969 = vor.u32 1.1754944e-38, %v2968
        %v2970 = vsel %vm2967, %v2969, %v2965
        %v2971 = vmul.f32 1.0, %v2970
        %v2972 = vrcp.pop %v2918
        %v2973 = vmul.f32 %v2918, %v2972
        %v2974 = vsub.f32 1.0, %v2973
        %v2975 = vmul.f32 %v2972, %v2974
        %v2976 = vadd.f32 %v2972, %v2975
        %vm2977 = vweird.f32 %v2918
        %vm2978 = vweird.f32 %v2972
        %vm2979 = vmor %vm2977, %vm2978
        %v2980 = vsel %vm2979, %v2972, %v2976
        %v2981 = vand.u32 2147483647, %v2918
        %vm2982 = vcmp.eq.f32.partialorder %v2981, 8.507059e+37
        %v2983 = vand.u32 %v2918, 2147483648
        %v2984 = vor.u32 1.1754944e-38, %v2983
        %v2985 = vsel %vm2982, %v2984, %v2980
        %v2986 = vmul.f32 1.0, %v2985
        %v2987 = vrcp.pop %v2919
        %v2988 = vmul.f32 %v2919, %v2987
        %v2989 = vsub.f32 1.0, %v2988
        %v2990 = vmul.f32 %v2987, %v2989
        %v2991 = vadd.f32 %v2987, %v2990
        %vm2992 = vweird.f32 %v2919
        %vm2993 = vweird.f32 %v2987
        %vm2994 = vmor %vm2992, %vm2993
        %v2995 = vsel %vm2994, %v2987, %v2991
        %v2996 = vand.u32 2147483647, %v2919
        %vm2997 = vcmp.eq.f32.partialorder %v2996, 8.507059e+37
        %v2998 = vand.u32 %v2919, 2147483648
        %v2999 = vor.u32 1.1754944e-38, %v2998
        %v3000 = vsel %vm2997, %v2999, %v2995
        %v3001 = vmul.f32 1.0, %v3000
        %v3002 = vrcp.pop %v2920
        %v3003 = vmul.f32 %v2920, %v3002
        %v3004 = vsub.f32 1.0, %v3003
        %v3005 = vmul.f32 %v3002, %v3004
        %v3006 = vadd.f32 %v3002, %v3005
        %vm3007 = vweird.f32 %v2920
        %vm3008 = vweird.f32 %v3002
        %vm3009 = vmor %vm3007, %vm3008
        %v3010 = vsel %vm3009, %v3002, %v3006
        %v3011 = vand.u32 2147483647, %v2920
        %vm3012 = vcmp.eq.f32.partialorder %v3011, 8.507059e+37
        %v3013 = vand.u32 %v2920, 2147483648
        %v3014 = vor.u32 1.1754944e-38, %v3013
        %v3015 = vsel %vm3012, %v3014, %v3010
        %v3016 = vmul.f32 1.0, %v3015
        %v3017 = vrcp.pop %v2921
        %v3018 = vmul.f32 %v2921, %v3017
        %v3019 = vsub.f32 1.0, %v3018
        %v3020 = vmul.f32 %v3017, %v3019
        %v3021 = vadd.f32 %v3017, %v3020
        %vm3022 = vweird.f32 %v2921
        %vm3023 = vweird.f32 %v3017
        %vm3024 = vmor %vm3022, %vm3023
        %v3025 = vsel %vm3024, %v3017, %v3021
        %v3026 = vand.u32 2147483647, %v2921
        %vm3027 = vcmp.eq.f32.partialorder %v3026, 8.507059e+37
        %v3028 = vand.u32 %v2921, 2147483648
        %v3029 = vor.u32 1.1754944e-38, %v3028
        %v3030 = vsel %vm3027, %v3029, %v3025
        %v3031 = vmul.f32 1.0, %v3030
        %v3032 = vrcp.pop %v2922
        %v3033 = vmul.f32 %v2922, %v3032
        %v3034 = vsub.f32 1.0, %v3033
        %v3035 = vmul.f32 %v3032, %v3034
        %v3036 = vadd.f32 %v3032, %v3035
        %vm3037 = vweird.f32 %v2922
        %vm3038 = vweird.f32 %v3032
        %vm3039 = vmor %vm3037, %vm3038
        %v3040 = vsel %vm3039, %v3032, %v3036
        %v3041 = vand.u32 2147483647, %v2922
        %vm3042 = vcmp.eq.f32.partialorder %v3041, 8.507059e+37
        %v3043 = vand.u32 %v2922, 2147483648
        %v3044 = vor.u32 1.1754944e-38, %v3043
        %v3045 = vsel %vm3042, %v3044, %v3040
        %v3046 = vmul.f32 1.0, %v3045
        %v3047 = vrcp.pop %v2923
        %v3048 = vmul.f32 %v2923, %v3047
        %v3049 = vsub.f32 1.0, %v3048
        %v3050 = vmul.f32 %v3047, %v3049
        %v3051 = vadd.f32 %v3047, %v3050
        %vm3052 = vweird.f32 %v2923
        %vm3053 = vweird.f32 %v3047
        %vm3054 = vmor %vm3052, %vm3053
        %v3055 = vsel %vm3054, %v3047, %v3051
        %v3056 = vand.u32 2147483647, %v2923
        %vm3057 = vcmp.eq.f32.partialorder %v3056, 8.507059e+37
        %v3058 = vand.u32 %v2923, 2147483648
        %v3059 = vor.u32 1.1754944e-38, %v3058
        %v3060 = vsel %vm3057, %v3059, %v3055
        %v3061 = vmul.f32 1.0, %v3060
        %v3062 = vrcp.pop %v2924
        %v3063 = vmul.f32 %v2924, %v3062
        %v3064 = vsub.f32 1.0, %v3063
        %v3065 = vmul.f32 %v3062, %v3064
        %v3066 = vadd.f32 %v3062, %v3065
        %vm3067 = vweird.f32 %v2924
        %vm3068 = vweird.f32 %v3062
        %vm3069 = vmor %vm3067, %vm3068
        %v3070 = vsel %vm3069, %v3062, %v3066
        %v3071 = vand.u32 2147483647, %v2924
        %vm3072 = vcmp.eq.f32.partialorder %v3071, 8.507059e+37
        %v3073 = vand.u32 %v2924, 2147483648
        %v3074 = vor.u32 1.1754944e-38, %v3073
        %v3075 = vsel %vm3072, %v3074, %v3070
        %v3076 = vmul.f32 1.0, %v3075
        %v3077 = vrcp.pop %v2925
        %v3078 = vmul.f32 %v2925, %v3077
        %v3079 = vsub.f32 1.0, %v3078
        %v3080 = vmul.f32 %v3077, %v3079
        %v3081 = vadd.f32 %v3077, %v3080
        %vm3082 = vweird.f32 %v2925
        %vm3083 = vweird.f32 %v3077
        %vm3084 = vmor %vm3082, %vm3083
        %v3085 = vsel %vm3084, %v3077, %v3081
        %v3086 = vand.u32 2147483647, %v2925
        %vm3087 = vcmp.eq.f32.partialorder %v3086, 8.507059e+37
        %v3088 = vand.u32 %v2925, 2147483648
        %v3089 = vor.u32 1.1754944e-38, %v3088
        %v3090 = vsel %vm3087, %v3089, %v3085
        %v3091 = vmul.f32 1.0, %v3090
        %v3092 = vrcp.pop %v2926
        %v3093 = vmul.f32 %v2926, %v3092
        %v3094 = vsub.f32 1.0, %v3093
        %v3095 = vmul.f32 %v3092, %v3094
        %v3096 = vadd.f32 %v3092, %v3095
        %vm3097 = vweird.f32 %v2926
        %vm3098 = vweird.f32 %v3092
        %vm3099 = vmor %vm3097, %vm3098
        %v3100 = vsel %vm3099, %v3092, %v3096
        %v3101 = vand.u32 2147483647, %v2926
        %vm3102 = vcmp.eq.f32.partialorder %v3101, 8.507059e+37
        %v3103 = vand.u32 %v2926, 2147483648
        %v3104 = vor.u32 1.1754944e-38, %v3103
        %v3105 = vsel %vm3102, %v3104, %v3100
        %v3106 = vmul.f32 1.0, %v3105
        %v3107 = vtanh.pop %v2875
        %v3108 = vtanh.pop %v2876
        %v3109 = vtanh.pop %v2877
        %v3110 = vtanh.pop %v2878
        %v3111 = vmul.f32 %v3001, %v2784
        %v3112 = vmul.f32 %v3016, %v2785
        %v3113 = vmul.f32 %v3031, %v2786
        %v3114 = vmul.f32 %v3046, %v2787
        %v3115 = vmul.f32 %v2941, %v3107
        %v3116 = vmul.f32 %v2956, %v3108
        %v3117 = vmul.f32 %v2971, %v3109
        %v3118 = vmul.f32 %v2986, %v3110
        %v3119 = vadd.f32 %v3111, %v3115
        %v3120 = vadd.f32 %v3112, %v3116
        %v3121 = vadd.f32 %v3113, %v3117
        %v3122 = vadd.f32 %v3114, %v3118
        %v3123 = vtanh.pop %v3119
        %v3124 = vtanh.pop %v3120
        %v3125 = vtanh.pop %v3121
        %v3126 = vtanh.pop %v3122
        %v3127 = vmul.f32 %v3061, %v3123
        %v3128 = vmul.f32 %v3076, %v3124
        %v3129 = vmul.f32 %v3091, %v3125
        %v3130 = vmul.f32 %v3106, %v3126
        %v3131 = vld [vmem:[%s1217] sm:$0xff]
        %v3132 = vld [vmem:[%s1217 + $0x8] sm:$0xff]
        %v3133 = vld [vmem:[%s1217 + $0x10] sm:$0xff]
        %v3134 = vld [vmem:[%s1217 + $0x18] sm:$0xff]
        %v3135 = vld [vmem:[%s1217 + $0x20] sm:$0xff]
        %v3136 = vld [vmem:[%s1217 + $0x28] sm:$0xff]
        %v3137 = vld [vmem:[%s1217 + $0x30] sm:$0xff]
        %v3138 = vld [vmem:[%s1217 + $0x38] sm:$0xff]
        %v3139 = vld [vmem:[%s1217 + $0x40] sm:$0xff]
        %v3140 = vld [vmem:[%s1217 + $0x48] sm:$0xff]
        %v3141 = vld [vmem:[%s1217 + $0x50] sm:$0xff]
        %v3142 = vld [vmem:[%s1217 + $0x58] sm:$0xff]
        %v3143 = vld [vmem:[%s1217 + $0x60] sm:$0xff]
        %v3144 = vld [vmem:[%s1217 + $0x68] sm:$0xff]
        %v3145 = vld [vmem:[%s1217 + $0x70] sm:$0xff]
        %v3146 = vld [vmem:[%s1217 + $0x78] sm:$0xff]
        %v3147 = vpack.c.bf16 %v3128, %v3127
        %v3148 = vpack.c.bf16 %v3130, %v3129
        %3149 = vmatpush.bf16.msra.mxu0 0
        %3150 = vmatpush.bf16.msra.mxu0 0
        %3151 = vmatpush.bf16.msra.mxu0 0
        %3152 = vmatpush.bf16.msra.mxu0 0
        %3153 = vmatpush.bf16.msra.mxu0 0
        %3154 = vmatpush.bf16.msra.mxu0 0
        %3155 = vmatpush.bf16.msra.mxu0 %v3148
        %3156 = vmatpush.bf16.msra.mxu0 %v3147
        %3157 = vmatmul.bf16.gmra.mxu0 %v1786
        %v3158 = vpop.f32.mrf.mxu0
        %v3159 = vadd.f32 0.0, %v3158
        %v3160 = vpop.f32.mrf.mxu0
        %v3161 = vadd.f32 0.0, %v3160
        %3162 = vmatmul.bf16.gmra.mxu0 %v1789
        %v3163 = vpop.f32.mrf.mxu0
        %v3164 = vadd.f32 0.0, %v3163
        %v3165 = vpop.f32.mrf.mxu0
        %v3166 = vadd.f32 0.0, %v3165
        %3167 = vmatmul.bf16.gmra.mxu0 %v1792
        %v3168 = vpop.f32.mrf.mxu0
        %v3169 = vadd.f32 0.0, %v3168
        %v3170 = vpop.f32.mrf.mxu0
        %v3171 = vadd.f32 0.0, %v3170
        %3172 = vmatmul.bf16.gmra.mxu0 %v1795
        %v3173 = vpop.f32.mrf.mxu0
        %v3174 = vadd.f32 0.0, %v3173
        %v3175 = vpop.f32.mrf.mxu0
        %v3176 = vadd.f32 0.0, %v3175
        %3177 = vmatmul.bf16.gmra.mxu0 %v1798
        %v3178 = vpop.f32.mrf.mxu0
        %v3179 = vadd.f32 0.0, %v3178
        %v3180 = vpop.f32.mrf.mxu0
        %v3181 = vadd.f32 0.0, %v3180
        %3182 = vmatmul.bf16.gmra.mxu0 %v1801
        %v3183 = vpop.f32.mrf.mxu0
        %v3184 = vadd.f32 0.0, %v3183
        %v3185 = vpop.f32.mrf.mxu0
        %v3186 = vadd.f32 0.0, %v3185
        %3187 = vmatmul.bf16.gmra.mxu0 %v1804
        %v3188 = vpop.f32.mrf.mxu0
        %v3189 = vadd.f32 0.0, %v3188
        %v3190 = vpop.f32.mrf.mxu0
        %v3191 = vadd.f32 0.0, %v3190
        %3192 = vmatmul.bf16.gmra.mxu0 %v1807
        %v3193 = vpop.f32.mrf.mxu0
        %v3194 = vadd.f32 0.0, %v3193
        %v3195 = vpop.f32.mrf.mxu0
        %v3196 = vadd.f32 0.0, %v3195
        %3197 = vdwg.mxu0
        %v3198 = vadd.f32 %v3131, %v3159
        %v3199 = vadd.f32 %v3132, %v3161
        %v3200 = vadd.f32 %v3133, %v3164
        %v3201 = vadd.f32 %v3134, %v3166
        %v3202 = vadd.f32 %v3135, %v3169
        %v3203 = vadd.f32 %v3136, %v3171
        %v3204 = vadd.f32 %v3137, %v3174
        %v3205 = vadd.f32 %v3138, %v3176
        %v3206 = vadd.f32 %v3139, %v3179
        %v3207 = vadd.f32 %v3140, %v3181
        %v3208 = vadd.f32 %v3141, %v3184
        %v3209 = vadd.f32 %v3142, %v3186
        %v3210 = vadd.f32 %v3143, %v3189
        %v3211 = vadd.f32 %v3144, %v3191
        %v3212 = vadd.f32 %v3145, %v3194
        %v3213 = vadd.f32 %v3146, %v3196
        %v3214 = vxor.u32 %v3198, 2147483648
        %v3215 = vxor.u32 %v3199, 2147483648
        %v3216 = vxor.u32 %v3200, 2147483648
        %v3217 = vxor.u32 %v3201, 2147483648
        %v3218 = vxor.u32 %v3202, 2147483648
        %v3219 = vxor.u32 %v3203, 2147483648
        %v3220 = vxor.u32 %v3204, 2147483648
        %v3221 = vxor.u32 %v3205, 2147483648
        %v3222 = vxor.u32 %v3206, 2147483648
        %v3223 = vxor.u32 %v3207, 2147483648
        %v3224 = vxor.u32 %v3208, 2147483648
        %v3225 = vxor.u32 %v3209, 2147483648
        %v3226 = vmul.f32 %v3214, 1.442695
        %v3227 = vpow.pop %v3226
        %v3228 = vmul.f32 %v3215, 1.442695
        %v3229 = vpow.pop %v3228
        %v3230 = vmul.f32 %v3216, 1.442695
        %v3231 = vpow.pop %v3230
        %v3232 = vmul.f32 %v3217, 1.442695
        %v3233 = vpow.pop %v3232
        %v3234 = vmul.f32 %v3218, 1.442695
        %v3235 = vpow.pop %v3234
        %v3236 = vmul.f32 %v3219, 1.442695
        %v3237 = vpow.pop %v3236
        %v3238 = vmul.f32 %v3220, 1.442695
        %v3239 = vpow.pop %v3238
        %v3240 = vmul.f32 %v3221, 1.442695
        %v3241 = vpow.pop %v3240
        %v3242 = vmul.f32 %v3222, 1.442695
        %v3243 = vpow.pop %v3242
        %v3244 = vmul.f32 %v3223, 1.442695
        %v3245 = vpow.pop %v3244
        %v3246 = vmul.f32 %v3224, 1.442695
        %v3247 = vpow.pop %v3246
        %v3248 = vmul.f32 %v3225, 1.442695
        %v3249 = vpow.pop %v3248
        %v3250 = vadd.f32 %v3227, 1.0
        %v3251 = vadd.f32 %v3229, 1.0
        %v3252 = vadd.f32 %v3231, 1.0
        %v3253 = vadd.f32 %v3233, 1.0
        %v3254 = vadd.f32 %v3235, 1.0
        %v3255 = vadd.f32 %v3237, 1.0
        %v3256 = vadd.f32 %v3239, 1.0
        %v3257 = vadd.f32 %v3241, 1.0
        %v3258 = vadd.f32 %v3243, 1.0
        %v3259 = vadd.f32 %v3245, 1.0
        %v3260 = vadd.f32 %v3247, 1.0
        %v3261 = vadd.f32 %v3249, 1.0
        %v3262 = vrcp.pop %v3250
        %v3263 = vmul.f32 %v3250, %v3262
        %v3264 = vsub.f32 1.0, %v3263
        %v3265 = vmul.f32 %v3262, %v3264
        %v3266 = vadd.f32 %v3262, %v3265
        %vm3267 = vweird.f32 %v3250
        %vm3268 = vweird.f32 %v3262
        %vm3269 = vmor %vm3267, %vm3268
        %v3270 = vsel %vm3269, %v3262, %v3266
        %v3271 = vand.u32 2147483647, %v3250
        %vm3272 = vcmp.eq.f32.partialorder %v3271, 8.507059e+37
        %v3273 = vand.u32 %v3250, 2147483648
        %v3274 = vor.u32 1.1754944e-38, %v3273
        %v3275 = vsel %vm3272, %v3274, %v3270
        %v3276 = vmul.f32 1.0, %v3275
        %v3277 = vrcp.pop %v3251
        %v3278 = vmul.f32 %v3251, %v3277
        %v3279 = vsub.f32 1.0, %v3278
        %v3280 = vmul.f32 %v3277, %v3279
        %v3281 = vadd.f32 %v3277, %v3280
        %vm3282 = vweird.f32 %v3251
        %vm3283 = vweird.f32 %v3277
        %vm3284 = vmor %vm3282, %vm3283
        %v3285 = vsel %vm3284, %v3277, %v3281
        %v3286 = vand.u32 2147483647, %v3251
        %vm3287 = vcmp.eq.f32.partialorder %v3286, 8.507059e+37
        %v3288 = vand.u32 %v3251, 2147483648
        %v3289 = vor.u32 1.1754944e-38, %v3288
        %v3290 = vsel %vm3287, %v3289, %v3285
        %v3291 = vmul.f32 1.0, %v3290
        %v3292 = vrcp.pop %v3252
        %v3293 = vmul.f32 %v3252, %v3292
        %v3294 = vsub.f32 1.0, %v3293
        %v3295 = vmul.f32 %v3292, %v3294
        %v3296 = vadd.f32 %v3292, %v3295
        %vm3297 = vweird.f32 %v3252
        %vm3298 = vweird.f32 %v3292
        %vm3299 = vmor %vm3297, %vm3298
        %v3300 = vsel %vm3299, %v3292, %v3296
        %v3301 = vand.u32 2147483647, %v3252
        %vm3302 = vcmp.eq.f32.partialorder %v3301, 8.507059e+37
        %v3303 = vand.u32 %v3252, 2147483648
        %v3304 = vor.u32 1.1754944e-38, %v3303
        %v3305 = vsel %vm3302, %v3304, %v3300
        %v3306 = vmul.f32 1.0, %v3305
        %v3307 = vrcp.pop %v3253
        %v3308 = vmul.f32 %v3253, %v3307
        %v3309 = vsub.f32 1.0, %v3308
        %v3310 = vmul.f32 %v3307, %v3309
        %v3311 = vadd.f32 %v3307, %v3310
        %vm3312 = vweird.f32 %v3253
        %vm3313 = vweird.f32 %v3307
        %vm3314 = vmor %vm3312, %vm3313
        %v3315 = vsel %vm3314, %v3307, %v3311
        %v3316 = vand.u32 2147483647, %v3253
        %vm3317 = vcmp.eq.f32.partialorder %v3316, 8.507059e+37
        %v3318 = vand.u32 %v3253, 2147483648
        %v3319 = vor.u32 1.1754944e-38, %v3318
        %v3320 = vsel %vm3317, %v3319, %v3315
        %v3321 = vmul.f32 1.0, %v3320
        %v3322 = vrcp.pop %v3254
        %v3323 = vmul.f32 %v3254, %v3322
        %v3324 = vsub.f32 1.0, %v3323
        %v3325 = vmul.f32 %v3322, %v3324
        %v3326 = vadd.f32 %v3322, %v3325
        %vm3327 = vweird.f32 %v3254
        %vm3328 = vweird.f32 %v3322
        %vm3329 = vmor %vm3327, %vm3328
        %v3330 = vsel %vm3329, %v3322, %v3326
        %v3331 = vand.u32 2147483647, %v3254
        %vm3332 = vcmp.eq.f32.partialorder %v3331, 8.507059e+37
        %v3333 = vand.u32 %v3254, 2147483648
        %v3334 = vor.u32 1.1754944e-38, %v3333
        %v3335 = vsel %vm3332, %v3334, %v3330
        %v3336 = vmul.f32 1.0, %v3335
        %v3337 = vrcp.pop %v3255
        %v3338 = vmul.f32 %v3255, %v3337
        %v3339 = vsub.f32 1.0, %v3338
        %v3340 = vmul.f32 %v3337, %v3339
        %v3341 = vadd.f32 %v3337, %v3340
        %vm3342 = vweird.f32 %v3255
        %vm3343 = vweird.f32 %v3337
        %vm3344 = vmor %vm3342, %vm3343
        %v3345 = vsel %vm3344, %v3337, %v3341
        %v3346 = vand.u32 2147483647, %v3255
        %vm3347 = vcmp.eq.f32.partialorder %v3346, 8.507059e+37
        %v3348 = vand.u32 %v3255, 2147483648
        %v3349 = vor.u32 1.1754944e-38, %v3348
        %v3350 = vsel %vm3347, %v3349, %v3345
        %v3351 = vmul.f32 1.0, %v3350
        %v3352 = vrcp.pop %v3256
        %v3353 = vmul.f32 %v3256, %v3352
        %v3354 = vsub.f32 1.0, %v3353
        %v3355 = vmul.f32 %v3352, %v3354
        %v3356 = vadd.f32 %v3352, %v3355
        %vm3357 = vweird.f32 %v3256
        %vm3358 = vweird.f32 %v3352
        %vm3359 = vmor %vm3357, %vm3358
        %v3360 = vsel %vm3359, %v3352, %v3356
        %v3361 = vand.u32 2147483647, %v3256
        %vm3362 = vcmp.eq.f32.partialorder %v3361, 8.507059e+37
        %v3363 = vand.u32 %v3256, 2147483648
        %v3364 = vor.u32 1.1754944e-38, %v3363
        %v3365 = vsel %vm3362, %v3364, %v3360
        %v3366 = vmul.f32 1.0, %v3365
        %v3367 = vrcp.pop %v3257
        %v3368 = vmul.f32 %v3257, %v3367
        %v3369 = vsub.f32 1.0, %v3368
        %v3370 = vmul.f32 %v3367, %v3369
        %v3371 = vadd.f32 %v3367, %v3370
        %vm3372 = vweird.f32 %v3257
        %vm3373 = vweird.f32 %v3367
        %vm3374 = vmor %vm3372, %vm3373
        %v3375 = vsel %vm3374, %v3367, %v3371
        %v3376 = vand.u32 2147483647, %v3257
        %vm3377 = vcmp.eq.f32.partialorder %v3376, 8.507059e+37
        %v3378 = vand.u32 %v3257, 2147483648
        %v3379 = vor.u32 1.1754944e-38, %v3378
        %v3380 = vsel %vm3377, %v3379, %v3375
        %v3381 = vmul.f32 1.0, %v3380
        %v3382 = vrcp.pop %v3258
        %v3383 = vmul.f32 %v3258, %v3382
        %v3384 = vsub.f32 1.0, %v3383
        %v3385 = vmul.f32 %v3382, %v3384
        %v3386 = vadd.f32 %v3382, %v3385
        %vm3387 = vweird.f32 %v3258
        %vm3388 = vweird.f32 %v3382
        %vm3389 = vmor %vm3387, %vm3388
        %v3390 = vsel %vm3389, %v3382, %v3386
        %v3391 = vand.u32 2147483647, %v3258
        %vm3392 = vcmp.eq.f32.partialorder %v3391, 8.507059e+37
        %v3393 = vand.u32 %v3258, 2147483648
        %v3394 = vor.u32 1.1754944e-38, %v3393
        %v3395 = vsel %vm3392, %v3394, %v3390
        %v3396 = vmul.f32 1.0, %v3395
        %v3397 = vrcp.pop %v3259
        %v3398 = vmul.f32 %v3259, %v3397
        %v3399 = vsub.f32 1.0, %v3398
        %v3400 = vmul.f32 %v3397, %v3399
        %v3401 = vadd.f32 %v3397, %v3400
        %vm3402 = vweird.f32 %v3259
        %vm3403 = vweird.f32 %v3397
        %vm3404 = vmor %vm3402, %vm3403
        %v3405 = vsel %vm3404, %v3397, %v3401
        %v3406 = vand.u32 2147483647, %v3259
        %vm3407 = vcmp.eq.f32.partialorder %v3406, 8.507059e+37
        %v3408 = vand.u32 %v3259, 2147483648
        %v3409 = vor.u32 1.1754944e-38, %v3408
        %v3410 = vsel %vm3407, %v3409, %v3405
        %v3411 = vmul.f32 1.0, %v3410
        %v3412 = vrcp.pop %v3260
        %v3413 = vmul.f32 %v3260, %v3412
        %v3414 = vsub.f32 1.0, %v3413
        %v3415 = vmul.f32 %v3412, %v3414
        %v3416 = vadd.f32 %v3412, %v3415
        %vm3417 = vweird.f32 %v3260
        %vm3418 = vweird.f32 %v3412
        %vm3419 = vmor %vm3417, %vm3418
        %v3420 = vsel %vm3419, %v3412, %v3416
        %v3421 = vand.u32 2147483647, %v3260
        %vm3422 = vcmp.eq.f32.partialorder %v3421, 8.507059e+37
        %v3423 = vand.u32 %v3260, 2147483648
        %v3424 = vor.u32 1.1754944e-38, %v3423
        %v3425 = vsel %vm3422, %v3424, %v3420
        %v3426 = vmul.f32 1.0, %v3425
        %v3427 = vrcp.pop %v3261
        %v3428 = vmul.f32 %v3261, %v3427
        %v3429 = vsub.f32 1.0, %v3428
        %v3430 = vmul.f32 %v3427, %v3429
        %v3431 = vadd.f32 %v3427, %v3430
        %vm3432 = vweird.f32 %v3261
        %vm3433 = vweird.f32 %v3427
        %vm3434 = vmor %vm3432, %vm3433
        %v3435 = vsel %vm3434, %v3427, %v3431
        %v3436 = vand.u32 2147483647, %v3261
        %vm3437 = vcmp.eq.f32.partialorder %v3436, 8.507059e+37
        %v3438 = vand.u32 %v3261, 2147483648
        %v3439 = vor.u32 1.1754944e-38, %v3438
        %v3440 = vsel %vm3437, %v3439, %v3435
        %v3441 = vmul.f32 1.0, %v3440
        %v3442 = vtanh.pop %v3210
        %v3443 = vtanh.pop %v3211
        %v3444 = vtanh.pop %v3212
        %v3445 = vtanh.pop %v3213
        %v3446 = vmul.f32 %v3336, %v3119
        %v3447 = vmul.f32 %v3351, %v3120
        %v3448 = vmul.f32 %v3366, %v3121
        %v3449 = vmul.f32 %v3381, %v3122
        %v3450 = vmul.f32 %v3276, %v3442
        %v3451 = vmul.f32 %v3291, %v3443
        %v3452 = vmul.f32 %v3306, %v3444
        %v3453 = vmul.f32 %v3321, %v3445
        %v3454 = vadd.f32 %v3446, %v3450
        %v3455 = vadd.f32 %v3447, %v3451
        %v3456 = vadd.f32 %v3448, %v3452
        %v3457 = vadd.f32 %v3449, %v3453
        %v3458 = vtanh.pop %v3454
        %v3459 = vtanh.pop %v3455
        %v3460 = vtanh.pop %v3456
        %v3461 = vtanh.pop %v3457
        %v3462 = vmul.f32 %v3396, %v3458
        %v3463 = vmul.f32 %v3411, %v3459
        %v3464 = vmul.f32 %v3426, %v3460
        %v3465 = vmul.f32 %v3441, %v3461
        %v3466 = vld [vmem:[%s1329] sm:$0xff]
        %v3467 = vld [vmem:[%s1329 + $0x8] sm:$0xff]
        %v3468 = vld [vmem:[%s1329 + $0x10] sm:$0xff]
        %v3469 = vld [vmem:[%s1329 + $0x18] sm:$0xff]
        %v3470 = vld [vmem:[%s1329 + $0x20] sm:$0xff]
        %v3471 = vld [vmem:[%s1329 + $0x28] sm:$0xff]
        %v3472 = vld [vmem:[%s1329 + $0x30] sm:$0xff]
        %v3473 = vld [vmem:[%s1329 + $0x38] sm:$0xff]
        %v3474 = vld [vmem:[%s1329 + $0x40] sm:$0xff]
        %v3475 = vld [vmem:[%s1329 + $0x48] sm:$0xff]
        %v3476 = vld [vmem:[%s1329 + $0x50] sm:$0xff]
        %v3477 = vld [vmem:[%s1329 + $0x58] sm:$0xff]
        %v3478 = vld [vmem:[%s1329 + $0x60] sm:$0xff]
        %v3479 = vld [vmem:[%s1329 + $0x68] sm:$0xff]
        %v3480 = vld [vmem:[%s1329 + $0x70] sm:$0xff]
        %v3481 = vld [vmem:[%s1329 + $0x78] sm:$0xff]
        %v3482 = vpack.c.bf16 %v3463, %v3462
        %v3483 = vpack.c.bf16 %v3465, %v3464
        %3484 = vmatpush.bf16.msra.mxu0 0
        %3485 = vmatpush.bf16.msra.mxu0 0
        %3486 = vmatpush.bf16.msra.mxu0 0
        %3487 = vmatpush.bf16.msra.mxu0 0
        %3488 = vmatpush.bf16.msra.mxu0 0
        %3489 = vmatpush.bf16.msra.mxu0 0
        %3490 = vmatpush.bf16.msra.mxu0 %v3483
        %3491 = vmatpush.bf16.msra.mxu0 %v3482
        %3492 = vmatmul.bf16.gmra.mxu0 %v1786
        %v3493 = vpop.f32.mrf.mxu0
        %v3494 = vadd.f32 0.0, %v3493
        %v3495 = vpop.f32.mrf.mxu0
        %v3496 = vadd.f32 0.0, %v3495
        %3497 = vmatmul.bf16.gmra.mxu0 %v1789
        %v3498 = vpop.f32.mrf.mxu0
        %v3499 = vadd.f32 0.0, %v3498
        %v3500 = vpop.f32.mrf.mxu0
        %v3501 = vadd.f32 0.0, %v3500
        %3502 = vmatmul.bf16.gmra.mxu0 %v1792
        %v3503 = vpop.f32.mrf.mxu0
        %v3504 = vadd.f32 0.0, %v3503
        %v3505 = vpop.f32.mrf.mxu0
        %v3506 = vadd.f32 0.0, %v3505
        %3507 = vmatmul.bf16.gmra.mxu0 %v1795
        %v3508 = vpop.f32.mrf.mxu0
        %v3509 = vadd.f32 0.0, %v3508
        %v3510 = vpop.f32.mrf.mxu0
        %v3511 = vadd.f32 0.0, %v3510
        %3512 = vmatmul.bf16.gmra.mxu0 %v1798
        %v3513 = vpop.f32.mrf.mxu0
        %v3514 = vadd.f32 0.0, %v3513
        %v3515 = vpop.f32.mrf.mxu0
        %v3516 = vadd.f32 0.0, %v3515
        %3517 = vmatmul.bf16.gmra.mxu0 %v1801
        %v3518 = vpop.f32.mrf.mxu0
        %v3519 = vadd.f32 0.0, %v3518
        %v3520 = vpop.f32.mrf.mxu0
        %v3521 = vadd.f32 0.0, %v3520
        %3522 = vmatmul.bf16.gmra.mxu0 %v1804
        %v3523 = vpop.f32.mrf.mxu0
        %v3524 = vadd.f32 0.0, %v3523
        %v3525 = vpop.f32.mrf.mxu0
        %v3526 = vadd.f32 0.0, %v3525
        %3527 = vmatmul.bf16.gmra.mxu0 %v1807
        %v3528 = vpop.f32.mrf.mxu0
        %v3529 = vadd.f32 0.0, %v3528
        %v3530 = vpop.f32.mrf.mxu0
        %v3531 = vadd.f32 0.0, %v3530
        %3532 = vdwg.mxu0
        %v3533 = vadd.f32 %v3466, %v3494
        %v3534 = vadd.f32 %v3467, %v3496
        %v3535 = vadd.f32 %v3468, %v3499
        %v3536 = vadd.f32 %v3469, %v3501
        %v3537 = vadd.f32 %v3470, %v3504
        %v3538 = vadd.f32 %v3471, %v3506
        %v3539 = vadd.f32 %v3472, %v3509
        %v3540 = vadd.f32 %v3473, %v3511
        %v3541 = vadd.f32 %v3474, %v3514
        %v3542 = vadd.f32 %v3475, %v3516
        %v3543 = vadd.f32 %v3476, %v3519
        %v3544 = vadd.f32 %v3477, %v3521
        %v3545 = vadd.f32 %v3478, %v3524
        %v3546 = vadd.f32 %v3479, %v3526
        %v3547 = vadd.f32 %v3480, %v3529
        %v3548 = vadd.f32 %v3481, %v3531
        %v3549 = vxor.u32 %v3533, 2147483648
        %v3550 = vxor.u32 %v3534, 2147483648
        %v3551 = vxor.u32 %v3535, 2147483648
        %v3552 = vxor.u32 %v3536, 2147483648
        %v3553 = vxor.u32 %v3537, 2147483648
        %v3554 = vxor.u32 %v3538, 2147483648
        %v3555 = vxor.u32 %v3539, 2147483648
        %v3556 = vxor.u32 %v3540, 2147483648
        %v3557 = vxor.u32 %v3541, 2147483648
        %v3558 = vxor.u32 %v3542, 2147483648
        %v3559 = vxor.u32 %v3543, 2147483648
        %v3560 = vxor.u32 %v3544, 2147483648
        %v3561 = vmul.f32 %v3549, 1.442695
        %v3562 = vpow.pop %v3561
        %v3563 = vmul.f32 %v3550, 1.442695
        %v3564 = vpow.pop %v3563
        %v3565 = vmul.f32 %v3551, 1.442695
        %v3566 = vpow.pop %v3565
        %v3567 = vmul.f32 %v3552, 1.442695
        %v3568 = vpow.pop %v3567
        %v3569 = vmul.f32 %v3553, 1.442695
        %v3570 = vpow.pop %v3569
        %v3571 = vmul.f32 %v3554, 1.442695
        %v3572 = vpow.pop %v3571
        %v3573 = vmul.f32 %v3555, 1.442695
        %v3574 = vpow.pop %v3573
        %v3575 = vmul.f32 %v3556, 1.442695
        %v3576 = vpow.pop %v3575
        %v3577 = vmul.f32 %v3557, 1.442695
        %v3578 = vpow.pop %v3577
        %v3579 = vmul.f32 %v3558, 1.442695
        %v3580 = vpow.pop %v3579
        %v3581 = vmul.f32 %v3559, 1.442695
        %v3582 = vpow.pop %v3581
        %v3583 = vmul.f32 %v3560, 1.442695
        %v3584 = vpow.pop %v3583
        %v3585 = vadd.f32 %v3562, 1.0
        %v3586 = vadd.f32 %v3564, 1.0
        %v3587 = vadd.f32 %v3566, 1.0
        %v3588 = vadd.f32 %v3568, 1.0
        %v3589 = vadd.f32 %v3570, 1.0
        %v3590 = vadd.f32 %v3572, 1.0
        %v3591 = vadd.f32 %v3574, 1.0
        %v3592 = vadd.f32 %v3576, 1.0
        %v3593 = vadd.f32 %v3578, 1.0
        %v3594 = vadd.f32 %v3580, 1.0
        %v3595 = vadd.f32 %v3582, 1.0
        %v3596 = vadd.f32 %v3584, 1.0
        %v3597 = vrcp.pop %v3585
        %v3598 = vmul.f32 %v3585, %v3597
        %v3599 = vsub.f32 1.0, %v3598
        %v3600 = vmul.f32 %v3597, %v3599
        %v3601 = vadd.f32 %v3597, %v3600
        %vm3602 = vweird.f32 %v3585
        %vm3603 = vweird.f32 %v3597
        %vm3604 = vmor %vm3602, %vm3603
        %v3605 = vsel %vm3604, %v3597, %v3601
        %v3606 = vand.u32 2147483647, %v3585
        %vm3607 = vcmp.eq.f32.partialorder %v3606, 8.507059e+37
        %v3608 = vand.u32 %v3585, 2147483648
        %v3609 = vor.u32 1.1754944e-38, %v3608
        %v3610 = vsel %vm3607, %v3609, %v3605
        %v3611 = vmul.f32 1.0, %v3610
        %v3612 = vrcp.pop %v3586
        %v3613 = vmul.f32 %v3586, %v3612
        %v3614 = vsub.f32 1.0, %v3613
        %v3615 = vmul.f32 %v3612, %v3614
        %v3616 = vadd.f32 %v3612, %v3615
        %vm3617 = vweird.f32 %v3586
        %vm3618 = vweird.f32 %v3612
        %vm3619 = vmor %vm3617, %vm3618
        %v3620 = vsel %vm3619, %v3612, %v3616
        %v3621 = vand.u32 2147483647, %v3586
        %vm3622 = vcmp.eq.f32.partialorder %v3621, 8.507059e+37
        %v3623 = vand.u32 %v3586, 2147483648
        %v3624 = vor.u32 1.1754944e-38, %v3623
        %v3625 = vsel %vm3622, %v3624, %v3620
        %v3626 = vmul.f32 1.0, %v3625
        %v3627 = vrcp.pop %v3587
        %v3628 = vmul.f32 %v3587, %v3627
        %v3629 = vsub.f32 1.0, %v3628
        %v3630 = vmul.f32 %v3627, %v3629
        %v3631 = vadd.f32 %v3627, %v3630
        %vm3632 = vweird.f32 %v3587
        %vm3633 = vweird.f32 %v3627
        %vm3634 = vmor %vm3632, %vm3633
        %v3635 = vsel %vm3634, %v3627, %v3631
        %v3636 = vand.u32 2147483647, %v3587
        %vm3637 = vcmp.eq.f32.partialorder %v3636, 8.507059e+37
        %v3638 = vand.u32 %v3587, 2147483648
        %v3639 = vor.u32 1.1754944e-38, %v3638
        %v3640 = vsel %vm3637, %v3639, %v3635
        %v3641 = vmul.f32 1.0, %v3640
        %v3642 = vrcp.pop %v3588
        %v3643 = vmul.f32 %v3588, %v3642
        %v3644 = vsub.f32 1.0, %v3643
        %v3645 = vmul.f32 %v3642, %v3644
        %v3646 = vadd.f32 %v3642, %v3645
        %vm3647 = vweird.f32 %v3588
        %vm3648 = vweird.f32 %v3642
        %vm3649 = vmor %vm3647, %vm3648
        %v3650 = vsel %vm3649, %v3642, %v3646
        %v3651 = vand.u32 2147483647, %v3588
        %vm3652 = vcmp.eq.f32.partialorder %v3651, 8.507059e+37
        %v3653 = vand.u32 %v3588, 2147483648
        %v3654 = vor.u32 1.1754944e-38, %v3653
        %v3655 = vsel %vm3652, %v3654, %v3650
        %v3656 = vmul.f32 1.0, %v3655
        %v3657 = vrcp.pop %v3589
        %v3658 = vmul.f32 %v3589, %v3657
        %v3659 = vsub.f32 1.0, %v3658
        %v3660 = vmul.f32 %v3657, %v3659
        %v3661 = vadd.f32 %v3657, %v3660
        %vm3662 = vweird.f32 %v3589
        %vm3663 = vweird.f32 %v3657
        %vm3664 = vmor %vm3662, %vm3663
        %v3665 = vsel %vm3664, %v3657, %v3661
        %v3666 = vand.u32 2147483647, %v3589
        %vm3667 = vcmp.eq.f32.partialorder %v3666, 8.507059e+37
        %v3668 = vand.u32 %v3589, 2147483648
        %v3669 = vor.u32 1.1754944e-38, %v3668
        %v3670 = vsel %vm3667, %v3669, %v3665
        %v3671 = vmul.f32 1.0, %v3670
        %v3672 = vrcp.pop %v3590
        %v3673 = vmul.f32 %v3590, %v3672
        %v3674 = vsub.f32 1.0, %v3673
        %v3675 = vmul.f32 %v3672, %v3674
        %v3676 = vadd.f32 %v3672, %v3675
        %vm3677 = vweird.f32 %v3590
        %vm3678 = vweird.f32 %v3672
        %vm3679 = vmor %vm3677, %vm3678
        %v3680 = vsel %vm3679, %v3672, %v3676
        %v3681 = vand.u32 2147483647, %v3590
        %vm3682 = vcmp.eq.f32.partialorder %v3681, 8.507059e+37
        %v3683 = vand.u32 %v3590, 2147483648
        %v3684 = vor.u32 1.1754944e-38, %v3683
        %v3685 = vsel %vm3682, %v3684, %v3680
        %v3686 = vmul.f32 1.0, %v3685
        %v3687 = vrcp.pop %v3591
        %v3688 = vmul.f32 %v3591, %v3687
        %v3689 = vsub.f32 1.0, %v3688
        %v3690 = vmul.f32 %v3687, %v3689
        %v3691 = vadd.f32 %v3687, %v3690
        %vm3692 = vweird.f32 %v3591
        %vm3693 = vweird.f32 %v3687
        %vm3694 = vmor %vm3692, %vm3693
        %v3695 = vsel %vm3694, %v3687, %v3691
        %v3696 = vand.u32 2147483647, %v3591
        %vm3697 = vcmp.eq.f32.partialorder %v3696, 8.507059e+37
        %v3698 = vand.u32 %v3591, 2147483648
        %v3699 = vor.u32 1.1754944e-38, %v3698
        %v3700 = vsel %vm3697, %v3699, %v3695
        %v3701 = vmul.f32 1.0, %v3700
        %v3702 = vrcp.pop %v3592
        %v3703 = vmul.f32 %v3592, %v3702
        %v3704 = vsub.f32 1.0, %v3703
        %v3705 = vmul.f32 %v3702, %v3704
        %v3706 = vadd.f32 %v3702, %v3705
        %vm3707 = vweird.f32 %v3592
        %vm3708 = vweird.f32 %v3702
        %vm3709 = vmor %vm3707, %vm3708
        %v3710 = vsel %vm3709, %v3702, %v3706
        %v3711 = vand.u32 2147483647, %v3592
        %vm3712 = vcmp.eq.f32.partialorder %v3711, 8.507059e+37
        %v3713 = vand.u32 %v3592, 2147483648
        %v3714 = vor.u32 1.1754944e-38, %v3713
        %v3715 = vsel %vm3712, %v3714, %v3710
        %v3716 = vmul.f32 1.0, %v3715
        %v3717 = vrcp.pop %v3593
        %v3718 = vmul.f32 %v3593, %v3717
        %v3719 = vsub.f32 1.0, %v3718
        %v3720 = vmul.f32 %v3717, %v3719
        %v3721 = vadd.f32 %v3717, %v3720
        %vm3722 = vweird.f32 %v3593
        %vm3723 = vweird.f32 %v3717
        %vm3724 = vmor %vm3722, %vm3723
        %v3725 = vsel %vm3724, %v3717, %v3721
        %v3726 = vand.u32 2147483647, %v3593
        %vm3727 = vcmp.eq.f32.partialorder %v3726, 8.507059e+37
        %v3728 = vand.u32 %v3593, 2147483648
        %v3729 = vor.u32 1.1754944e-38, %v3728
        %v3730 = vsel %vm3727, %v3729, %v3725
        %v3731 = vmul.f32 1.0, %v3730
        %v3732 = vrcp.pop %v3594
        %v3733 = vmul.f32 %v3594, %v3732
        %v3734 = vsub.f32 1.0, %v3733
        %v3735 = vmul.f32 %v3732, %v3734
        %v3736 = vadd.f32 %v3732, %v3735
        %vm3737 = vweird.f32 %v3594
        %vm3738 = vweird.f32 %v3732
        %vm3739 = vmor %vm3737, %vm3738
        %v3740 = vsel %vm3739, %v3732, %v3736
        %v3741 = vand.u32 2147483647, %v3594
        %vm3742 = vcmp.eq.f32.partialorder %v3741, 8.507059e+37
        %v3743 = vand.u32 %v3594, 2147483648
        %v3744 = vor.u32 1.1754944e-38, %v3743
        %v3745 = vsel %vm3742, %v3744, %v3740
        %v3746 = vmul.f32 1.0, %v3745
        %v3747 = vrcp.pop %v3595
        %v3748 = vmul.f32 %v3595, %v3747
        %v3749 = vsub.f32 1.0, %v3748
        %v3750 = vmul.f32 %v3747, %v3749
        %v3751 = vadd.f32 %v3747, %v3750
        %vm3752 = vweird.f32 %v3595
        %vm3753 = vweird.f32 %v3747
        %vm3754 = vmor %vm3752, %vm3753
        %v3755 = vsel %vm3754, %v3747, %v3751
        %v3756 = vand.u32 2147483647, %v3595
        %vm3757 = vcmp.eq.f32.partialorder %v3756, 8.507059e+37
        %v3758 = vand.u32 %v3595, 2147483648
        %v3759 = vor.u32 1.1754944e-38, %v3758
        %v3760 = vsel %vm3757, %v3759, %v3755
        %v3761 = vmul.f32 1.0, %v3760
        %v3762 = vrcp.pop %v3596
        %v3763 = vmul.f32 %v3596, %v3762
        %v3764 = vsub.f32 1.0, %v3763
        %v3765 = vmul.f32 %v3762, %v3764
        %v3766 = vadd.f32 %v3762, %v3765
        %vm3767 = vweird.f32 %v3596
        %vm3768 = vweird.f32 %v3762
        %vm3769 = vmor %vm3767, %vm3768
        %v3770 = vsel %vm3769, %v3762, %v3766
        %v3771 = vand.u32 2147483647, %v3596
        %vm3772 = vcmp.eq.f32.partialorder %v3771, 8.507059e+37
        %v3773 = vand.u32 %v3596, 2147483648
        %v3774 = vor.u32 1.1754944e-38, %v3773
        %v3775 = vsel %vm3772, %v3774, %v3770
        %v3776 = vmul.f32 1.0, %v3775
        %v3777 = vtanh.pop %v3545
        %v3778 = vtanh.pop %v3546
        %v3779 = vtanh.pop %v3547
        %v3780 = vtanh.pop %v3548
        %v3781 = vmul.f32 %v3671, %v3454
        %v3782 = vmul.f32 %v3686, %v3455
        %v3783 = vmul.f32 %v3701, %v3456
        %v3784 = vmul.f32 %v3716, %v3457
        %v3785 = vmul.f32 %v3611, %v3777
        %v3786 = vmul.f32 %v3626, %v3778
        %v3787 = vmul.f32 %v3641, %v3779
        %v3788 = vmul.f32 %v3656, %v3780
        %v3789 = vadd.f32 %v3781, %v3785
        %v3790 = vadd.f32 %v3782, %v3786
        %v3791 = vadd.f32 %v3783, %v3787
        %v3792 = vadd.f32 %v3784, %v3788
        %v3793 = vtanh.pop %v3789
        %v3794 = vtanh.pop %v3790
        %v3795 = vtanh.pop %v3791
        %v3796 = vtanh.pop %v3792
        %v3797 = vmul.f32 %v3731, %v3793
        %v3798 = vmul.f32 %v3746, %v3794
        %v3799 = vmul.f32 %v3761, %v3795
        %v3800 = vmul.f32 %v3776, %v3796
        %v3801 = vld [vmem:[%s1441] sm:$0xff]
        %v3802 = vld [vmem:[%s1441 + $0x8] sm:$0xff]
        %v3803 = vld [vmem:[%s1441 + $0x10] sm:$0xff]
        %v3804 = vld [vmem:[%s1441 + $0x18] sm:$0xff]
        %v3805 = vld [vmem:[%s1441 + $0x20] sm:$0xff]
        %v3806 = vld [vmem:[%s1441 + $0x28] sm:$0xff]
        %v3807 = vld [vmem:[%s1441 + $0x30] sm:$0xff]
        %v3808 = vld [vmem:[%s1441 + $0x38] sm:$0xff]
        %v3809 = vld [vmem:[%s1441 + $0x40] sm:$0xff]
        %v3810 = vld [vmem:[%s1441 + $0x48] sm:$0xff]
        %v3811 = vld [vmem:[%s1441 + $0x50] sm:$0xff]
        %v3812 = vld [vmem:[%s1441 + $0x58] sm:$0xff]
        %v3813 = vld [vmem:[%s1441 + $0x60] sm:$0xff]
        %v3814 = vld [vmem:[%s1441 + $0x68] sm:$0xff]
        %v3815 = vld [vmem:[%s1441 + $0x70] sm:$0xff]
        %v3816 = vld [vmem:[%s1441 + $0x78] sm:$0xff]
        %v3817 = vpack.c.bf16 %v3798, %v3797
        %v3818 = vpack.c.bf16 %v3800, %v3799
        %3819 = vmatpush.bf16.msra.mxu0 0
        %3820 = vmatpush.bf16.msra.mxu0 0
        %3821 = vmatpush.bf16.msra.mxu0 0
        %3822 = vmatpush.bf16.msra.mxu0 0
        %3823 = vmatpush.bf16.msra.mxu0 0
        %3824 = vmatpush.bf16.msra.mxu0 0
        %3825 = vmatpush.bf16.msra.mxu0 %v3818
        %3826 = vmatpush.bf16.msra.mxu0 %v3817
        %3827 = vmatmul.bf16.gmra.mxu0 %v1786
        %v3828 = vpop.f32.mrf.mxu0
        %v3829 = vadd.f32 0.0, %v3828
        %v3830 = vpop.f32.mrf.mxu0
        %v3831 = vadd.f32 0.0, %v3830
        %3832 = vmatmul.bf16.gmra.mxu0 %v1789
        %v3833 = vpop.f32.mrf.mxu0
        %v3834 = vadd.f32 0.0, %v3833
        %v3835 = vpop.f32.mrf.mxu0
        %v3836 = vadd.f32 0.0, %v3835
        %3837 = vmatmul.bf16.gmra.mxu0 %v1792
        %v3838 = vpop.f32.mrf.mxu0
        %v3839 = vadd.f32 0.0, %v3838
        %v3840 = vpop.f32.mrf.mxu0
        %v3841 = vadd.f32 0.0, %v3840
        %3842 = vmatmul.bf16.gmra.mxu0 %v1795
        %v3843 = vpop.f32.mrf.mxu0
        %v3844 = vadd.f32 0.0, %v3843
        %v3845 = vpop.f32.mrf.mxu0
        %v3846 = vadd.f32 0.0, %v3845
        %3847 = vmatmul.bf16.gmra.mxu0 %v1798
        %v3848 = vpop.f32.mrf.mxu0
        %v3849 = vadd.f32 0.0, %v3848
        %v3850 = vpop.f32.mrf.mxu0
        %v3851 = vadd.f32 0.0, %v3850
        %3852 = vmatmul.bf16.gmra.mxu0 %v1801
        %v3853 = vpop.f32.mrf.mxu0
        %v3854 = vadd.f32 0.0, %v3853
        %v3855 = vpop.f32.mrf.mxu0
        %v3856 = vadd.f32 0.0, %v3855
        %3857 = vmatmul.bf16.gmra.mxu0 %v1804
        %v3858 = vpop.f32.mrf.mxu0
        %v3859 = vadd.f32 0.0, %v3858
        %v3860 = vpop.f32.mrf.mxu0
        %v3861 = vadd.f32 0.0, %v3860
        %3862 = vmatmul.bf16.gmra.mxu0 %v1807
        %v3863 = vpop.f32.mrf.mxu0
        %v3864 = vadd.f32 0.0, %v3863
        %v3865 = vpop.f32.mrf.mxu0
        %v3866 = vadd.f32 0.0, %v3865
        %3867 = vdwg.mxu0
        %v3868 = vadd.f32 %v3801, %v3829
        %v3869 = vadd.f32 %v3802, %v3831
        %v3870 = vadd.f32 %v3803, %v3834
        %v3871 = vadd.f32 %v3804, %v3836
        %v3872 = vadd.f32 %v3805, %v3839
        %v3873 = vadd.f32 %v3806, %v3841
        %v3874 = vadd.f32 %v3807, %v3844
        %v3875 = vadd.f32 %v3808, %v3846
        %v3876 = vadd.f32 %v3809, %v3849
        %v3877 = vadd.f32 %v3810, %v3851
        %v3878 = vadd.f32 %v3811, %v3854
        %v3879 = vadd.f32 %v3812, %v3856
        %v3880 = vadd.f32 %v3813, %v3859
        %v3881 = vadd.f32 %v3814, %v3861
        %v3882 = vadd.f32 %v3815, %v3864
        %v3883 = vadd.f32 %v3816, %v3866
        %v3884 = vxor.u32 %v3868, 2147483648
        %v3885 = vxor.u32 %v3869, 2147483648
        %v3886 = vxor.u32 %v3870, 2147483648
        %v3887 = vxor.u32 %v3871, 2147483648
        %v3888 = vxor.u32 %v3872, 2147483648
        %v3889 = vxor.u32 %v3873, 2147483648
        %v3890 = vxor.u32 %v3874, 2147483648
        %v3891 = vxor.u32 %v3875, 2147483648
        %v3892 = vxor.u32 %v3876, 2147483648
        %v3893 = vxor.u32 %v3877, 2147483648
        %v3894 = vxor.u32 %v3878, 2147483648
        %v3895 = vxor.u32 %v3879, 2147483648
        %v3896 = vmul.f32 %v3884, 1.442695
        %v3897 = vpow.pop %v3896
        %v3898 = vmul.f32 %v3885, 1.442695
        %v3899 = vpow.pop %v3898
        %v3900 = vmul.f32 %v3886, 1.442695
        %v3901 = vpow.pop %v3900
        %v3902 = vmul.f32 %v3887, 1.442695
        %v3903 = vpow.pop %v3902
        %v3904 = vmul.f32 %v3888, 1.442695
        %v3905 = vpow.pop %v3904
        %v3906 = vmul.f32 %v3889, 1.442695
        %v3907 = vpow.pop %v3906
        %v3908 = vmul.f32 %v3890, 1.442695
        %v3909 = vpow.pop %v3908
        %v3910 = vmul.f32 %v3891, 1.442695
        %v3911 = vpow.pop %v3910
        %v3912 = vmul.f32 %v3892, 1.442695
        %v3913 = vpow.pop %v3912
        %v3914 = vmul.f32 %v3893, 1.442695
        %v3915 = vpow.pop %v3914
        %v3916 = vmul.f32 %v3894, 1.442695
        %v3917 = vpow.pop %v3916
        %v3918 = vmul.f32 %v3895, 1.442695
        %v3919 = vpow.pop %v3918
        %v3920 = vadd.f32 %v3897, 1.0
        %v3921 = vadd.f32 %v3899, 1.0
        %v3922 = vadd.f32 %v3901, 1.0
        %v3923 = vadd.f32 %v3903, 1.0
        %v3924 = vadd.f32 %v3905, 1.0
        %v3925 = vadd.f32 %v3907, 1.0
        %v3926 = vadd.f32 %v3909, 1.0
        %v3927 = vadd.f32 %v3911, 1.0
        %v3928 = vadd.f32 %v3913, 1.0
        %v3929 = vadd.f32 %v3915, 1.0
        %v3930 = vadd.f32 %v3917, 1.0
        %v3931 = vadd.f32 %v3919, 1.0
        %v3932 = vrcp.pop %v3920
        %v3933 = vmul.f32 %v3920, %v3932
        %v3934 = vsub.f32 1.0, %v3933
        %v3935 = vmul.f32 %v3932, %v3934
        %v3936 = vadd.f32 %v3932, %v3935
        %vm3937 = vweird.f32 %v3920
        %vm3938 = vweird.f32 %v3932
        %vm3939 = vmor %vm3937, %vm3938
        %v3940 = vsel %vm3939, %v3932, %v3936
        %v3941 = vand.u32 2147483647, %v3920
        %vm3942 = vcmp.eq.f32.partialorder %v3941, 8.507059e+37
        %v3943 = vand.u32 %v3920, 2147483648
        %v3944 = vor.u32 1.1754944e-38, %v3943
        %v3945 = vsel %vm3942, %v3944, %v3940
        %v3946 = vmul.f32 1.0, %v3945
        %v3947 = vrcp.pop %v3921
        %v3948 = vmul.f32 %v3921, %v3947
        %v3949 = vsub.f32 1.0, %v3948
        %v3950 = vmul.f32 %v3947, %v3949
        %v3951 = vadd.f32 %v3947, %v3950
        %vm3952 = vweird.f32 %v3921
        %vm3953 = vweird.f32 %v3947
        %vm3954 = vmor %vm3952, %vm3953
        %v3955 = vsel %vm3954, %v3947, %v3951
        %v3956 = vand.u32 2147483647, %v3921
        %vm3957 = vcmp.eq.f32.partialorder %v3956, 8.507059e+37
        %v3958 = vand.u32 %v3921, 2147483648
        %v3959 = vor.u32 1.1754944e-38, %v3958
        %v3960 = vsel %vm3957, %v3959, %v3955
        %v3961 = vmul.f32 1.0, %v3960
        %v3962 = vrcp.pop %v3922
        %v3963 = vmul.f32 %v3922, %v3962
        %v3964 = vsub.f32 1.0, %v3963
        %v3965 = vmul.f32 %v3962, %v3964
        %v3966 = vadd.f32 %v3962, %v3965
        %vm3967 = vweird.f32 %v3922
        %vm3968 = vweird.f32 %v3962
        %vm3969 = vmor %vm3967, %vm3968
        %v3970 = vsel %vm3969, %v3962, %v3966
        %v3971 = vand.u32 2147483647, %v3922
        %vm3972 = vcmp.eq.f32.partialorder %v3971, 8.507059e+37
        %v3973 = vand.u32 %v3922, 2147483648
        %v3974 = vor.u32 1.1754944e-38, %v3973
        %v3975 = vsel %vm3972, %v3974, %v3970
        %v3976 = vmul.f32 1.0, %v3975
        %v3977 = vrcp.pop %v3923
        %v3978 = vmul.f32 %v3923, %v3977
        %v3979 = vsub.f32 1.0, %v3978
        %v3980 = vmul.f32 %v3977, %v3979
        %v3981 = vadd.f32 %v3977, %v3980
        %vm3982 = vweird.f32 %v3923
        %vm3983 = vweird.f32 %v3977
        %vm3984 = vmor %vm3982, %vm3983
        %v3985 = vsel %vm3984, %v3977, %v3981
        %v3986 = vand.u32 2147483647, %v3923
        %vm3987 = vcmp.eq.f32.partialorder %v3986, 8.507059e+37
        %v3988 = vand.u32 %v3923, 2147483648
        %v3989 = vor.u32 1.1754944e-38, %v3988
        %v3990 = vsel %vm3987, %v3989, %v3985
        %v3991 = vmul.f32 1.0, %v3990
        %v3992 = vrcp.pop %v3924
        %v3993 = vmul.f32 %v3924, %v3992
        %v3994 = vsub.f32 1.0, %v3993
        %v3995 = vmul.f32 %v3992, %v3994
        %v3996 = vadd.f32 %v3992, %v3995
        %vm3997 = vweird.f32 %v3924
        %vm3998 = vweird.f32 %v3992
        %vm3999 = vmor %vm3997, %vm3998
        %v4000 = vsel %vm3999, %v3992, %v3996
        %v4001 = vand.u32 2147483647, %v3924
        %vm4002 = vcmp.eq.f32.partialorder %v4001, 8.507059e+37
        %v4003 = vand.u32 %v3924, 2147483648
        %v4004 = vor.u32 1.1754944e-38, %v4003
        %v4005 = vsel %vm4002, %v4004, %v4000
        %v4006 = vmul.f32 1.0, %v4005
        %v4007 = vrcp.pop %v3925
        %v4008 = vmul.f32 %v3925, %v4007
        %v4009 = vsub.f32 1.0, %v4008
        %v4010 = vmul.f32 %v4007, %v4009
        %v4011 = vadd.f32 %v4007, %v4010
        %vm4012 = vweird.f32 %v3925
        %vm4013 = vweird.f32 %v4007
        %vm4014 = vmor %vm4012, %vm4013
        %v4015 = vsel %vm4014, %v4007, %v4011
        %v4016 = vand.u32 2147483647, %v3925
        %vm4017 = vcmp.eq.f32.partialorder %v4016, 8.507059e+37
        %v4018 = vand.u32 %v3925, 2147483648
        %v4019 = vor.u32 1.1754944e-38, %v4018
        %v4020 = vsel %vm4017, %v4019, %v4015
        %v4021 = vmul.f32 1.0, %v4020
        %v4022 = vrcp.pop %v3926
        %v4023 = vmul.f32 %v3926, %v4022
        %v4024 = vsub.f32 1.0, %v4023
        %v4025 = vmul.f32 %v4022, %v4024
        %v4026 = vadd.f32 %v4022, %v4025
        %vm4027 = vweird.f32 %v3926
        %vm4028 = vweird.f32 %v4022
        %vm4029 = vmor %vm4027, %vm4028
        %v4030 = vsel %vm4029, %v4022, %v4026
        %v4031 = vand.u32 2147483647, %v3926
        %vm4032 = vcmp.eq.f32.partialorder %v4031, 8.507059e+37
        %v4033 = vand.u32 %v3926, 2147483648
        %v4034 = vor.u32 1.1754944e-38, %v4033
        %v4035 = vsel %vm4032, %v4034, %v4030
        %v4036 = vmul.f32 1.0, %v4035
        %v4037 = vrcp.pop %v3927
        %v4038 = vmul.f32 %v3927, %v4037
        %v4039 = vsub.f32 1.0, %v4038
        %v4040 = vmul.f32 %v4037, %v4039
        %v4041 = vadd.f32 %v4037, %v4040
        %vm4042 = vweird.f32 %v3927
        %vm4043 = vweird.f32 %v4037
        %vm4044 = vmor %vm4042, %vm4043
        %v4045 = vsel %vm4044, %v4037, %v4041
        %v4046 = vand.u32 2147483647, %v3927
        %vm4047 = vcmp.eq.f32.partialorder %v4046, 8.507059e+37
        %v4048 = vand.u32 %v3927, 2147483648
        %v4049 = vor.u32 1.1754944e-38, %v4048
        %v4050 = vsel %vm4047, %v4049, %v4045
        %v4051 = vmul.f32 1.0, %v4050
        %v4052 = vrcp.pop %v3928
        %v4053 = vmul.f32 %v3928, %v4052
        %v4054 = vsub.f32 1.0, %v4053
        %v4055 = vmul.f32 %v4052, %v4054
        %v4056 = vadd.f32 %v4052, %v4055
        %vm4057 = vweird.f32 %v3928
        %vm4058 = vweird.f32 %v4052
        %vm4059 = vmor %vm4057, %vm4058
        %v4060 = vsel %vm4059, %v4052, %v4056
        %v4061 = vand.u32 2147483647, %v3928
        %vm4062 = vcmp.eq.f32.partialorder %v4061, 8.507059e+37
        %v4063 = vand.u32 %v3928, 2147483648
        %v4064 = vor.u32 1.1754944e-38, %v4063
        %v4065 = vsel %vm4062, %v4064, %v4060
        %v4066 = vmul.f32 1.0, %v4065
        %v4067 = vrcp.pop %v3929
        %v4068 = vmul.f32 %v3929, %v4067
        %v4069 = vsub.f32 1.0, %v4068
        %v4070 = vmul.f32 %v4067, %v4069
        %v4071 = vadd.f32 %v4067, %v4070
        %vm4072 = vweird.f32 %v3929
        %vm4073 = vweird.f32 %v4067
        %vm4074 = vmor %vm4072, %vm4073
        %v4075 = vsel %vm4074, %v4067, %v4071
        %v4076 = vand.u32 2147483647, %v3929
        %vm4077 = vcmp.eq.f32.partialorder %v4076, 8.507059e+37
        %v4078 = vand.u32 %v3929, 2147483648
        %v4079 = vor.u32 1.1754944e-38, %v4078
        %v4080 = vsel %vm4077, %v4079, %v4075
        %v4081 = vmul.f32 1.0, %v4080
        %v4082 = vrcp.pop %v3930
        %v4083 = vmul.f32 %v3930, %v4082
        %v4084 = vsub.f32 1.0, %v4083
        %v4085 = vmul.f32 %v4082, %v4084
        %v4086 = vadd.f32 %v4082, %v4085
        %vm4087 = vweird.f32 %v3930
        %vm4088 = vweird.f32 %v4082
        %vm4089 = vmor %vm4087, %vm4088
        %v4090 = vsel %vm4089, %v4082, %v4086
        %v4091 = vand.u32 2147483647, %v3930
        %vm4092 = vcmp.eq.f32.partialorder %v4091, 8.507059e+37
        %v4093 = vand.u32 %v3930, 2147483648
        %v4094 = vor.u32 1.1754944e-38, %v4093
        %v4095 = vsel %vm4092, %v4094, %v4090
        %v4096 = vmul.f32 1.0, %v4095
        %v4097 = vrcp.pop %v3931
        %v4098 = vmul.f32 %v3931, %v4097
        %v4099 = vsub.f32 1.0, %v4098
        %v4100 = vmul.f32 %v4097, %v4099
        %v4101 = vadd.f32 %v4097, %v4100
        %vm4102 = vweird.f32 %v3931
        %vm4103 = vweird.f32 %v4097
        %vm4104 = vmor %vm4102, %vm4103
        %v4105 = vsel %vm4104, %v4097, %v4101
        %v4106 = vand.u32 2147483647, %v3931
        %vm4107 = vcmp.eq.f32.partialorder %v4106, 8.507059e+37
        %v4108 = vand.u32 %v3931, 2147483648
        %v4109 = vor.u32 1.1754944e-38, %v4108
        %v4110 = vsel %vm4107, %v4109, %v4105
        %v4111 = vmul.f32 1.0, %v4110
        %v4112 = vtanh.pop %v3880
        %v4113 = vtanh.pop %v3881
        %v4114 = vtanh.pop %v3882
        %v4115 = vtanh.pop %v3883
        %v4116 = vmul.f32 %v4006, %v3789
        %v4117 = vmul.f32 %v4021, %v3790
        %v4118 = vmul.f32 %v4036, %v3791
        %v4119 = vmul.f32 %v4051, %v3792
        %v4120 = vmul.f32 %v3946, %v4112
        %v4121 = vmul.f32 %v3961, %v4113
        %v4122 = vmul.f32 %v3976, %v4114
        %v4123 = vmul.f32 %v3991, %v4115
        %v4124 = vadd.f32 %v4116, %v4120
        %v4125 = vadd.f32 %v4117, %v4121
        %v4126 = vadd.f32 %v4118, %v4122
        %v4127 = vadd.f32 %v4119, %v4123
        %v4128 = vtanh.pop %v4124
        %v4129 = vtanh.pop %v4125
        %v4130 = vtanh.pop %v4126
        %v4131 = vtanh.pop %v4127
        %v4132 = vmul.f32 %v4066, %v4128
        %v4133 = vmul.f32 %v4081, %v4129
        %v4134 = vmul.f32 %v4096, %v4130
        %v4135 = vmul.f32 %v4111, %v4131
        %v4136 = vmax.f32 %v4132, 0.0
        %v4137 = vmax.f32 %v4133, 0.0
        %v4138 = vmax.f32 %v4134, 0.0
        %v4139 = vmax.f32 %v4135, 0.0
        %v4140 = vld [vmem:[%s5] sm:$0xff]
        %v4141 = vld [vmem:[%s5 + $0x8] sm:$0xff]
        %v4142 = vld [vmem:[%s5 + $0x10] sm:$0xff]
        %v4143 = vld [vmem:[%s5 + $0x18] sm:$0xff]
        %4145 = vset.pattern.permute.xlu0 0
        %4146 = vperm.xlu0 %4145, %v4140
        %v4147 = vpop.permute.xlu0 %4146
        %4150 = vset.pattern.permute.xlu0 0
        %4151 = vperm.xlu0 %4150, %v4141
        %v4152 = vpop.permute.xlu0 %4151
        %4155 = vset.pattern.permute.xlu0 0
        %4156 = vperm.xlu0 %4155, %v4142
        %v4157 = vpop.permute.xlu0 %4156
        %4160 = vset.pattern.permute.xlu0 0
        %4161 = vperm.xlu0 %4160, %v4143
        %v4162 = vpop.permute.xlu0 %4161
        %v4164 = vmul.f32 %v4136, %v4147
        %v4165 = vmul.f32 %v4137, %v4152
        %v4166 = vmul.f32 %v4138, %v4157
        %v4167 = vmul.f32 %v4139, %v4162
        %v4168 = vadd.f32 %v4164, %v4165
        %v4169 = vadd.f32 %v4168, %v4166
        %v4170 = vadd.f32 %v4169, %v4167
        %v4171 = vrot.slane %v4170, 4
        %v4172 = vadd.f32 %v4170, %v4171
        %v4173 = vrot.slane %v4172, 2
        %v4174 = vadd.f32 %v4172, %v4173
        %v4175 = vrot.slane %v4174, 1
        %v4176 = vadd.f32 %v4174, %v4175
        %s4177 = sld [smem:[#allocation3]]
        %v4178 = vstv %s4177
        %v4179 = vadd.f32 %v4176, %v4178
        %v4180 = vxor.u32 %v4179, 2147483648
        %v4181 = vmul.f32 %v4180, 1.442695
        %v4182 = vpow.pop %v4181
        %v4183 = vadd.f32 %v4182, 1.0
        %v4184 = vrcp.pop %v4183
        %v4185 = vmul.f32 %v4183, %v4184
        %v4186 = vsub.f32 1.0, %v4185
        %v4187 = vmul.f32 %v4184, %v4186
        %v4188 = vadd.f32 %v4184, %v4187
        %vm4189 = vweird.f32 %v4183
        %vm4190 = vweird.f32 %v4184
        %vm4191 = vmor %vm4189, %vm4190
        %v4192 = vsel %vm4191, %v4184, %v4188
        %v4193 = vand.u32 2147483647, %v4183
        %vm4194 = vcmp.eq.f32.partialorder %v4193, 8.507059e+37
        %v4195 = vand.u32 %v4183, 2147483648
        %v4196 = vor.u32 1.1754944e-38, %v4195
        %v4197 = vsel %vm4194, %v4196, %v4192
        %v4198 = vmul.f32 1.0, %v4197
        %4199 = vst [vmem:[%s387] sm:$0x1] %v4198
        %s4200 = sand.u32 %s190, 1
        %s4201 = scalar_lea.sflag [#allocation6], %s4200
        %s4202 = sand.u32 %s190, 1
        %s4203 = scalar_lea.vmem [#allocation8], %s4202
        // Predicated region
        $region94: #{tpu_custom_call.1} parent=84 // pred_check
          %p4204 = pneg %p200
        $region95: #{tpu_custom_call.1} parent=84 // pred_check_branch
          %4206 = sbr.rel (%p4204) target = $region97
        $region96: #{tpu_custom_call.1} parent=84 // pred_region
          %4208 = vsyncadd %s4201, 0
          %s4209 = scalar_lea.hbm %s7, %s25
          %s4211 = sshll.u32 %s4203, 4
          %s4212 = int_to_ptr.vmem [resolvable:$true] %s4211
          %s4213 = sshll.u32 %s4209, 4
          %s4214 = int_to_ptr.hbm [resolvable:$true] %s4213
          %4216 = dma.vmem_to_hbm [thread:$0]  %s4212, 16, %s4214, %s4201
        $region97: #{tpu_custom_call.1} parent=84 // pred_fallthru
          _
      $region85: #{tpu_custom_call.1} parent=5 // pred_fallthru
        _
      %p4217 = scmp.le.s32.totalorder 2, %s20
      // Predicated region
      $region98: #{tpu_custom_call.1} parent=5 // pred_check
        %p4218 = pneg %p4217
      $region99: #{tpu_custom_call.1} parent=5 // pred_check_branch
        %4220 = sbr.rel (%p4218) target = $region101
      $region100: #{tpu_custom_call.1} parent=5 // pred_region
        %s4221 = ssub.s32 %s20, 2
        // Predicated region
        $region102: #{tpu_custom_call.1} parent=100 // pred_check
          %p4222 = pneg %p206
        $region103: #{tpu_custom_call.1} parent=100 // pred_check_branch
          %4224 = sbr.rel (%p4222) target = $region105
        $region104: #{tpu_custom_call.1} parent=100 // pred_region
          %s4225 = sand.u32 %s191, 1
          %s4226 = scalar_lea.sflag [#allocation6], %s4225
          %s4227 = sand.u32 %s191, 1
          %s4228 = scalar_lea.vmem [#allocation8], %s4227
          %4230 = dma.done %s4226, 16
        $region105: #{tpu_custom_call.1} parent=100 // pred_fallthru
          _
      $region101: #{tpu_custom_call.1} parent=5 // pred_fallthru
        _
    $region6: #{tpu_custom_call.1} parent=1 // loop_footer
      %s24 = sadd.s32 1, %s20
    $region7: #{tpu_custom_call.1} parent=1 // loop_footer_branch
      %19 = sbr.rel target = $region3
    $region8: #{tpu_custom_call.1} parent=1 // loop_exit
      _
    %4231 = vsyncpa [#allocation5], 1
    %s4232 = scalar_lea.sflag [#allocation5], 1
    %4233 = vsyncpa %s4232, 1
    %4234 = vsyncpa [#allocation6], 1
    %s4235 = scalar_lea.sflag [#allocation6], 1
    %4236 = vsyncpa %s4235, 1

</llo_original>
